<compile_context>
chip_gen: v5e
topology: v5e:2x2
jax: 0.10.0
libtpu: 0.0.40
codegen_flags: <defaults>
</compile_context>

<pallas_src>
import math
from functools import partial

import jax
import jax.numpy as jnp
from jax import lax
from jax.experimental import pallas as pl
from jax.experimental.pallas import tpu as pltpu


# ---------------------------------------------------------------------------
# Kernels
# ---------------------------------------------------------------------------

def _layer_norm(s, gamma, beta):
    """LayerNorm over last dim, eps=1e-5, biased variance (matches torch)."""
    mean = jnp.mean(s, axis=-1, keepdims=True)
    var = jnp.mean((s - mean) ** 2, axis=-1, keepdims=True)
    return (s - mean) * lax.rsqrt(var + 1e-5) * gamma + beta


def _make_attn_block_kernel(n_heads, inv_scale, emit_attn):
    """Fused: q/kv projections + per-head attention + out proj + LN(residual).

    Grid is (batch,).  Refs (per grid step):
      x_ref   (1, Sq, H)   query-side input (also the residual stream)
      kv_ref  (1, Sk, H)   key/value-side input
      m_ref   (1, 1, Sq, Sk) float 0/1 mask
      wq (H,H) bq (1,H)  wkv (H,2H) bkv (1,2H)  wo (H,H) bo (1,H)
      g (1,H) beta (1,H) LayerNorm params
      o_ref   (1, Sq, H)
      a_ref   (1, n_heads, Sq, Sk)   only when emit_attn
    """

    def kernel(x_ref, kv_ref, m_ref, wq_ref, bq_ref, wkv_ref, bkv_ref,
               wo_ref, bo_ref, g_ref, beta_ref, o_ref, *maybe_a):
        a_ref = maybe_a[0] if emit_attn else None
        x = x_ref[0]                                   # (Sq, H)
        kv_in = kv_ref[0]                              # (Sk, H)
        m = m_ref[0, 0]                                # (Sq, Sk) float 0/1
        hid = x.shape[-1]
        head_dim = hid // n_heads

        # Projections (stay in VMEM / vregs).
        q = jnp.dot(x, wq_ref[...],
                    preferred_element_type=jnp.float32) + bq_ref[...]
        kv = jnp.dot(kv_in, wkv_ref[...],
                     preferred_element_type=jnp.float32) + bkv_ref[...]
        k = kv[:, :hid]
        v = kv[:, hid:]

        # Per-head attention via static lane slices (no HBM relayout).
        ctx_heads = []
        for h in range(n_heads):
            lo, hi = h * head_dim, (h + 1) * head_dim
            qh, kh, vh = q[:, lo:hi], k[:, lo:hi], v[:, lo:hi]
            # contract last axes: (Sq, Dh) x (Sk, Dh) -> (Sq, Sk), no k.T
            energy = lax.dot_general(
                qh, kh, (((1,), (1,)), ((), ())),
                preferred_element_type=jnp.float32) * inv_scale
            energy = jnp.where(m == 0.0, jnp.float32(-1e10), energy)
            energy = energy - jnp.max(energy, axis=-1, keepdims=True)
            p = jnp.exp(energy)
            attn = p * pl.reciprocal(jnp.sum(p, axis=-1, keepdims=True),
                                     approx=True)
            if emit_attn:
                a_ref[0, h, :, :] = attn.astype(a_ref.dtype)
            ctx_heads.append(jnp.dot(attn, vh,
                                     preferred_element_type=jnp.float32))
        ctx = jnp.concatenate(ctx_heads, axis=-1)      # (Sq, H)

        out = jnp.dot(ctx, wo_ref[...],
                      preferred_element_type=jnp.float32) + bo_ref[...]

        # Residual + LayerNorm, fused (no extra HBM round trip).
        o_ref[0] = _layer_norm(x + out, g_ref[...],
                               beta_ref[...]).astype(o_ref.dtype)

    return kernel


def _ffn_block_kernel(x_ref, w1_ref, b1_ref, w2_ref, b2_ref,
                      g_ref, beta_ref, o_ref):
    """Fused: fc1 + ReLU + fc2 + LN(residual).  Grid is (batch,)."""
    x = x_ref[0]                                       # (S, H)
    h = jnp.maximum(jnp.dot(x, w1_ref[...],
                            preferred_element_type=jnp.float32)
                    + b1_ref[...], 0.0)
    y = jnp.dot(h, w2_ref[...],
                preferred_element_type=jnp.float32) + b2_ref[...]
    o_ref[0] = _layer_norm(x + y, g_ref[...],
                           beta_ref[...]).astype(o_ref.dtype)


def _out_proj_kernel(x_ref, w_ref, b_ref, o_ref):
    o_ref[0] = (jnp.dot(x_ref[0], w_ref[...],
                        preferred_element_type=jnp.float32)
                + b_ref[...]).astype(o_ref.dtype)


# ---------------------------------------------------------------------------
# pallas_call wrappers
# ---------------------------------------------------------------------------

_PARALLEL = pltpu.CompilerParams(dimension_semantics=("parallel",))


def attn_block(x, kv, mask, p, ln_g, ln_b, n_heads, emit_attn):
    """x: (B, Sq, H) query/residual stream, kv: (B, Sk, H), mask: (B,1,*,Sk)."""
    B, Sq, H = x.shape
    Sk = kv.shape[1]
    inv_scale = 1.0 / math.sqrt(H // n_heads)
    # Small per-batch mask only (no B*H fp32 broadcast materialized in HBM).
    mask_f = jnp.broadcast_to(mask, (B, 1, Sq, Sk)).astype(jnp.float32)

    out_shape = [jax.ShapeDtypeStruct((B, Sq, H), jnp.float32)]
    out_specs = [pl.BlockSpec((1, Sq, H), lambda i: (i, 0, 0))]
    if emit_attn:
        out_shape.append(
            jax.ShapeDtypeStruct((B, n_heads, Sq, Sk), jnp.float32))
        out_specs.append(
            pl.BlockSpec((1, n_heads, Sq, Sk), lambda i: (i, 0, 0, 0)))

    res = pl.pallas_call(
        _make_attn_block_kernel(n_heads, inv_scale, emit_attn),
        out_shape=tuple(out_shape),
        grid=(B,),
        in_specs=[
            pl.BlockSpec((1, Sq, H), lambda i: (i, 0, 0)),
            pl.BlockSpec((1, Sk, H), lambda i: (i, 0, 0)),
            pl.BlockSpec((1, 1, Sq, Sk), lambda i: (i, 0, 0, 0)),
            pl.BlockSpec((H, H), lambda i: (0, 0)),
            pl.BlockSpec((1, H), lambda i: (0, 0)),
            pl.BlockSpec((H, 2 * H), lambda i: (0, 0)),
            pl.BlockSpec((1, 2 * H), lambda i: (0, 0)),
            pl.BlockSpec((H, H), lambda i: (0, 0)),
            pl.BlockSpec((1, H), lambda i: (0, 0)),
            pl.BlockSpec((1, H), lambda i: (0, 0)),
            pl.BlockSpec((1, H), lambda i: (0, 0)),
        ],
        out_specs=tuple(out_specs),
        compiler_params=_PARALLEL,
    )(x, kv, mask_f,
      p["wq"], p["bq"].reshape(1, H),
      p["wkv"], p["bkv"].reshape(1, 2 * H),
      p["wo"], p["bo"].reshape(1, H),
      ln_g.reshape(1, H), ln_b.reshape(1, H))

    if emit_attn:
        return res[0], res[1]
    return res[0], None


def ffn_block(x, p, ln_g, ln_b):
    B, S, H = x.shape
    P = p["w1"].shape[1]
    return pl.pallas_call(
        _ffn_block_kernel,
        out_shape=jax.ShapeDtypeStruct((B, S, H), jnp.float32),
        grid=(B,),
        in_specs=[
            pl.BlockSpec((1, S, H), lambda i: (i, 0, 0)),
            pl.BlockSpec((H, P), lambda i: (0, 0)),
            pl.BlockSpec((1, P), lambda i: (0, 0)),
            pl.BlockSpec((P, H), lambda i: (0, 0)),
            pl.BlockSpec((1, H), lambda i: (0, 0)),
            pl.BlockSpec((1, H), lambda i: (0, 0)),
            pl.BlockSpec((1, H), lambda i: (0, 0)),
        ],
        out_specs=pl.BlockSpec((1, S, H), lambda i: (i, 0, 0)),
        compiler_params=_PARALLEL,
    )(x, p["w1"], p["b1"].reshape(1, P), p["w2"], p["b2"].reshape(1, H),
      ln_g.reshape(1, H), ln_b.reshape(1, H))


def out_proj(x, w, b):
    B, S, H = x.shape
    V = w.shape[1]
    return pl.pallas_call(
        _out_proj_kernel,
        out_shape=jax.ShapeDtypeStruct((B, S, V), jnp.float32),
        grid=(B,),
        in_specs=[
            pl.BlockSpec((1, S, H), lambda i: (i, 0, 0)),
            pl.BlockSpec((H, V), lambda i: (0, 0)),
            pl.BlockSpec((1, V), lambda i: (0, 0)),
        ],
        out_specs=pl.BlockSpec((1, S, V), lambda i: (i, 0, 0)),
        compiler_params=_PARALLEL,
    )(x, w, b.reshape(1, V))


# ---------------------------------------------------------------------------
# Decoder forward (glue)
# ---------------------------------------------------------------------------

@partial(jax.jit, static_argnames=("n_heads", "hid_dim"))
def decoder_forward(params, trg_tokens, enc_src, trg_mask, src_mask,
                    n_heads, hid_dim):
    B, S = trg_tokens.shape
    scale = math.sqrt(hid_dim)
    # TODO(synk): embedding gather stays in plain JAX (jnp.take); a Pallas
    # per-row DMA gather is not worth it at these sizes.
    tok = jnp.take(params["tok_emb"], trg_tokens, axis=0)          # (B,S,H)
    pos = params["pos_emb"][:S]                                    # (S,H)
    x = tok * scale + pos[None, :, :]

    n_layers = len(params["layers"])
    attention = None
    for li, lp in enumerate(params["layers"]):
        # Note: the reference DecoderLayer has a single shared LayerNorm
        # module used three times, so one (ln_g, ln_b) per layer is correct.
        x, _ = attn_block(x, x, trg_mask, lp["self_attn"],
                          lp["ln_g"], lp["ln_b"], n_heads, emit_attn=False)
        want_attn = (li == n_layers - 1)   # only the returned attention
        x, attn = attn_block(x, enc_src, src_mask, lp["enc_attn"],
                             lp["ln_g"], lp["ln_b"], n_heads,
                             emit_attn=want_attn)
        if want_attn:
            attention = attn
        x = ffn_block(x, lp["pf"], lp["ln_g"], lp["ln_b"])

    out = out_proj(x, params["w_out"], params["b_out"])
    return out, attention


def create_trg_mask(trg_tokens, pad_idx):
    B, S = trg_tokens.shape
    pad_mask = (trg_tokens != pad_idx)[:, None, :, None]           # (B,1,S,1)
    sub_mask = jnp.tril(jnp.ones((S, S), dtype=bool))              # (S,S)
    return pad_mask & sub_mask                                     # (B,1,S,S)


# ---------------------------------------------------------------------------
# Deterministic parameter init (mirrors nn.Linear / nn.Embedding shapes)
# ---------------------------------------------------------------------------

def _init_linear(key, fan_in, fan_out):
    kw, kb = jax.random.split(key)
    bound = 1.0 / math.sqrt(fan_in)
    w = jax.random.uniform(kw, (fan_in, fan_out), jnp.float32, -bound, bound)
    b = jax.random.uniform(kb, (fan_out,), jnp.float32, -bound, bound)
    return w, b


def _init_mha(key, hid):
    ks = jax.random.split(key, 4)
    wq, bq = _init_linear(ks[0], hid, hid)
    wk, bk = _init_linear(ks[1], hid, hid)
    wv, bv = _init_linear(ks[2], hid, hid)
    wo, bo = _init_linear(ks[3], hid, hid)
    return dict(wq=wq, bq=bq,
                wkv=jnp.concatenate([wk, wv], axis=1),     # (H, 2H)
                bkv=jnp.concatenate([bk, bv], axis=0),     # (2H,)
                wo=wo, bo=bo)


def init_decoder_params(key, vocab, max_len, hid, pf_dim, n_layers):
    keys = jax.random.split(key, 3 + n_layers)
    params = {
        "tok_emb": jax.random.normal(keys[0], (vocab, hid), jnp.float32) * 0.1,
        "pos_emb": jax.random.normal(keys[1], (max_len, hid), jnp.float32) * 0.1,
    }
    w_out, b_out = _init_linear(keys[2], hid, vocab)
    params["w_out"], params["b_out"] = w_out, b_out
    layers = []
    for li in range(n_layers):
        lk = jax.random.split(keys[3 + li], 4)
        w1, b1 = _init_linear(lk[2], hid, pf_dim)
        w2, b2 = _init_linear(lk[3], pf_dim, hid)
        layers.append(dict(
            ln_g=jnp.ones((hid,), jnp.float32),
            ln_b=jnp.zeros((hid,), jnp.float32),
            self_attn=_init_mha(lk[0], hid),
            enc_attn=_init_mha(lk[1], hid),
            pf=dict(w1=w1, b1=b1, w2=w2, b2=b2),
        ))
    params["layers"] = layers
    return params


# ---------------------------------------------------------------------------

if __name__ == "__main__":
    # hparams (small, consistent with the module)
    vocab_size = 50
    pad_idx = 1
    hid_dim = 32
    n_heads = 4
    pf_dim = 64
    n_layers = 2
    max_len = 16
    batch = 2
    trg_len = 8
    src_len = 10

    root = jax.random.PRNGKey(0)
    k_tok, k_enc, k_par = jax.random.split(root, 3)

    # target tokens, with trailing pads in the second sequence
    trg_tokens = jax.random.randint(k_tok, (batch, trg_len), 2, vocab_size)
    trg_tokens = trg_tokens.at[1, 6:].set(pad_idx)

    # encoder output (already-embedded source) and source mask
    enc_src = jax.random.normal(k_enc, (batch, src_len, hid_dim), jnp.float32)
    src_valid = jnp.array([src_len, 7])
    src_mask = (jnp.arange(src_len)[None, :]
                < src_valid[:, None])[:, None, None, :]            # (B,1,1,Sk)

    trg_mask = create_trg_mask(trg_tokens, pad_idx)                # (B,1,S,S)

    params = init_decoder_params(k_par, vocab_size, max_len, hid_dim,
                                 pf_dim, n_layers)

    out, attention = decoder_forward(params, trg_tokens, enc_src,
                                     trg_mask, src_mask, n_heads, hid_dim)
    jax.block_until_ready((out, attention))

    assert out.shape == (batch, trg_len, vocab_size)
    assert attention.shape == (batch, n_heads, trg_len, src_len)
    assert bool(jnp.all(jnp.isfinite(out)))
    assert bool(jnp.all(jnp.isfinite(attention)))
    print("KERNEL_OK")
</pallas_src>

<mosaic_0001>
module attributes {stable_mosaic.version = 11 : i64} {
  func.func @kernel(%arg0: i32, %arg1: memref<1x8x32xf32, #tpu.memory_space<vmem>>, %arg2: memref<1x10x32xf32, #tpu.memory_space<vmem>>, %arg3: memref<1x1x8x10xf32, #tpu.memory_space<vmem>>, %arg4: memref<32x32xf32, #tpu.memory_space<vmem>>, %arg5: memref<1x32xf32, #tpu.memory_space<vmem>>, %arg6: memref<32x64xf32, #tpu.memory_space<vmem>>, %arg7: memref<1x64xf32, #tpu.memory_space<vmem>>, %arg8: memref<32x32xf32, #tpu.memory_space<vmem>>, %arg9: memref<1x32xf32, #tpu.memory_space<vmem>>, %arg10: memref<1x32xf32, #tpu.memory_space<vmem>>, %arg11: memref<1x32xf32, #tpu.memory_space<vmem>>, %arg12: memref<1x8x32xf32, #tpu.memory_space<vmem>>) attributes {dimension_semantics = [#tpu.dimension_semantics<parallel>], iteration_bounds = array<i64: 2>, scalar_prefetch = 0 : i64, scratch_operands = 0 : i64, tpu.core_type = #tpu.core_type<tc>, window_params = [{transform_indices = @transform_0, window_bounds = array<i64: 1, 8, 32>}, {transform_indices = @transform_1, window_bounds = array<i64: 1, 10, 32>}, {transform_indices = @transform_2, window_bounds = array<i64: 1, 1, 8, 10>}, {pipeline_mode = #tpu.pipeline_mode<synchronous>, transform_indices = @transform_3, window_bounds = array<i64: 32, 32>}, {pipeline_mode = #tpu.pipeline_mode<synchronous>, transform_indices = @transform_4, window_bounds = array<i64: 1, 32>}, {pipeline_mode = #tpu.pipeline_mode<synchronous>, transform_indices = @transform_5, window_bounds = array<i64: 32, 64>}, {pipeline_mode = #tpu.pipeline_mode<synchronous>, transform_indices = @transform_6, window_bounds = array<i64: 1, 64>}, {pipeline_mode = #tpu.pipeline_mode<synchronous>, transform_indices = @transform_7, window_bounds = array<i64: 32, 32>}, {pipeline_mode = #tpu.pipeline_mode<synchronous>, transform_indices = @transform_8, window_bounds = array<i64: 1, 32>}, {pipeline_mode = #tpu.pipeline_mode<synchronous>, transform_indices = @transform_9, window_bounds = array<i64: 1, 32>}, {pipeline_mode = #tpu.pipeline_mode<synchronous>, transform_indices = @transform_10, window_bounds = array<i64: 1, 32>}, {transform_indices = @transform_11, window_bounds = array<i64: 1, 8, 32>}]} {
    %c0 = arith.constant 0 : index
    %c0_0 = arith.constant 0 : index
    %c0_1 = arith.constant 0 : index
    %0 = vector.load %arg1[%c0, %c0_0, %c0_1] : memref<1x8x32xf32, #tpu.memory_space<vmem>>, vector<1x8x32xf32>
    %1 = vector.shape_cast %0 : vector<1x8x32xf32> to vector<8x32xf32>
    %c0_2 = arith.constant 0 : index
    %c0_3 = arith.constant 0 : index
    %c0_4 = arith.constant 0 : index
    %2 = vector.load %arg2[%c0_2, %c0_3, %c0_4] : memref<1x10x32xf32, #tpu.memory_space<vmem>>, vector<1x10x32xf32>
    %3 = vector.shape_cast %2 : vector<1x10x32xf32> to vector<10x32xf32>
    %c0_5 = arith.constant 0 : index
    %c0_6 = arith.constant 0 : index
    %c0_7 = arith.constant 0 : index
    %c0_8 = arith.constant 0 : index
    %4 = vector.load %arg3[%c0_5, %c0_6, %c0_7, %c0_8] : memref<1x1x8x10xf32, #tpu.memory_space<vmem>>, vector<1x1x8x10xf32>
    %5 = vector.shape_cast %4 : vector<1x1x8x10xf32> to vector<8x10xf32>
    %c0_9 = arith.constant 0 : index
    %c0_10 = arith.constant 0 : index
    %6 = vector.load %arg4[%c0_9, %c0_10] : memref<32x32xf32, #tpu.memory_space<vmem>>, vector<32x32xf32>
    %cst = arith.constant dense<0.000000e+00> : vector<8x32xf32>
    %7 = tpu.matmul %1, %6, %cst {dimension_numbers = #tpu.dot_dimension_numbers<[1], [0], [0], [1], [0, 0, 1, 1], [], []>} : vector<8x32xf32>, vector<32x32xf32>, vector<8x32xf32> -> vector<8x32xf32>
    %c0_11 = arith.constant 0 : index
    %c0_12 = arith.constant 0 : index
    %8 = vector.load %arg5[%c0_11, %c0_12] : memref<1x32xf32, #tpu.memory_space<vmem>>, vector<1x32xf32>
    %9 = vector.broadcast %8 : vector<1x32xf32> to vector<8x32xf32>
    %10 = arith.addf %7, %9 : vector<8x32xf32>
    %c0_13 = arith.constant 0 : index
    %c0_14 = arith.constant 0 : index
    %11 = vector.load %arg6[%c0_13, %c0_14] : memref<32x64xf32, #tpu.memory_space<vmem>>, vector<32x64xf32>
    %cst_15 = arith.constant dense<0.000000e+00> : vector<10x64xf32>
    %12 = tpu.matmul %3, %11, %cst_15 {dimension_numbers = #tpu.dot_dimension_numbers<[1], [0], [0], [1], [0, 0, 1, 1], [], []>} : vector<10x32xf32>, vector<32x64xf32>, vector<10x64xf32> -> vector<10x64xf32>
    %c0_16 = arith.constant 0 : index
    %c0_17 = arith.constant 0 : index
    %13 = vector.load %arg7[%c0_16, %c0_17] : memref<1x64xf32, #tpu.memory_space<vmem>>, vector<1x64xf32>
    %14 = vector.broadcast %13 : vector<1x64xf32> to vector<10x64xf32>
    %15 = arith.addf %12, %14 : vector<10x64xf32>
    %16 = vector.extract_strided_slice %15 {offsets = [0, 0], sizes = [10, 32], strides = [1, 1]} : vector<10x64xf32> to vector<10x32xf32>
    %17 = vector.extract_strided_slice %15 {offsets = [0, 32], sizes = [10, 32], strides = [1, 1]} : vector<10x64xf32> to vector<10x32xf32>
    %18 = vector.extract_strided_slice %10 {offsets = [0, 0], sizes = [8, 8], strides = [1, 1]} : vector<8x32xf32> to vector<8x8xf32>
    %19 = vector.extract_strided_slice %16 {offsets = [0, 0], sizes = [10, 8], strides = [1, 1]} : vector<10x32xf32> to vector<10x8xf32>
    %20 = vector.extract_strided_slice %17 {offsets = [0, 0], sizes = [10, 8], strides = [1, 1]} : vector<10x32xf32> to vector<10x8xf32>
    %cst_18 = arith.constant dense<0.000000e+00> : vector<8x10xf32>
    %21 = tpu.matmul %18, %19, %cst_18 {dimension_numbers = #tpu.dot_dimension_numbers<[1], [1], [0], [0], [0, 0, 1, 0], [], []>} : vector<8x8xf32>, vector<10x8xf32>, vector<8x10xf32> -> vector<8x10xf32>
    %cst_19 = arith.constant 0.353553385 : f32
    %22 = vector.broadcast %cst_19 : f32 to vector<8x10xf32>
    %23 = arith.mulf %21, %22 : vector<8x10xf32>
    %cst_20 = arith.constant 0.000000e+00 : f32
    %24 = vector.broadcast %cst_20 : f32 to vector<8x10xf32>
    %25 = arith.cmpf oeq, %5, %24 : vector<8x10xf32>
    %cst_21 = arith.constant -1.000000e+10 : f32
    %26 = vector.broadcast %cst_21 : f32 to vector<8x10xf32>
    %27 = arith.select %25, %26, %23 : vector<8x10xi1>, vector<8x10xf32>
    %cst_22 = arith.constant dense<0xFF800000> : vector<8xf32>
    %28 = vector.multi_reduction <maximumf>, %27, %cst_22 [1] : vector<8x10xf32> to vector<8xf32>
    %29 = vector.shape_cast %28 : vector<8xf32> to vector<8x1xf32>
    %30 = vector.broadcast %29 : vector<8x1xf32> to vector<8x10xf32>
    %31 = arith.subf %27, %30 : vector<8x10xf32>
    %32 = math.exp %31 : vector<8x10xf32>
    %cst_23 = arith.constant dense<0.000000e+00> : vector<8xf32>
    %33 = vector.multi_reduction <add>, %32, %cst_23 [1] : vector<8x10xf32> to vector<8xf32>
    %34 = vector.shape_cast %33 : vector<8xf32> to vector<8x1xf32>
    %35 = tpu.reciprocal %34 {approx = true} : vector<8x1xf32> -> vector<8x1xf32>
    %36 = vector.broadcast %35 : vector<8x1xf32> to vector<8x10xf32>
    %37 = arith.mulf %32, %36 : vector<8x10xf32>
    %cst_24 = arith.constant dense<0.000000e+00> : vector<8x8xf32>
    %38 = tpu.matmul %37, %20, %cst_24 {dimension_numbers = #tpu.dot_dimension_numbers<[1], [0], [0], [1], [0, 0, 1, 1], [], []>} : vector<8x10xf32>, vector<10x8xf32>, vector<8x8xf32> -> vector<8x8xf32>
    %39 = vector.extract_strided_slice %10 {offsets = [0, 8], sizes = [8, 8], strides = [1, 1]} : vector<8x32xf32> to vector<8x8xf32>
    %40 = vector.extract_strided_slice %16 {offsets = [0, 8], sizes = [10, 8], strides = [1, 1]} : vector<10x32xf32> to vector<10x8xf32>
    %41 = vector.extract_strided_slice %17 {offsets = [0, 8], sizes = [10, 8], strides = [1, 1]} : vector<10x32xf32> to vector<10x8xf32>
    %cst_25 = arith.constant dense<0.000000e+00> : vector<8x10xf32>
    %42 = tpu.matmul %39, %40, %cst_25 {dimension_numbers = #tpu.dot_dimension_numbers<[1], [1], [0], [0], [0, 0, 1, 0], [], []>} : vector<8x8xf32>, vector<10x8xf32>, vector<8x10xf32> -> vector<8x10xf32>
    %cst_26 = arith.constant 0.353553385 : f32
    %43 = vector.broadcast %cst_26 : f32 to vector<8x10xf32>
    %44 = arith.mulf %42, %43 : vector<8x10xf32>
    %cst_27 = arith.constant 0.000000e+00 : f32
    %45 = vector.broadcast %cst_27 : f32 to vector<8x10xf32>
    %46 = arith.cmpf oeq, %5, %45 : vector<8x10xf32>
    %cst_28 = arith.constant -1.000000e+10 : f32
    %47 = vector.broadcast %cst_28 : f32 to vector<8x10xf32>
    %48 = arith.select %46, %47, %44 : vector<8x10xi1>, vector<8x10xf32>
    %cst_29 = arith.constant dense<0xFF800000> : vector<8xf32>
    %49 = vector.multi_reduction <maximumf>, %48, %cst_29 [1] : vector<8x10xf32> to vector<8xf32>
    %50 = vector.shape_cast %49 : vector<8xf32> to vector<8x1xf32>
    %51 = vector.broadcast %50 : vector<8x1xf32> to vector<8x10xf32>
    %52 = arith.subf %48, %51 : vector<8x10xf32>
    %53 = math.exp %52 : vector<8x10xf32>
    %cst_30 = arith.constant dense<0.000000e+00> : vector<8xf32>
    %54 = vector.multi_reduction <add>, %53, %cst_30 [1] : vector<8x10xf32> to vector<8xf32>
    %55 = vector.shape_cast %54 : vector<8xf32> to vector<8x1xf32>
    %56 = tpu.reciprocal %55 {approx = true} : vector<8x1xf32> -> vector<8x1xf32>
    %57 = vector.broadcast %56 : vector<8x1xf32> to vector<8x10xf32>
    %58 = arith.mulf %53, %57 : vector<8x10xf32>
    %cst_31 = arith.constant dense<0.000000e+00> : vector<8x8xf32>
    %59 = tpu.matmul %58, %41, %cst_31 {dimension_numbers = #tpu.dot_dimension_numbers<[1], [0], [0], [1], [0, 0, 1, 1], [], []>} : vector<8x10xf32>, vector<10x8xf32>, vector<8x8xf32> -> vector<8x8xf32>
    %60 = vector.extract_strided_slice %10 {offsets = [0, 16], sizes = [8, 8], strides = [1, 1]} : vector<8x32xf32> to vector<8x8xf32>
    %61 = vector.extract_strided_slice %16 {offsets = [0, 16], sizes = [10, 8], strides = [1, 1]} : vector<10x32xf32> to vector<10x8xf32>
    %62 = vector.extract_strided_slice %17 {offsets = [0, 16], sizes = [10, 8], strides = [1, 1]} : vector<10x32xf32> to vector<10x8xf32>
    %cst_32 = arith.constant dense<0.000000e+00> : vector<8x10xf32>
    %63 = tpu.matmul %60, %61, %cst_32 {dimension_numbers = #tpu.dot_dimension_numbers<[1], [1], [0], [0], [0, 0, 1, 0], [], []>} : vector<8x8xf32>, vector<10x8xf32>, vector<8x10xf32> -> vector<8x10xf32>
    %cst_33 = arith.constant 0.353553385 : f32
    %64 = vector.broadcast %cst_33 : f32 to vector<8x10xf32>
    %65 = arith.mulf %63, %64 : vector<8x10xf32>
    %cst_34 = arith.constant 0.000000e+00 : f32
    %66 = vector.broadcast %cst_34 : f32 to vector<8x10xf32>
    %67 = arith.cmpf oeq, %5, %66 : vector<8x10xf32>
    %cst_35 = arith.constant -1.000000e+10 : f32
    %68 = vector.broadcast %cst_35 : f32 to vector<8x10xf32>
    %69 = arith.select %67, %68, %65 : vector<8x10xi1>, vector<8x10xf32>
    %cst_36 = arith.constant dense<0xFF800000> : vector<8xf32>
    %70 = vector.multi_reduction <maximumf>, %69, %cst_36 [1] : vector<8x10xf32> to vector<8xf32>
    %71 = vector.shape_cast %70 : vector<8xf32> to vector<8x1xf32>
    %72 = vector.broadcast %71 : vector<8x1xf32> to vector<8x10xf32>
    %73 = arith.subf %69, %72 : vector<8x10xf32>
    %74 = math.exp %73 : vector<8x10xf32>
    %cst_37 = arith.constant dense<0.000000e+00> : vector<8xf32>
    %75 = vector.multi_reduction <add>, %74, %cst_37 [1] : vector<8x10xf32> to vector<8xf32>
    %76 = vector.shape_cast %75 : vector<8xf32> to vector<8x1xf32>
    %77 = tpu.reciprocal %76 {approx = true} : vector<8x1xf32> -> vector<8x1xf32>
    %78 = vector.broadcast %77 : vector<8x1xf32> to vector<8x10xf32>
    %79 = arith.mulf %74, %78 : vector<8x10xf32>
    %cst_38 = arith.constant dense<0.000000e+00> : vector<8x8xf32>
    %80 = tpu.matmul %79, %62, %cst_38 {dimension_numbers = #tpu.dot_dimension_numbers<[1], [0], [0], [1], [0, 0, 1, 1], [], []>} : vector<8x10xf32>, vector<10x8xf32>, vector<8x8xf32> -> vector<8x8xf32>
    %81 = vector.extract_strided_slice %10 {offsets = [0, 24], sizes = [8, 8], strides = [1, 1]} : vector<8x32xf32> to vector<8x8xf32>
    %82 = vector.extract_strided_slice %16 {offsets = [0, 24], sizes = [10, 8], strides = [1, 1]} : vector<10x32xf32> to vector<10x8xf32>
    %83 = vector.extract_strided_slice %17 {offsets = [0, 24], sizes = [10, 8], strides = [1, 1]} : vector<10x32xf32> to vector<10x8xf32>
    %cst_39 = arith.constant dense<0.000000e+00> : vector<8x10xf32>
    %84 = tpu.matmul %81, %82, %cst_39 {dimension_numbers = #tpu.dot_dimension_numbers<[1], [1], [0], [0], [0, 0, 1, 0], [], []>} : vector<8x8xf32>, vector<10x8xf32>, vector<8x10xf32> -> vector<8x10xf32>
    %cst_40 = arith.constant 0.353553385 : f32
    %85 = vector.broadcast %cst_40 : f32 to vector<8x10xf32>
    %86 = arith.mulf %84, %85 : vector<8x10xf32>
    %cst_41 = arith.constant 0.000000e+00 : f32
    %87 = vector.broadcast %cst_41 : f32 to vector<8x10xf32>
    %88 = arith.cmpf oeq, %5, %87 : vector<8x10xf32>
    %cst_42 = arith.constant -1.000000e+10 : f32
    %89 = vector.broadcast %cst_42 : f32 to vector<8x10xf32>
    %90 = arith.select %88, %89, %86 : vector<8x10xi1>, vector<8x10xf32>
    %cst_43 = arith.constant dense<0xFF800000> : vector<8xf32>
    %91 = vector.multi_reduction <maximumf>, %90, %cst_43 [1] : vector<8x10xf32> to vector<8xf32>
    %92 = vector.shape_cast %91 : vector<8xf32> to vector<8x1xf32>
    %93 = vector.broadcast %92 : vector<8x1xf32> to vector<8x10xf32>
    %94 = arith.subf %90, %93 : vector<8x10xf32>
    %95 = math.exp %94 : vector<8x10xf32>
    %cst_44 = arith.constant dense<0.000000e+00> : vector<8xf32>
    %96 = vector.multi_reduction <add>, %95, %cst_44 [1] : vector<8x10xf32> to vector<8xf32>
    %97 = vector.shape_cast %96 : vector<8xf32> to vector<8x1xf32>
    %98 = tpu.reciprocal %97 {approx = true} : vector<8x1xf32> -> vector<8x1xf32>
    %99 = vector.broadcast %98 : vector<8x1xf32> to vector<8x10xf32>
    %100 = arith.mulf %95, %99 : vector<8x10xf32>
    %cst_45 = arith.constant dense<0.000000e+00> : vector<8x8xf32>
    %101 = tpu.matmul %100, %83, %cst_45 {dimension_numbers = #tpu.dot_dimension_numbers<[1], [0], [0], [1], [0, 0, 1, 1], [], []>} : vector<8x10xf32>, vector<10x8xf32>, vector<8x8xf32> -> vector<8x8xf32>
    %102 = tpu.concatenate %38, %59, %80, %101 in 1 : vector<8x8xf32>, vector<8x8xf32>, vector<8x8xf32>, vector<8x8xf32> -> vector<8x32xf32>
    %c0_46 = arith.constant 0 : index
    %c0_47 = arith.constant 0 : index
    %103 = vector.load %arg8[%c0_46, %c0_47] : memref<32x32xf32, #tpu.memory_space<vmem>>, vector<32x32xf32>
    %cst_48 = arith.constant dense<0.000000e+00> : vector<8x32xf32>
    %104 = tpu.matmul %102, %103, %cst_48 {dimension_numbers = #tpu.dot_dimension_numbers<[1], [0], [0], [1], [0, 0, 1, 1], [], []>} : vector<8x32xf32>, vector<32x32xf32>, vector<8x32xf32> -> vector<8x32xf32>
    %c0_49 = arith.constant 0 : index
    %c0_50 = arith.constant 0 : index
    %105 = vector.load %arg9[%c0_49, %c0_50] : memref<1x32xf32, #tpu.memory_space<vmem>>, vector<1x32xf32>
    %106 = vector.broadcast %105 : vector<1x32xf32> to vector<8x32xf32>
    %107 = arith.addf %104, %106 : vector<8x32xf32>
    %108 = arith.addf %1, %107 : vector<8x32xf32>
    %c0_51 = arith.constant 0 : index
    %c0_52 = arith.constant 0 : index
    %109 = vector.load %arg10[%c0_51, %c0_52] : memref<1x32xf32, #tpu.memory_space<vmem>>, vector<1x32xf32>
    %c0_53 = arith.constant 0 : index
    %c0_54 = arith.constant 0 : index
    %110 = vector.load %arg11[%c0_53, %c0_54] : memref<1x32xf32, #tpu.memory_space<vmem>>, vector<1x32xf32>
    %cst_55 = arith.constant dense<0.000000e+00> : vector<8xf32>
    %111 = vector.multi_reduction <add>, %108, %cst_55 [1] : vector<8x32xf32> to vector<8xf32>
    %112 = vector.shape_cast %111 : vector<8xf32> to vector<8x1xf32>
    %cst_56 = arith.constant 3.200000e+01 : f32
    %113 = vector.broadcast %cst_56 : f32 to vector<8x1xf32>
    %114 = arith.divf %112, %113 : vector<8x1xf32>
    %115 = vector.broadcast %114 : vector<8x1xf32> to vector<8x32xf32>
    %116 = arith.subf %108, %115 : vector<8x32xf32>
    %117 = arith.mulf %116, %116 : vector<8x32xf32>
    %cst_57 = arith.constant dense<0.000000e+00> : vector<8xf32>
    %118 = vector.multi_reduction <add>, %117, %cst_57 [1] : vector<8x32xf32> to vector<8xf32>
    %119 = vector.shape_cast %118 : vector<8xf32> to vector<8x1xf32>
    %cst_58 = arith.constant 3.200000e+01 : f32
    %120 = vector.broadcast %cst_58 : f32 to vector<8x1xf32>
    %121 = arith.divf %119, %120 : vector<8x1xf32>
    %122 = vector.broadcast %114 : vector<8x1xf32> to vector<8x32xf32>
    %123 = arith.subf %108, %122 : vector<8x32xf32>
    %cst_59 = arith.constant 9.99999974E-6 : f32
    %124 = vector.broadcast %cst_59 : f32 to vector<8x1xf32>
    %125 = arith.addf %121, %124 : vector<8x1xf32>
    %126 = math.rsqrt %125 : vector<8x1xf32>
    %127 = vector.broadcast %126 : vector<8x1xf32> to vector<8x32xf32>
    %128 = arith.mulf %123, %127 : vector<8x32xf32>
    %129 = vector.broadcast %109 : vector<1x32xf32> to vector<8x32xf32>
    %130 = arith.mulf %128, %129 : vector<8x32xf32>
    %131 = vector.broadcast %110 : vector<1x32xf32> to vector<8x32xf32>
    %132 = arith.addf %130, %131 : vector<8x32xf32>
    %c0_60 = arith.constant 0 : index
    %c0_61 = arith.constant 0 : index
    %c0_62 = arith.constant 0 : index
    %133 = vector.load %arg12[%c0_60, %c0_61, %c0_62] : memref<1x8x32xf32, #tpu.memory_space<vmem>>, vector<1x8x32xf32>
    %134 = vector.shape_cast %133 : vector<1x8x32xf32> to vector<8x32xf32>
    %135 = vector.shape_cast %132 : vector<8x32xf32> to vector<1x8x32xf32>
    tpu.vector_store %arg12[%c0_60, %c0_61, %c0_62], %135 {strides = array<i32>} : memref<1x8x32xf32, #tpu.memory_space<vmem>>, vector<1x8x32xf32>,
    return
  }
  func.func @transform_0(%arg0: i32) -> (i32, i32, i32) {
    %c0_i32 = arith.constant 0 : i32
    %c0_i32_0 = arith.constant 0 : i32
    %c0_i32_1 = arith.constant 0 : i32
    return %arg0, %c0_i32, %c0_i32_0 : i32, i32, i32
  }
  func.func @transform_1(%arg0: i32) -> (i32, i32, i32) {
    %c0_i32 = arith.constant 0 : i32
    %c0_i32_0 = arith.constant 0 : i32
    %c0_i32_1 = arith.constant 0 : i32
    return %arg0, %c0_i32, %c0_i32_0 : i32, i32, i32
  }
  func.func @transform_2(%arg0: i32) -> (i32, i32, i32, i32) {
    %c0_i32 = arith.constant 0 : i32
    %c0_i32_0 = arith.constant 0 : i32
    %c0_i32_1 = arith.constant 0 : i32
    %c0_i32_2 = arith.constant 0 : i32
    return %arg0, %c0_i32, %c0_i32_0, %c0_i32_1 : i32, i32, i32, i32
  }
  func.func @transform_3(%arg0: i32) -> (i32, i32) {
    %c0_i32 = arith.constant 0 : i32
    %c0_i32_0 = arith.constant 0 : i32
    %c0_i32_1 = arith.constant 0 : i32
    return %c0_i32, %c0_i32_0 : i32, i32
  }
  func.func @transform_4(%arg0: i32) -> (i32, i32) {
    %c0_i32 = arith.constant 0 : i32
    %c0_i32_0 = arith.constant 0 : i32
    %c0_i32_1 = arith.constant 0 : i32
    return %c0_i32, %c0_i32_0 : i32, i32
  }
  func.func @transform_5(%arg0: i32) -> (i32, i32) {
    %c0_i32 = arith.constant 0 : i32
    %c0_i32_0 = arith.constant 0 : i32
    %c0_i32_1 = arith.constant 0 : i32
    return %c0_i32, %c0_i32_0 : i32, i32
  }
  func.func @transform_6(%arg0: i32) -> (i32, i32) {
    %c0_i32 = arith.constant 0 : i32
    %c0_i32_0 = arith.constant 0 : i32
    %c0_i32_1 = arith.constant 0 : i32
    return %c0_i32, %c0_i32_0 : i32, i32
  }
  func.func @transform_7(%arg0: i32) -> (i32, i32) {
    %c0_i32 = arith.constant 0 : i32
    %c0_i32_0 = arith.constant 0 : i32
    %c0_i32_1 = arith.constant 0 : i32
    return %c0_i32, %c0_i32_0 : i32, i32
  }
  func.func @transform_8(%arg0: i32) -> (i32, i32) {
    %c0_i32 = arith.constant 0 : i32
    %c0_i32_0 = arith.constant 0 : i32
    %c0_i32_1 = arith.constant 0 : i32
    return %c0_i32, %c0_i32_0 : i32, i32
  }
  func.func @transform_9(%arg0: i32) -> (i32, i32) {
    %c0_i32 = arith.constant 0 : i32
    %c0_i32_0 = arith.constant 0 : i32
    %c0_i32_1 = arith.constant 0 : i32
    return %c0_i32, %c0_i32_0 : i32, i32
  }
  func.func @transform_10(%arg0: i32) -> (i32, i32) {
    %c0_i32 = arith.constant 0 : i32
    %c0_i32_0 = arith.constant 0 : i32
    %c0_i32_1 = arith.constant 0 : i32
    return %c0_i32, %c0_i32_0 : i32, i32
  }
  func.func @transform_11(%arg0: i32) -> (i32, i32, i32) {
    %c0_i32 = arith.constant 0 : i32
    %c0_i32_0 = arith.constant 0 : i32
    %c0_i32_1 = arith.constant 0 : i32
    return %arg0, %c0_i32, %c0_i32_0 : i32, i32, i32
  }
}

module attributes {stable_mosaic.version = 11 : i64} {
  func.func @_ffn_block_kernel(%arg0: i32, %arg1: memref<1x8x32xf32, #tpu.memory_space<vmem>>, %arg2: memref<32x64xf32, #tpu.memory_space<vmem>>, %arg3: memref<1x64xf32, #tpu.memory_space<vmem>>, %arg4: memref<64x32xf32, #tpu.memory_space<vmem>>, %arg5: memref<1x32xf32, #tpu.memory_space<vmem>>, %arg6: memref<1x32xf32, #tpu.memory_space<vmem>>, %arg7: memref<1x32xf32, #tpu.memory_space<vmem>>, %arg8: memref<1x8x32xf32, #tpu.memory_space<vmem>>) attributes {dimension_semantics = [#tpu.dimension_semantics<parallel>], iteration_bounds = array<i64: 2>, scalar_prefetch = 0 : i64, scratch_operands = 0 : i64, tpu.core_type = #tpu.core_type<tc>, window_params = [{transform_indices = @transform_0, window_bounds = array<i64: 1, 8, 32>}, {pipeline_mode = #tpu.pipeline_mode<synchronous>, transform_indices = @transform_1, window_bounds = array<i64: 32, 64>}, {pipeline_mode = #tpu.pipeline_mode<synchronous>, transform_indices = @transform_2, window_bounds = array<i64: 1, 64>}, {pipeline_mode = #tpu.pipeline_mode<synchronous>, transform_indices = @transform_3, window_bounds = array<i64: 64, 32>}, {pipeline_mode = #tpu.pipeline_mode<synchronous>, transform_indices = @transform_4, window_bounds = array<i64: 1, 32>}, {pipeline_mode = #tpu.pipeline_mode<synchronous>, transform_indices = @transform_5, window_bounds = array<i64: 1, 32>}, {pipeline_mode = #tpu.pipeline_mode<synchronous>, transform_indices = @transform_6, window_bounds = array<i64: 1, 32>}, {transform_indices = @transform_7, window_bounds = array<i64: 1, 8, 32>}]} {
    %c0 = arith.constant 0 : index
    %c0_0 = arith.constant 0 : index
    %c0_1 = arith.constant 0 : index
    %0 = vector.load %arg1[%c0, %c0_0, %c0_1] : memref<1x8x32xf32, #tpu.memory_space<vmem>>, vector<1x8x32xf32>
    %1 = vector.shape_cast %0 : vector<1x8x32xf32> to vector<8x32xf32>
    %c0_2 = arith.constant 0 : index
    %c0_3 = arith.constant 0 : index
    %2 = vector.load %arg2[%c0_2, %c0_3] : memref<32x64xf32, #tpu.memory_space<vmem>>, vector<32x64xf32>
    %cst = arith.constant dense<0.000000e+00> : vector<8x64xf32>
    %3 = tpu.matmul %1, %2, %cst {dimension_numbers = #tpu.dot_dimension_numbers<[1], [0], [0], [1], [0, 0, 1, 1], [], []>} : vector<8x32xf32>, vector<32x64xf32>, vector<8x64xf32> -> vector<8x64xf32>
    %c0_4 = arith.constant 0 : index
    %c0_5 = arith.constant 0 : index
    %4 = vector.load %arg3[%c0_4, %c0_5] : memref<1x64xf32, #tpu.memory_space<vmem>>, vector<1x64xf32>
    %5 = vector.broadcast %4 : vector<1x64xf32> to vector<8x64xf32>
    %6 = arith.addf %3, %5 : vector<8x64xf32>
    %cst_6 = arith.constant 0.000000e+00 : f32
    %7 = vector.broadcast %cst_6 : f32 to vector<8x64xf32>
    %8 = arith.maximumf %6, %7 : vector<8x64xf32>
    %c0_7 = arith.constant 0 : index
    %c0_8 = arith.constant 0 : index
    %9 = vector.load %arg4[%c0_7, %c0_8] : memref<64x32xf32, #tpu.memory_space<vmem>>, vector<64x32xf32>
    %cst_9 = arith.constant dense<0.000000e+00> : vector<8x32xf32>
    %10 = tpu.matmul %8, %9, %cst_9 {dimension_numbers = #tpu.dot_dimension_numbers<[1], [0], [0], [1], [0, 0, 1, 1], [], []>} : vector<8x64xf32>, vector<64x32xf32>, vector<8x32xf32> -> vector<8x32xf32>
    %c0_10 = arith.constant 0 : index
    %c0_11 = arith.constant 0 : index
    %11 = vector.load %arg5[%c0_10, %c0_11] : memref<1x32xf32, #tpu.memory_space<vmem>>, vector<1x32xf32>
    %12 = vector.broadcast %11 : vector<1x32xf32> to vector<8x32xf32>
    %13 = arith.addf %10, %12 : vector<8x32xf32>
    %14 = arith.addf %1, %13 : vector<8x32xf32>
    %c0_12 = arith.constant 0 : index
    %c0_13 = arith.constant 0 : index
    %15 = vector.load %arg6[%c0_12, %c0_13] : memref<1x32xf32, #tpu.memory_space<vmem>>, vector<1x32xf32>
    %c0_14 = arith.constant 0 : index
    %c0_15 = arith.constant 0 : index
    %16 = vector.load %arg7[%c0_14, %c0_15] : memref<1x32xf32, #tpu.memory_space<vmem>>, vector<1x32xf32>
    %cst_16 = arith.constant dense<0.000000e+00> : vector<8xf32>
    %17 = vector.multi_reduction <add>, %14, %cst_16 [1] : vector<8x32xf32> to vector<8xf32>
    %18 = vector.shape_cast %17 : vector<8xf32> to vector<8x1xf32>
    %cst_17 = arith.constant 3.200000e+01 : f32
    %19 = vector.broadcast %cst_17 : f32 to vector<8x1xf32>
    %20 = arith.divf %18, %19 : vector<8x1xf32>
    %21 = vector.broadcast %20 : vector<8x1xf32> to vector<8x32xf32>
    %22 = arith.subf %14, %21 : vector<8x32xf32>
    %23 = arith.mulf %22, %22 : vector<8x32xf32>
    %cst_18 = arith.constant dense<0.000000e+00> : vector<8xf32>
    %24 = vector.multi_reduction <add>, %23, %cst_18 [1] : vector<8x32xf32> to vector<8xf32>
    %25 = vector.shape_cast %24 : vector<8xf32> to vector<8x1xf32>
    %cst_19 = arith.constant 3.200000e+01 : f32
    %26 = vector.broadcast %cst_19 : f32 to vector<8x1xf32>
    %27 = arith.divf %25, %26 : vector<8x1xf32>
    %28 = vector.broadcast %20 : vector<8x1xf32> to vector<8x32xf32>
    %29 = arith.subf %14, %28 : vector<8x32xf32>
    %cst_20 = arith.constant 9.99999974E-6 : f32
    %30 = vector.broadcast %cst_20 : f32 to vector<8x1xf32>
    %31 = arith.addf %27, %30 : vector<8x1xf32>
    %32 = math.rsqrt %31 : vector<8x1xf32>
    %33 = vector.broadcast %32 : vector<8x1xf32> to vector<8x32xf32>
    %34 = arith.mulf %29, %33 : vector<8x32xf32>
    %35 = vector.broadcast %15 : vector<1x32xf32> to vector<8x32xf32>
    %36 = arith.mulf %34, %35 : vector<8x32xf32>
    %37 = vector.broadcast %16 : vector<1x32xf32> to vector<8x32xf32>
    %38 = arith.addf %36, %37 : vector<8x32xf32>
    %c0_21 = arith.constant 0 : index
    %c0_22 = arith.constant 0 : index
    %c0_23 = arith.constant 0 : index
    %39 = vector.load %arg8[%c0_21, %c0_22, %c0_23] : memref<1x8x32xf32, #tpu.memory_space<vmem>>, vector<1x8x32xf32>
    %40 = vector.shape_cast %39 : vector<1x8x32xf32> to vector<8x32xf32>
    %41 = vector.shape_cast %38 : vector<8x32xf32> to vector<1x8x32xf32>
    tpu.vector_store %arg8[%c0_21, %c0_22, %c0_23], %41 {strides = array<i32>} : memref<1x8x32xf32, #tpu.memory_space<vmem>>, vector<1x8x32xf32>,
    return
  }
  func.func @transform_0(%arg0: i32) -> (i32, i32, i32) {
    %c0_i32 = arith.constant 0 : i32
    %c0_i32_0 = arith.constant 0 : i32
    %c0_i32_1 = arith.constant 0 : i32
    return %arg0, %c0_i32, %c0_i32_0 : i32, i32, i32
  }
  func.func @transform_1(%arg0: i32) -> (i32, i32) {
    %c0_i32 = arith.constant 0 : i32
    %c0_i32_0 = arith.constant 0 : i32
    %c0_i32_1 = arith.constant 0 : i32
    return %c0_i32, %c0_i32_0 : i32, i32
  }
  func.func @transform_2(%arg0: i32) -> (i32, i32) {
    %c0_i32 = arith.constant 0 : i32
    %c0_i32_0 = arith.constant 0 : i32
    %c0_i32_1 = arith.constant 0 : i32
    return %c0_i32, %c0_i32_0 : i32, i32
  }
  func.func @transform_3(%arg0: i32) -> (i32, i32) {
    %c0_i32 = arith.constant 0 : i32
    %c0_i32_0 = arith.constant 0 : i32
    %c0_i32_1 = arith.constant 0 : i32
    return %c0_i32, %c0_i32_0 : i32, i32
  }
  func.func @transform_4(%arg0: i32) -> (i32, i32) {
    %c0_i32 = arith.constant 0 : i32
    %c0_i32_0 = arith.constant 0 : i32
    %c0_i32_1 = arith.constant 0 : i32
    return %c0_i32, %c0_i32_0 : i32, i32
  }
  func.func @transform_5(%arg0: i32) -> (i32, i32) {
    %c0_i32 = arith.constant 0 : i32
    %c0_i32_0 = arith.constant 0 : i32
    %c0_i32_1 = arith.constant 0 : i32
    return %c0_i32, %c0_i32_0 : i32, i32
  }
  func.func @transform_6(%arg0: i32) -> (i32, i32) {
    %c0_i32 = arith.constant 0 : i32
    %c0_i32_0 = arith.constant 0 : i32
    %c0_i32_1 = arith.constant 0 : i32
    return %c0_i32, %c0_i32_0 : i32, i32
  }
  func.func @transform_7(%arg0: i32) -> (i32, i32, i32) {
    %c0_i32 = arith.constant 0 : i32
    %c0_i32_0 = arith.constant 0 : i32
    %c0_i32_1 = arith.constant 0 : i32
    return %arg0, %c0_i32, %c0_i32_0 : i32, i32, i32
  }
}

module attributes {stable_mosaic.version = 11 : i64} {
  func.func @kernel(%arg0: i32, %arg1: memref<1x8x32xf32, #tpu.memory_space<vmem>>, %arg2: memref<1x8x32xf32, #tpu.memory_space<vmem>>, %arg3: memref<1x1x8x8xf32, #tpu.memory_space<vmem>>, %arg4: memref<32x32xf32, #tpu.memory_space<vmem>>, %arg5: memref<1x32xf32, #tpu.memory_space<vmem>>, %arg6: memref<32x64xf32, #tpu.memory_space<vmem>>, %arg7: memref<1x64xf32, #tpu.memory_space<vmem>>, %arg8: memref<32x32xf32, #tpu.memory_space<vmem>>, %arg9: memref<1x32xf32, #tpu.memory_space<vmem>>, %arg10: memref<1x32xf32, #tpu.memory_space<vmem>>, %arg11: memref<1x32xf32, #tpu.memory_space<vmem>>, %arg12: memref<1x8x32xf32, #tpu.memory_space<vmem>>) attributes {dimension_semantics = [#tpu.dimension_semantics<parallel>], iteration_bounds = array<i64: 2>, scalar_prefetch = 0 : i64, scratch_operands = 0 : i64, tpu.core_type = #tpu.core_type<tc>, window_params = [{transform_indices = @transform_0, window_bounds = array<i64: 1, 8, 32>}, {transform_indices = @transform_1, window_bounds = array<i64: 1, 8, 32>}, {transform_indices = @transform_2, window_bounds = array<i64: 1, 1, 8, 8>}, {pipeline_mode = #tpu.pipeline_mode<synchronous>, transform_indices = @transform_3, window_bounds = array<i64: 32, 32>}, {pipeline_mode = #tpu.pipeline_mode<synchronous>, transform_indices = @transform_4, window_bounds = array<i64: 1, 32>}, {pipeline_mode = #tpu.pipeline_mode<synchronous>, transform_indices = @transform_5, window_bounds = array<i64: 32, 64>}, {pipeline_mode = #tpu.pipeline_mode<synchronous>, transform_indices = @transform_6, window_bounds = array<i64: 1, 64>}, {pipeline_mode = #tpu.pipeline_mode<synchronous>, transform_indices = @transform_7, window_bounds = array<i64: 32, 32>}, {pipeline_mode = #tpu.pipeline_mode<synchronous>, transform_indices = @transform_8, window_bounds = array<i64: 1, 32>}, {pipeline_mode = #tpu.pipeline_mode<synchronous>, transform_indices = @transform_9, window_bounds = array<i64: 1, 32>}, {pipeline_mode = #tpu.pipeline_mode<synchronous>, transform_indices = @transform_10, window_bounds = array<i64: 1, 32>}, {transform_indices = @transform_11, window_bounds = array<i64: 1, 8, 32>}]} {
    %c0 = arith.constant 0 : index
    %c0_0 = arith.constant 0 : index
    %c0_1 = arith.constant 0 : index
    %0 = vector.load %arg1[%c0, %c0_0, %c0_1] : memref<1x8x32xf32, #tpu.memory_space<vmem>>, vector<1x8x32xf32>
    %1 = vector.shape_cast %0 : vector<1x8x32xf32> to vector<8x32xf32>
    %c0_2 = arith.constant 0 : index
    %c0_3 = arith.constant 0 : index
    %c0_4 = arith.constant 0 : index
    %2 = vector.load %arg2[%c0_2, %c0_3, %c0_4] : memref<1x8x32xf32, #tpu.memory_space<vmem>>, vector<1x8x32xf32>
    %3 = vector.shape_cast %2 : vector<1x8x32xf32> to vector<8x32xf32>
    %c0_5 = arith.constant 0 : index
    %c0_6 = arith.constant 0 : index
    %c0_7 = arith.constant 0 : index
    %c0_8 = arith.constant 0 : index
    %4 = vector.load %arg3[%c0_5, %c0_6, %c0_7, %c0_8] : memref<1x1x8x8xf32, #tpu.memory_space<vmem>>, vector<1x1x8x8xf32>
    %5 = vector.shape_cast %4 : vector<1x1x8x8xf32> to vector<8x8xf32>
    %c0_9 = arith.constant 0 : index
    %c0_10 = arith.constant 0 : index
    %6 = vector.load %arg4[%c0_9, %c0_10] : memref<32x32xf32, #tpu.memory_space<vmem>>, vector<32x32xf32>
    %cst = arith.constant dense<0.000000e+00> : vector<8x32xf32>
    %7 = tpu.matmul %1, %6, %cst {dimension_numbers = #tpu.dot_dimension_numbers<[1], [0], [0], [1], [0, 0, 1, 1], [], []>} : vector<8x32xf32>, vector<32x32xf32>, vector<8x32xf32> -> vector<8x32xf32>
    %c0_11 = arith.constant 0 : index
    %c0_12 = arith.constant 0 : index
    %8 = vector.load %arg5[%c0_11, %c0_12] : memref<1x32xf32, #tpu.memory_space<vmem>>, vector<1x32xf32>
    %9 = vector.broadcast %8 : vector<1x32xf32> to vector<8x32xf32>
    %10 = arith.addf %7, %9 : vector<8x32xf32>
    %c0_13 = arith.constant 0 : index
    %c0_14 = arith.constant 0 : index
    %11 = vector.load %arg6[%c0_13, %c0_14] : memref<32x64xf32, #tpu.memory_space<vmem>>, vector<32x64xf32>
    %cst_15 = arith.constant dense<0.000000e+00> : vector<8x64xf32>
    %12 = tpu.matmul %3, %11, %cst_15 {dimension_numbers = #tpu.dot_dimension_numbers<[1], [0], [0], [1], [0, 0, 1, 1], [], []>} : vector<8x32xf32>, vector<32x64xf32>, vector<8x64xf32> -> vector<8x64xf32>
    %c0_16 = arith.constant 0 : index
    %c0_17 = arith.constant 0 : index
    %13 = vector.load %arg7[%c0_16, %c0_17] : memref<1x64xf32, #tpu.memory_space<vmem>>, vector<1x64xf32>
    %14 = vector.broadcast %13 : vector<1x64xf32> to vector<8x64xf32>
    %15 = arith.addf %12, %14 : vector<8x64xf32>
    %16 = vector.extract_strided_slice %15 {offsets = [0, 0], sizes = [8, 32], strides = [1, 1]} : vector<8x64xf32> to vector<8x32xf32>
    %17 = vector.extract_strided_slice %15 {offsets = [0, 32], sizes = [8, 32], strides = [1, 1]} : vector<8x64xf32> to vector<8x32xf32>
    %18 = vector.extract_strided_slice %10 {offsets = [0, 0], sizes = [8, 8], strides = [1, 1]} : vector<8x32xf32> to vector<8x8xf32>
    %19 = vector.extract_strided_slice %16 {offsets = [0, 0], sizes = [8, 8], strides = [1, 1]} : vector<8x32xf32> to vector<8x8xf32>
    %20 = vector.extract_strided_slice %17 {offsets = [0, 0], sizes = [8, 8], strides = [1, 1]} : vector<8x32xf32> to vector<8x8xf32>
    %cst_18 = arith.constant dense<0.000000e+00> : vector<8x8xf32>
    %21 = tpu.matmul %18, %19, %cst_18 {dimension_numbers = #tpu.dot_dimension_numbers<[1], [1], [0], [0], [0, 0, 1, 0], [], []>} : vector<8x8xf32>, vector<8x8xf32>, vector<8x8xf32> -> vector<8x8xf32>
    %cst_19 = arith.constant 0.353553385 : f32
    %22 = vector.broadcast %cst_19 : f32 to vector<8x8xf32>
    %23 = arith.mulf %21, %22 : vector<8x8xf32>
    %cst_20 = arith.constant 0.000000e+00 : f32
    %24 = vector.broadcast %cst_20 : f32 to vector<8x8xf32>
    %25 = arith.cmpf oeq, %5, %24 : vector<8x8xf32>
    %cst_21 = arith.constant -1.000000e+10 : f32
    %26 = vector.broadcast %cst_21 : f32 to vector<8x8xf32>
    %27 = arith.select %25, %26, %23 : vector<8x8xi1>, vector<8x8xf32>
    %cst_22 = arith.constant dense<0xFF800000> : vector<8xf32>
    %28 = vector.multi_reduction <maximumf>, %27, %cst_22 [1] : vector<8x8xf32> to vector<8xf32>
    %29 = vector.shape_cast %28 : vector<8xf32> to vector<8x1xf32>
    %30 = vector.broadcast %29 : vector<8x1xf32> to vector<8x8xf32>
    %31 = arith.subf %27, %30 : vector<8x8xf32>
    %32 = math.exp %31 : vector<8x8xf32>
    %cst_23 = arith.constant dense<0.000000e+00> : vector<8xf32>
    %33 = vector.multi_reduction <add>, %32, %cst_23 [1] : vector<8x8xf32> to vector<8xf32>
    %34 = vector.shape_cast %33 : vector<8xf32> to vector<8x1xf32>
    %35 = tpu.reciprocal %34 {approx = true} : vector<8x1xf32> -> vector<8x1xf32>
    %36 = vector.broadcast %35 : vector<8x1xf32> to vector<8x8xf32>
    %37 = arith.mulf %32, %36 : vector<8x8xf32>
    %cst_24 = arith.constant dense<0.000000e+00> : vector<8x8xf32>
    %38 = tpu.matmul %37, %20, %cst_24 {dimension_numbers = #tpu.dot_dimension_numbers<[1], [0], [0], [1], [0, 0, 1, 1], [], []>} : vector<8x8xf32>, vector<8x8xf32>, vector<8x8xf32> -> vector<8x8xf32>
    %39 = vector.extract_strided_slice %10 {offsets = [0, 8], sizes = [8, 8], strides = [1, 1]} : vector<8x32xf32> to vector<8x8xf32>
    %40 = vector.extract_strided_slice %16 {offsets = [0, 8], sizes = [8, 8], strides = [1, 1]} : vector<8x32xf32> to vector<8x8xf32>
    %41 = vector.extract_strided_slice %17 {offsets = [0, 8], sizes = [8, 8], strides = [1, 1]} : vector<8x32xf32> to vector<8x8xf32>
    %cst_25 = arith.constant dense<0.000000e+00> : vector<8x8xf32>
    %42 = tpu.matmul %39, %40, %cst_25 {dimension_numbers = #tpu.dot_dimension_numbers<[1], [1], [0], [0], [0, 0, 1, 0], [], []>} : vector<8x8xf32>, vector<8x8xf32>, vector<8x8xf32> -> vector<8x8xf32>
    %cst_26 = arith.constant 0.353553385 : f32
    %43 = vector.broadcast %cst_26 : f32 to vector<8x8xf32>
    %44 = arith.mulf %42, %43 : vector<8x8xf32>
    %cst_27 = arith.constant 0.000000e+00 : f32
    %45 = vector.broadcast %cst_27 : f32 to vector<8x8xf32>
    %46 = arith.cmpf oeq, %5, %45 : vector<8x8xf32>
    %cst_28 = arith.constant -1.000000e+10 : f32
    %47 = vector.broadcast %cst_28 : f32 to vector<8x8xf32>
    %48 = arith.select %46, %47, %44 : vector<8x8xi1>, vector<8x8xf32>
    %cst_29 = arith.constant dense<0xFF800000> : vector<8xf32>
    %49 = vector.multi_reduction <maximumf>, %48, %cst_29 [1] : vector<8x8xf32> to vector<8xf32>
    %50 = vector.shape_cast %49 : vector<8xf32> to vector<8x1xf32>
    %51 = vector.broadcast %50 : vector<8x1xf32> to vector<8x8xf32>
    %52 = arith.subf %48, %51 : vector<8x8xf32>
    %53 = math.exp %52 : vector<8x8xf32>
    %cst_30 = arith.constant dense<0.000000e+00> : vector<8xf32>
    %54 = vector.multi_reduction <add>, %53, %cst_30 [1] : vector<8x8xf32> to vector<8xf32>
    %55 = vector.shape_cast %54 : vector<8xf32> to vector<8x1xf32>
    %56 = tpu.reciprocal %55 {approx = true} : vector<8x1xf32> -> vector<8x1xf32>
    %57 = vector.broadcast %56 : vector<8x1xf32> to vector<8x8xf32>
    %58 = arith.mulf %53, %57 : vector<8x8xf32>
    %cst_31 = arith.constant dense<0.000000e+00> : vector<8x8xf32>
    %59 = tpu.matmul %58, %41, %cst_31 {dimension_numbers = #tpu.dot_dimension_numbers<[1], [0], [0], [1], [0, 0, 1, 1], [], []>} : vector<8x8xf32>, vector<8x8xf32>, vector<8x8xf32> -> vector<8x8xf32>
    %60 = vector.extract_strided_slice %10 {offsets = [0, 16], sizes = [8, 8], strides = [1, 1]} : vector<8x32xf32> to vector<8x8xf32>
    %61 = vector.extract_strided_slice %16 {offsets = [0, 16], sizes = [8, 8], strides = [1, 1]} : vector<8x32xf32> to vector<8x8xf32>
    %62 = vector.extract_strided_slice %17 {offsets = [0, 16], sizes = [8, 8], strides = [1, 1]} : vector<8x32xf32> to vector<8x8xf32>
    %cst_32 = arith.constant dense<0.000000e+00> : vector<8x8xf32>
    %63 = tpu.matmul %60, %61, %cst_32 {dimension_numbers = #tpu.dot_dimension_numbers<[1], [1], [0], [0], [0, 0, 1, 0], [], []>} : vector<8x8xf32>, vector<8x8xf32>, vector<8x8xf32> -> vector<8x8xf32>
    %cst_33 = arith.constant 0.353553385 : f32
    %64 = vector.broadcast %cst_33 : f32 to vector<8x8xf32>
    %65 = arith.mulf %63, %64 : vector<8x8xf32>
    %cst_34 = arith.constant 0.000000e+00 : f32
    %66 = vector.broadcast %cst_34 : f32 to vector<8x8xf32>
    %67 = arith.cmpf oeq, %5, %66 : vector<8x8xf32>
    %cst_35 = arith.constant -1.000000e+10 : f32
    %68 = vector.broadcast %cst_35 : f32 to vector<8x8xf32>
    %69 = arith.select %67, %68, %65 : vector<8x8xi1>, vector<8x8xf32>
    %cst_36 = arith.constant dense<0xFF800000> : vector<8xf32>
    %70 = vector.multi_reduction <maximumf>, %69, %cst_36 [1] : vector<8x8xf32> to vector<8xf32>
    %71 = vector.shape_cast %70 : vector<8xf32> to vector<8x1xf32>
    %72 = vector.broadcast %71 : vector<8x1xf32> to vector<8x8xf32>
    %73 = arith.subf %69, %72 : vector<8x8xf32>
    %74 = math.exp %73 : vector<8x8xf32>
    %cst_37 = arith.constant dense<0.000000e+00> : vector<8xf32>
    %75 = vector.multi_reduction <add>, %74, %cst_37 [1] : vector<8x8xf32> to vector<8xf32>
    %76 = vector.shape_cast %75 : vector<8xf32> to vector<8x1xf32>
    %77 = tpu.reciprocal %76 {approx = true} : vector<8x1xf32> -> vector<8x1xf32>
    %78 = vector.broadcast %77 : vector<8x1xf32> to vector<8x8xf32>
    %79 = arith.mulf %74, %78 : vector<8x8xf32>
    %cst_38 = arith.constant dense<0.000000e+00> : vector<8x8xf32>
    %80 = tpu.matmul %79, %62, %cst_38 {dimension_numbers = #tpu.dot_dimension_numbers<[1], [0], [0], [1], [0, 0, 1, 1], [], []>} : vector<8x8xf32>, vector<8x8xf32>, vector<8x8xf32> -> vector<8x8xf32>
    %81 = vector.extract_strided_slice %10 {offsets = [0, 24], sizes = [8, 8], strides = [1, 1]} : vector<8x32xf32> to vector<8x8xf32>
    %82 = vector.extract_strided_slice %16 {offsets = [0, 24], sizes = [8, 8], strides = [1, 1]} : vector<8x32xf32> to vector<8x8xf32>
    %83 = vector.extract_strided_slice %17 {offsets = [0, 24], sizes = [8, 8], strides = [1, 1]} : vector<8x32xf32> to vector<8x8xf32>
    %cst_39 = arith.constant dense<0.000000e+00> : vector<8x8xf32>
    %84 = tpu.matmul %81, %82, %cst_39 {dimension_numbers = #tpu.dot_dimension_numbers<[1], [1], [0], [0], [0, 0, 1, 0], [], []>} : vector<8x8xf32>, vector<8x8xf32>, vector<8x8xf32> -> vector<8x8xf32>
    %cst_40 = arith.constant 0.353553385 : f32
    %85 = vector.broadcast %cst_40 : f32 to vector<8x8xf32>
    %86 = arith.mulf %84, %85 : vector<8x8xf32>
    %cst_41 = arith.constant 0.000000e+00 : f32
    %87 = vector.broadcast %cst_41 : f32 to vector<8x8xf32>
    %88 = arith.cmpf oeq, %5, %87 : vector<8x8xf32>
    %cst_42 = arith.constant -1.000000e+10 : f32
    %89 = vector.broadcast %cst_42 : f32 to vector<8x8xf32>
    %90 = arith.select %88, %89, %86 : vector<8x8xi1>, vector<8x8xf32>
    %cst_43 = arith.constant dense<0xFF800000> : vector<8xf32>
    %91 = vector.multi_reduction <maximumf>, %90, %cst_43 [1] : vector<8x8xf32> to vector<8xf32>
    %92 = vector.shape_cast %91 : vector<8xf32> to vector<8x1xf32>
    %93 = vector.broadcast %92 : vector<8x1xf32> to vector<8x8xf32>
    %94 = arith.subf %90, %93 : vector<8x8xf32>
    %95 = math.exp %94 : vector<8x8xf32>
    %cst_44 = arith.constant dense<0.000000e+00> : vector<8xf32>
    %96 = vector.multi_reduction <add>, %95, %cst_44 [1] : vector<8x8xf32> to vector<8xf32>
    %97 = vector.shape_cast %96 : vector<8xf32> to vector<8x1xf32>
    %98 = tpu.reciprocal %97 {approx = true} : vector<8x1xf32> -> vector<8x1xf32>
    %99 = vector.broadcast %98 : vector<8x1xf32> to vector<8x8xf32>
    %100 = arith.mulf %95, %99 : vector<8x8xf32>
    %cst_45 = arith.constant dense<0.000000e+00> : vector<8x8xf32>
    %101 = tpu.matmul %100, %83, %cst_45 {dimension_numbers = #tpu.dot_dimension_numbers<[1], [0], [0], [1], [0, 0, 1, 1], [], []>} : vector<8x8xf32>, vector<8x8xf32>, vector<8x8xf32> -> vector<8x8xf32>
    %102 = tpu.concatenate %38, %59, %80, %101 in 1 : vector<8x8xf32>, vector<8x8xf32>, vector<8x8xf32>, vector<8x8xf32> -> vector<8x32xf32>
    %c0_46 = arith.constant 0 : index
    %c0_47 = arith.constant 0 : index
    %103 = vector.load %arg8[%c0_46, %c0_47] : memref<32x32xf32, #tpu.memory_space<vmem>>, vector<32x32xf32>
    %cst_48 = arith.constant dense<0.000000e+00> : vector<8x32xf32>
    %104 = tpu.matmul %102, %103, %cst_48 {dimension_numbers = #tpu.dot_dimension_numbers<[1], [0], [0], [1], [0, 0, 1, 1], [], []>} : vector<8x32xf32>, vector<32x32xf32>, vector<8x32xf32> -> vector<8x32xf32>
    %c0_49 = arith.constant 0 : index
    %c0_50 = arith.constant 0 : index
    %105 = vector.load %arg9[%c0_49, %c0_50] : memref<1x32xf32, #tpu.memory_space<vmem>>, vector<1x32xf32>
    %106 = vector.broadcast %105 : vector<1x32xf32> to vector<8x32xf32>
    %107 = arith.addf %104, %106 : vector<8x32xf32>
    %108 = arith.addf %1, %107 : vector<8x32xf32>
    %c0_51 = arith.constant 0 : index
    %c0_52 = arith.constant 0 : index
    %109 = vector.load %arg10[%c0_51, %c0_52] : memref<1x32xf32, #tpu.memory_space<vmem>>, vector<1x32xf32>
    %c0_53 = arith.constant 0 : index
    %c0_54 = arith.constant 0 : index
    %110 = vector.load %arg11[%c0_53, %c0_54] : memref<1x32xf32, #tpu.memory_space<vmem>>, vector<1x32xf32>
    %cst_55 = arith.constant dense<0.000000e+00> : vector<8xf32>
    %111 = vector.multi_reduction <add>, %108, %cst_55 [1] : vector<8x32xf32> to vector<8xf32>
    %112 = vector.shape_cast %111 : vector<8xf32> to vector<8x1xf32>
    %cst_56 = arith.constant 3.200000e+01 : f32
    %113 = vector.broadcast %cst_56 : f32 to vector<8x1xf32>
    %114 = arith.divf %112, %113 : vector<8x1xf32>
    %115 = vector.broadcast %114 : vector<8x1xf32> to vector<8x32xf32>
    %116 = arith.subf %108, %115 : vector<8x32xf32>
    %117 = arith.mulf %116, %116 : vector<8x32xf32>
    %cst_57 = arith.constant dense<0.000000e+00> : vector<8xf32>
    %118 = vector.multi_reduction <add>, %117, %cst_57 [1] : vector<8x32xf32> to vector<8xf32>
    %119 = vector.shape_cast %118 : vector<8xf32> to vector<8x1xf32>
    %cst_58 = arith.constant 3.200000e+01 : f32
    %120 = vector.broadcast %cst_58 : f32 to vector<8x1xf32>
    %121 = arith.divf %119, %120 : vector<8x1xf32>
    %122 = vector.broadcast %114 : vector<8x1xf32> to vector<8x32xf32>
    %123 = arith.subf %108, %122 : vector<8x32xf32>
    %cst_59 = arith.constant 9.99999974E-6 : f32
    %124 = vector.broadcast %cst_59 : f32 to vector<8x1xf32>
    %125 = arith.addf %121, %124 : vector<8x1xf32>
    %126 = math.rsqrt %125 : vector<8x1xf32>
    %127 = vector.broadcast %126 : vector<8x1xf32> to vector<8x32xf32>
    %128 = arith.mulf %123, %127 : vector<8x32xf32>
    %129 = vector.broadcast %109 : vector<1x32xf32> to vector<8x32xf32>
    %130 = arith.mulf %128, %129 : vector<8x32xf32>
    %131 = vector.broadcast %110 : vector<1x32xf32> to vector<8x32xf32>
    %132 = arith.addf %130, %131 : vector<8x32xf32>
    %c0_60 = arith.constant 0 : index
    %c0_61 = arith.constant 0 : index
    %c0_62 = arith.constant 0 : index
    %133 = vector.load %arg12[%c0_60, %c0_61, %c0_62] : memref<1x8x32xf32, #tpu.memory_space<vmem>>, vector<1x8x32xf32>
    %134 = vector.shape_cast %133 : vector<1x8x32xf32> to vector<8x32xf32>
    %135 = vector.shape_cast %132 : vector<8x32xf32> to vector<1x8x32xf32>
    tpu.vector_store %arg12[%c0_60, %c0_61, %c0_62], %135 {strides = array<i32>} : memref<1x8x32xf32, #tpu.memory_space<vmem>>, vector<1x8x32xf32>,
    return
  }
  func.func @transform_0(%arg0: i32) -> (i32, i32, i32) {
    %c0_i32 = arith.constant 0 : i32
    %c0_i32_0 = arith.constant 0 : i32
    %c0_i32_1 = arith.constant 0 : i32
    return %arg0, %c0_i32, %c0_i32_0 : i32, i32, i32
  }
  func.func @transform_1(%arg0: i32) -> (i32, i32, i32) {
    %c0_i32 = arith.constant 0 : i32
    %c0_i32_0 = arith.constant 0 : i32
    %c0_i32_1 = arith.constant 0 : i32
    return %arg0, %c0_i32, %c0_i32_0 : i32, i32, i32
  }
  func.func @transform_2(%arg0: i32) -> (i32, i32, i32, i32) {
    %c0_i32 = arith.constant 0 : i32
    %c0_i32_0 = arith.constant 0 : i32
    %c0_i32_1 = arith.constant 0 : i32
    %c0_i32_2 = arith.constant 0 : i32
    return %arg0, %c0_i32, %c0_i32_0, %c0_i32_1 : i32, i32, i32, i32
  }
  func.func @transform_3(%arg0: i32) -> (i32, i32) {
    %c0_i32 = arith.constant 0 : i32
    %c0_i32_0 = arith.constant 0 : i32
    %c0_i32_1 = arith.constant 0 : i32
    return %c0_i32, %c0_i32_0 : i32, i32
  }
  func.func @transform_4(%arg0: i32) -> (i32, i32) {
    %c0_i32 = arith.constant 0 : i32
    %c0_i32_0 = arith.constant 0 : i32
    %c0_i32_1 = arith.constant 0 : i32
    return %c0_i32, %c0_i32_0 : i32, i32
  }
  func.func @transform_5(%arg0: i32) -> (i32, i32) {
    %c0_i32 = arith.constant 0 : i32
    %c0_i32_0 = arith.constant 0 : i32
    %c0_i32_1 = arith.constant 0 : i32
    return %c0_i32, %c0_i32_0 : i32, i32
  }
  func.func @transform_6(%arg0: i32) -> (i32, i32) {
    %c0_i32 = arith.constant 0 : i32
    %c0_i32_0 = arith.constant 0 : i32
    %c0_i32_1 = arith.constant 0 : i32
    return %c0_i32, %c0_i32_0 : i32, i32
  }
  func.func @transform_7(%arg0: i32) -> (i32, i32) {
    %c0_i32 = arith.constant 0 : i32
    %c0_i32_0 = arith.constant 0 : i32
    %c0_i32_1 = arith.constant 0 : i32
    return %c0_i32, %c0_i32_0 : i32, i32
  }
  func.func @transform_8(%arg0: i32) -> (i32, i32) {
    %c0_i32 = arith.constant 0 : i32
    %c0_i32_0 = arith.constant 0 : i32
    %c0_i32_1 = arith.constant 0 : i32
    return %c0_i32, %c0_i32_0 : i32, i32
  }
  func.func @transform_9(%arg0: i32) -> (i32, i32) {
    %c0_i32 = arith.constant 0 : i32
    %c0_i32_0 = arith.constant 0 : i32
    %c0_i32_1 = arith.constant 0 : i32
    return %c0_i32, %c0_i32_0 : i32, i32
  }
  func.func @transform_10(%arg0: i32) -> (i32, i32) {
    %c0_i32 = arith.constant 0 : i32
    %c0_i32_0 = arith.constant 0 : i32
    %c0_i32_1 = arith.constant 0 : i32
    return %c0_i32, %c0_i32_0 : i32, i32
  }
  func.func @transform_11(%arg0: i32) -> (i32, i32, i32) {
    %c0_i32 = arith.constant 0 : i32
    %c0_i32_0 = arith.constant 0 : i32
    %c0_i32_1 = arith.constant 0 : i32
    return %arg0, %c0_i32, %c0_i32_0 : i32, i32, i32
  }
}

module attributes {stable_mosaic.version = 11 : i64} {
  func.func @kernel(%arg0: i32, %arg1: memref<1x8x32xf32, #tpu.memory_space<vmem>>, %arg2: memref<1x10x32xf32, #tpu.memory_space<vmem>>, %arg3: memref<1x1x8x10xf32, #tpu.memory_space<vmem>>, %arg4: memref<32x32xf32, #tpu.memory_space<vmem>>, %arg5: memref<1x32xf32, #tpu.memory_space<vmem>>, %arg6: memref<32x64xf32, #tpu.memory_space<vmem>>, %arg7: memref<1x64xf32, #tpu.memory_space<vmem>>, %arg8: memref<32x32xf32, #tpu.memory_space<vmem>>, %arg9: memref<1x32xf32, #tpu.memory_space<vmem>>, %arg10: memref<1x32xf32, #tpu.memory_space<vmem>>, %arg11: memref<1x32xf32, #tpu.memory_space<vmem>>, %arg12: memref<1x8x32xf32, #tpu.memory_space<vmem>>, %arg13: memref<1x4x8x10xf32, #tpu.memory_space<vmem>>) attributes {dimension_semantics = [#tpu.dimension_semantics<parallel>], iteration_bounds = array<i64: 2>, scalar_prefetch = 0 : i64, scratch_operands = 0 : i64, tpu.core_type = #tpu.core_type<tc>, window_params = [{transform_indices = @transform_0, window_bounds = array<i64: 1, 8, 32>}, {transform_indices = @transform_1, window_bounds = array<i64: 1, 10, 32>}, {transform_indices = @transform_2, window_bounds = array<i64: 1, 1, 8, 10>}, {pipeline_mode = #tpu.pipeline_mode<synchronous>, transform_indices = @transform_3, window_bounds = array<i64: 32, 32>}, {pipeline_mode = #tpu.pipeline_mode<synchronous>, transform_indices = @transform_4, window_bounds = array<i64: 1, 32>}, {pipeline_mode = #tpu.pipeline_mode<synchronous>, transform_indices = @transform_5, window_bounds = array<i64: 32, 64>}, {pipeline_mode = #tpu.pipeline_mode<synchronous>, transform_indices = @transform_6, window_bounds = array<i64: 1, 64>}, {pipeline_mode = #tpu.pipeline_mode<synchronous>, transform_indices = @transform_7, window_bounds = array<i64: 32, 32>}, {pipeline_mode = #tpu.pipeline_mode<synchronous>, transform_indices = @transform_8, window_bounds = array<i64: 1, 32>}, {pipeline_mode = #tpu.pipeline_mode<synchronous>, transform_indices = @transform_9, window_bounds = array<i64: 1, 32>}, {pipeline_mode = #tpu.pipeline_mode<synchronous>, transform_indices = @transform_10, window_bounds = array<i64: 1, 32>}, {transform_indices = @transform_11, window_bounds = array<i64: 1, 8, 32>}, {transform_indices = @transform_12, window_bounds = array<i64: 1, 4, 8, 10>}]} {
    %c0 = arith.constant 0 : index
    %c0_0 = arith.constant 0 : index
    %c0_1 = arith.constant 0 : index
    %0 = vector.load %arg1[%c0, %c0_0, %c0_1] : memref<1x8x32xf32, #tpu.memory_space<vmem>>, vector<1x8x32xf32>
    %1 = vector.shape_cast %0 : vector<1x8x32xf32> to vector<8x32xf32>
    %c0_2 = arith.constant 0 : index
    %c0_3 = arith.constant 0 : index
    %c0_4 = arith.constant 0 : index
    %2 = vector.load %arg2[%c0_2, %c0_3, %c0_4] : memref<1x10x32xf32, #tpu.memory_space<vmem>>, vector<1x10x32xf32>
    %3 = vector.shape_cast %2 : vector<1x10x32xf32> to vector<10x32xf32>
    %c0_5 = arith.constant 0 : index
    %c0_6 = arith.constant 0 : index
    %c0_7 = arith.constant 0 : index
    %c0_8 = arith.constant 0 : index
    %4 = vector.load %arg3[%c0_5, %c0_6, %c0_7, %c0_8] : memref<1x1x8x10xf32, #tpu.memory_space<vmem>>, vector<1x1x8x10xf32>
    %5 = vector.shape_cast %4 : vector<1x1x8x10xf32> to vector<8x10xf32>
    %c0_9 = arith.constant 0 : index
    %c0_10 = arith.constant 0 : index
    %6 = vector.load %arg4[%c0_9, %c0_10] : memref<32x32xf32, #tpu.memory_space<vmem>>, vector<32x32xf32>
    %cst = arith.constant dense<0.000000e+00> : vector<8x32xf32>
    %7 = tpu.matmul %1, %6, %cst {dimension_numbers = #tpu.dot_dimension_numbers<[1], [0], [0], [1], [0, 0, 1, 1], [], []>} : vector<8x32xf32>, vector<32x32xf32>, vector<8x32xf32> -> vector<8x32xf32>
    %c0_11 = arith.constant 0 : index
    %c0_12 = arith.constant 0 : index
    %8 = vector.load %arg5[%c0_11, %c0_12] : memref<1x32xf32, #tpu.memory_space<vmem>>, vector<1x32xf32>
    %9 = vector.broadcast %8 : vector<1x32xf32> to vector<8x32xf32>
    %10 = arith.addf %7, %9 : vector<8x32xf32>
    %c0_13 = arith.constant 0 : index
    %c0_14 = arith.constant 0 : index
    %11 = vector.load %arg6[%c0_13, %c0_14] : memref<32x64xf32, #tpu.memory_space<vmem>>, vector<32x64xf32>
    %cst_15 = arith.constant dense<0.000000e+00> : vector<10x64xf32>
    %12 = tpu.matmul %3, %11, %cst_15 {dimension_numbers = #tpu.dot_dimension_numbers<[1], [0], [0], [1], [0, 0, 1, 1], [], []>} : vector<10x32xf32>, vector<32x64xf32>, vector<10x64xf32> -> vector<10x64xf32>
    %c0_16 = arith.constant 0 : index
    %c0_17 = arith.constant 0 : index
    %13 = vector.load %arg7[%c0_16, %c0_17] : memref<1x64xf32, #tpu.memory_space<vmem>>, vector<1x64xf32>
    %14 = vector.broadcast %13 : vector<1x64xf32> to vector<10x64xf32>
    %15 = arith.addf %12, %14 : vector<10x64xf32>
    %16 = vector.extract_strided_slice %15 {offsets = [0, 0], sizes = [10, 32], strides = [1, 1]} : vector<10x64xf32> to vector<10x32xf32>
    %17 = vector.extract_strided_slice %15 {offsets = [0, 32], sizes = [10, 32], strides = [1, 1]} : vector<10x64xf32> to vector<10x32xf32>
    %18 = vector.extract_strided_slice %10 {offsets = [0, 0], sizes = [8, 8], strides = [1, 1]} : vector<8x32xf32> to vector<8x8xf32>
    %19 = vector.extract_strided_slice %16 {offsets = [0, 0], sizes = [10, 8], strides = [1, 1]} : vector<10x32xf32> to vector<10x8xf32>
    %20 = vector.extract_strided_slice %17 {offsets = [0, 0], sizes = [10, 8], strides = [1, 1]} : vector<10x32xf32> to vector<10x8xf32>
    %cst_18 = arith.constant dense<0.000000e+00> : vector<8x10xf32>
    %21 = tpu.matmul %18, %19, %cst_18 {dimension_numbers = #tpu.dot_dimension_numbers<[1], [1], [0], [0], [0, 0, 1, 0], [], []>} : vector<8x8xf32>, vector<10x8xf32>, vector<8x10xf32> -> vector<8x10xf32>
    %cst_19 = arith.constant 0.353553385 : f32
    %22 = vector.broadcast %cst_19 : f32 to vector<8x10xf32>
    %23 = arith.mulf %21, %22 : vector<8x10xf32>
    %cst_20 = arith.constant 0.000000e+00 : f32
    %24 = vector.broadcast %cst_20 : f32 to vector<8x10xf32>
    %25 = arith.cmpf oeq, %5, %24 : vector<8x10xf32>
    %cst_21 = arith.constant -1.000000e+10 : f32
    %26 = vector.broadcast %cst_21 : f32 to vector<8x10xf32>
    %27 = arith.select %25, %26, %23 : vector<8x10xi1>, vector<8x10xf32>
    %cst_22 = arith.constant dense<0xFF800000> : vector<8xf32>
    %28 = vector.multi_reduction <maximumf>, %27, %cst_22 [1] : vector<8x10xf32> to vector<8xf32>
    %29 = vector.shape_cast %28 : vector<8xf32> to vector<8x1xf32>
    %30 = vector.broadcast %29 : vector<8x1xf32> to vector<8x10xf32>
    %31 = arith.subf %27, %30 : vector<8x10xf32>
    %32 = math.exp %31 : vector<8x10xf32>
    %cst_23 = arith.constant dense<0.000000e+00> : vector<8xf32>
    %33 = vector.multi_reduction <add>, %32, %cst_23 [1] : vector<8x10xf32> to vector<8xf32>
    %34 = vector.shape_cast %33 : vector<8xf32> to vector<8x1xf32>
    %35 = tpu.reciprocal %34 {approx = true} : vector<8x1xf32> -> vector<8x1xf32>
    %36 = vector.broadcast %35 : vector<8x1xf32> to vector<8x10xf32>
    %37 = arith.mulf %32, %36 : vector<8x10xf32>
    %c0_24 = arith.constant 0 : index
    %c0_25 = arith.constant 0 : index
    %c0_26 = arith.constant 0 : index
    %c0_27 = arith.constant 0 : index
    %38 = vector.load %arg13[%c0_24, %c0_25, %c0_26, %c0_27] : memref<1x4x8x10xf32, #tpu.memory_space<vmem>>, vector<1x1x8x10xf32>
    %39 = vector.shape_cast %38 : vector<1x1x8x10xf32> to vector<8x10xf32>
    %40 = vector.shape_cast %37 : vector<8x10xf32> to vector<1x1x8x10xf32>
    tpu.vector_store %arg13[%c0_24, %c0_25, %c0_26, %c0_27], %40 {strides = array<i32>} : memref<1x4x8x10xf32, #tpu.memory_space<vmem>>, vector<1x1x8x10xf32>,
    %cst_28 = arith.constant dense<0.000000e+00> : vector<8x8xf32>
    %41 = tpu.matmul %37, %20, %cst_28 {dimension_numbers = #tpu.dot_dimension_numbers<[1], [0], [0], [1], [0, 0, 1, 1], [], []>} : vector<8x10xf32>, vector<10x8xf32>, vector<8x8xf32> -> vector<8x8xf32>
    %42 = vector.extract_strided_slice %10 {offsets = [0, 8], sizes = [8, 8], strides = [1, 1]} : vector<8x32xf32> to vector<8x8xf32>
    %43 = vector.extract_strided_slice %16 {offsets = [0, 8], sizes = [10, 8], strides = [1, 1]} : vector<10x32xf32> to vector<10x8xf32>
    %44 = vector.extract_strided_slice %17 {offsets = [0, 8], sizes = [10, 8], strides = [1, 1]} : vector<10x32xf32> to vector<10x8xf32>
    %cst_29 = arith.constant dense<0.000000e+00> : vector<8x10xf32>
    %45 = tpu.matmul %42, %43, %cst_29 {dimension_numbers = #tpu.dot_dimension_numbers<[1], [1], [0], [0], [0, 0, 1, 0], [], []>} : vector<8x8xf32>, vector<10x8xf32>, vector<8x10xf32> -> vector<8x10xf32>
    %cst_30 = arith.constant 0.353553385 : f32
    %46 = vector.broadcast %cst_30 : f32 to vector<8x10xf32>
    %47 = arith.mulf %45, %46 : vector<8x10xf32>
    %cst_31 = arith.constant 0.000000e+00 : f32
    %48 = vector.broadcast %cst_31 : f32 to vector<8x10xf32>
    %49 = arith.cmpf oeq, %5, %48 : vector<8x10xf32>
    %cst_32 = arith.constant -1.000000e+10 : f32
    %50 = vector.broadcast %cst_32 : f32 to vector<8x10xf32>
    %51 = arith.select %49, %50, %47 : vector<8x10xi1>, vector<8x10xf32>
    %cst_33 = arith.constant dense<0xFF800000> : vector<8xf32>
    %52 = vector.multi_reduction <maximumf>, %51, %cst_33 [1] : vector<8x10xf32> to vector<8xf32>
    %53 = vector.shape_cast %52 : vector<8xf32> to vector<8x1xf32>
    %54 = vector.broadcast %53 : vector<8x1xf32> to vector<8x10xf32>
    %55 = arith.subf %51, %54 : vector<8x10xf32>
    %56 = math.exp %55 : vector<8x10xf32>
    %cst_34 = arith.constant dense<0.000000e+00> : vector<8xf32>
    %57 = vector.multi_reduction <add>, %56, %cst_34 [1] : vector<8x10xf32> to vector<8xf32>
    %58 = vector.shape_cast %57 : vector<8xf32> to vector<8x1xf32>
    %59 = tpu.reciprocal %58 {approx = true} : vector<8x1xf32> -> vector<8x1xf32>
    %60 = vector.broadcast %59 : vector<8x1xf32> to vector<8x10xf32>
    %61 = arith.mulf %56, %60 : vector<8x10xf32>
    %c0_35 = arith.constant 0 : index
    %c1 = arith.constant 1 : index
    %c0_36 = arith.constant 0 : index
    %c0_37 = arith.constant 0 : index
    %62 = vector.load %arg13[%c0_35, %c1, %c0_36, %c0_37] : memref<1x4x8x10xf32, #tpu.memory_space<vmem>>, vector<1x1x8x10xf32>
    %63 = vector.shape_cast %62 : vector<1x1x8x10xf32> to vector<8x10xf32>
    %64 = vector.shape_cast %61 : vector<8x10xf32> to vector<1x1x8x10xf32>
    tpu.vector_store %arg13[%c0_35, %c1, %c0_36, %c0_37], %64 {strides = array<i32>} : memref<1x4x8x10xf32, #tpu.memory_space<vmem>>, vector<1x1x8x10xf32>,
    %cst_38 = arith.constant dense<0.000000e+00> : vector<8x8xf32>
    %65 = tpu.matmul %61, %44, %cst_38 {dimension_numbers = #tpu.dot_dimension_numbers<[1], [0], [0], [1], [0, 0, 1, 1], [], []>} : vector<8x10xf32>, vector<10x8xf32>, vector<8x8xf32> -> vector<8x8xf32>
    %66 = vector.extract_strided_slice %10 {offsets = [0, 16], sizes = [8, 8], strides = [1, 1]} : vector<8x32xf32> to vector<8x8xf32>
    %67 = vector.extract_strided_slice %16 {offsets = [0, 16], sizes = [10, 8], strides = [1, 1]} : vector<10x32xf32> to vector<10x8xf32>
    %68 = vector.extract_strided_slice %17 {offsets = [0, 16], sizes = [10, 8], strides = [1, 1]} : vector<10x32xf32> to vector<10x8xf32>
    %cst_39 = arith.constant dense<0.000000e+00> : vector<8x10xf32>
    %69 = tpu.matmul %66, %67, %cst_39 {dimension_numbers = #tpu.dot_dimension_numbers<[1], [1], [0], [0], [0, 0, 1, 0], [], []>} : vector<8x8xf32>, vector<10x8xf32>, vector<8x10xf32> -> vector<8x10xf32>
    %cst_40 = arith.constant 0.353553385 : f32
    %70 = vector.broadcast %cst_40 : f32 to vector<8x10xf32>
    %71 = arith.mulf %69, %70 : vector<8x10xf32>
    %cst_41 = arith.constant 0.000000e+00 : f32
    %72 = vector.broadcast %cst_41 : f32 to vector<8x10xf32>
    %73 = arith.cmpf oeq, %5, %72 : vector<8x10xf32>
    %cst_42 = arith.constant -1.000000e+10 : f32
    %74 = vector.broadcast %cst_42 : f32 to vector<8x10xf32>
    %75 = arith.select %73, %74, %71 : vector<8x10xi1>, vector<8x10xf32>
    %cst_43 = arith.constant dense<0xFF800000> : vector<8xf32>
    %76 = vector.multi_reduction <maximumf>, %75, %cst_43 [1] : vector<8x10xf32> to vector<8xf32>
    %77 = vector.shape_cast %76 : vector<8xf32> to vector<8x1xf32>
    %78 = vector.broadcast %77 : vector<8x1xf32> to vector<8x10xf32>
    %79 = arith.subf %75, %78 : vector<8x10xf32>
    %80 = math.exp %79 : vector<8x10xf32>
    %cst_44 = arith.constant dense<0.000000e+00> : vector<8xf32>
    %81 = vector.multi_reduction <add>, %80, %cst_44 [1] : vector<8x10xf32> to vector<8xf32>
    %82 = vector.shape_cast %81 : vector<8xf32> to vector<8x1xf32>
    %83 = tpu.reciprocal %82 {approx = true} : vector<8x1xf32> -> vector<8x1xf32>
    %84 = vector.broadcast %83 : vector<8x1xf32> to vector<8x10xf32>
    %85 = arith.mulf %80, %84 : vector<8x10xf32>
    %c0_45 = arith.constant 0 : index
    %c2 = arith.constant 2 : index
    %c0_46 = arith.constant 0 : index
    %c0_47 = arith.constant 0 : index
    %86 = vector.load %arg13[%c0_45, %c2, %c0_46, %c0_47] : memref<1x4x8x10xf32, #tpu.memory_space<vmem>>, vector<1x1x8x10xf32>
    %87 = vector.shape_cast %86 : vector<1x1x8x10xf32> to vector<8x10xf32>
    %88 = vector.shape_cast %85 : vector<8x10xf32> to vector<1x1x8x10xf32>
    tpu.vector_store %arg13[%c0_45, %c2, %c0_46, %c0_47], %88 {strides = array<i32>} : memref<1x4x8x10xf32, #tpu.memory_space<vmem>>, vector<1x1x8x10xf32>,
    %cst_48 = arith.constant dense<0.000000e+00> : vector<8x8xf32>
    %89 = tpu.matmul %85, %68, %cst_48 {dimension_numbers = #tpu.dot_dimension_numbers<[1], [0], [0], [1], [0, 0, 1, 1], [], []>} : vector<8x10xf32>, vector<10x8xf32>, vector<8x8xf32> -> vector<8x8xf32>
    %90 = vector.extract_strided_slice %10 {offsets = [0, 24], sizes = [8, 8], strides = [1, 1]} : vector<8x32xf32> to vector<8x8xf32>
    %91 = vector.extract_strided_slice %16 {offsets = [0, 24], sizes = [10, 8], strides = [1, 1]} : vector<10x32xf32> to vector<10x8xf32>
    %92 = vector.extract_strided_slice %17 {offsets = [0, 24], sizes = [10, 8], strides = [1, 1]} : vector<10x32xf32> to vector<10x8xf32>
    %cst_49 = arith.constant dense<0.000000e+00> : vector<8x10xf32>
    %93 = tpu.matmul %90, %91, %cst_49 {dimension_numbers = #tpu.dot_dimension_numbers<[1], [1], [0], [0], [0, 0, 1, 0], [], []>} : vector<8x8xf32>, vector<10x8xf32>, vector<8x10xf32> -> vector<8x10xf32>
    %cst_50 = arith.constant 0.353553385 : f32
    %94 = vector.broadcast %cst_50 : f32 to vector<8x10xf32>
    %95 = arith.mulf %93, %94 : vector<8x10xf32>
    %cst_51 = arith.constant 0.000000e+00 : f32
    %96 = vector.broadcast %cst_51 : f32 to vector<8x10xf32>
    %97 = arith.cmpf oeq, %5, %96 : vector<8x10xf32>
    %cst_52 = arith.constant -1.000000e+10 : f32
    %98 = vector.broadcast %cst_52 : f32 to vector<8x10xf32>
    %99 = arith.select %97, %98, %95 : vector<8x10xi1>, vector<8x10xf32>
    %cst_53 = arith.constant dense<0xFF800000> : vector<8xf32>
    %100 = vector.multi_reduction <maximumf>, %99, %cst_53 [1] : vector<8x10xf32> to vector<8xf32>
    %101 = vector.shape_cast %100 : vector<8xf32> to vector<8x1xf32>
    %102 = vector.broadcast %101 : vector<8x1xf32> to vector<8x10xf32>
    %103 = arith.subf %99, %102 : vector<8x10xf32>
    %104 = math.exp %103 : vector<8x10xf32>
    %cst_54 = arith.constant dense<0.000000e+00> : vector<8xf32>
    %105 = vector.multi_reduction <add>, %104, %cst_54 [1] : vector<8x10xf32> to vector<8xf32>
    %106 = vector.shape_cast %105 : vector<8xf32> to vector<8x1xf32>
    %107 = tpu.reciprocal %106 {approx = true} : vector<8x1xf32> -> vector<8x1xf32>
    %108 = vector.broadcast %107 : vector<8x1xf32> to vector<8x10xf32>
    %109 = arith.mulf %104, %108 : vector<8x10xf32>
    %c0_55 = arith.constant 0 : index
    %c3 = arith.constant 3 : index
    %c0_56 = arith.constant 0 : index
    %c0_57 = arith.constant 0 : index
    %110 = vector.load %arg13[%c0_55, %c3, %c0_56, %c0_57] : memref<1x4x8x10xf32, #tpu.memory_space<vmem>>, vector<1x1x8x10xf32>
    %111 = vector.shape_cast %110 : vector<1x1x8x10xf32> to vector<8x10xf32>
    %112 = vector.shape_cast %109 : vector<8x10xf32> to vector<1x1x8x10xf32>
    tpu.vector_store %arg13[%c0_55, %c3, %c0_56, %c0_57], %112 {strides = array<i32>} : memref<1x4x8x10xf32, #tpu.memory_space<vmem>>, vector<1x1x8x10xf32>,
    %cst_58 = arith.constant dense<0.000000e+00> : vector<8x8xf32>
    %113 = tpu.matmul %109, %92, %cst_58 {dimension_numbers = #tpu.dot_dimension_numbers<[1], [0], [0], [1], [0, 0, 1, 1], [], []>} : vector<8x10xf32>, vector<10x8xf32>, vector<8x8xf32> -> vector<8x8xf32>
    %114 = tpu.concatenate %41, %65, %89, %113 in 1 : vector<8x8xf32>, vector<8x8xf32>, vector<8x8xf32>, vector<8x8xf32> -> vector<8x32xf32>
    %c0_59 = arith.constant 0 : index
    %c0_60 = arith.constant 0 : index
    %115 = vector.load %arg8[%c0_59, %c0_60] : memref<32x32xf32, #tpu.memory_space<vmem>>, vector<32x32xf32>
    %cst_61 = arith.constant dense<0.000000e+00> : vector<8x32xf32>
    %116 = tpu.matmul %114, %115, %cst_61 {dimension_numbers = #tpu.dot_dimension_numbers<[1], [0], [0], [1], [0, 0, 1, 1], [], []>} : vector<8x32xf32>, vector<32x32xf32>, vector<8x32xf32> -> vector<8x32xf32>
    %c0_62 = arith.constant 0 : index
    %c0_63 = arith.constant 0 : index
    %117 = vector.load %arg9[%c0_62, %c0_63] : memref<1x32xf32, #tpu.memory_space<vmem>>, vector<1x32xf32>
    %118 = vector.broadcast %117 : vector<1x32xf32> to vector<8x32xf32>
    %119 = arith.addf %116, %118 : vector<8x32xf32>
    %120 = arith.addf %1, %119 : vector<8x32xf32>
    %c0_64 = arith.constant 0 : index
    %c0_65 = arith.constant 0 : index
    %121 = vector.load %arg10[%c0_64, %c0_65] : memref<1x32xf32, #tpu.memory_space<vmem>>, vector<1x32xf32>
    %c0_66 = arith.constant 0 : index
    %c0_67 = arith.constant 0 : index
    %122 = vector.load %arg11[%c0_66, %c0_67] : memref<1x32xf32, #tpu.memory_space<vmem>>, vector<1x32xf32>
    %cst_68 = arith.constant dense<0.000000e+00> : vector<8xf32>
    %123 = vector.multi_reduction <add>, %120, %cst_68 [1] : vector<8x32xf32> to vector<8xf32>
    %124 = vector.shape_cast %123 : vector<8xf32> to vector<8x1xf32>
    %cst_69 = arith.constant 3.200000e+01 : f32
    %125 = vector.broadcast %cst_69 : f32 to vector<8x1xf32>
    %126 = arith.divf %124, %125 : vector<8x1xf32>
    %127 = vector.broadcast %126 : vector<8x1xf32> to vector<8x32xf32>
    %128 = arith.subf %120, %127 : vector<8x32xf32>
    %129 = arith.mulf %128, %128 : vector<8x32xf32>
    %cst_70 = arith.constant dense<0.000000e+00> : vector<8xf32>
    %130 = vector.multi_reduction <add>, %129, %cst_70 [1] : vector<8x32xf32> to vector<8xf32>
    %131 = vector.shape_cast %130 : vector<8xf32> to vector<8x1xf32>
    %cst_71 = arith.constant 3.200000e+01 : f32
    %132 = vector.broadcast %cst_71 : f32 to vector<8x1xf32>
    %133 = arith.divf %131, %132 : vector<8x1xf32>
    %134 = vector.broadcast %126 : vector<8x1xf32> to vector<8x32xf32>
    %135 = arith.subf %120, %134 : vector<8x32xf32>
    %cst_72 = arith.constant 9.99999974E-6 : f32
    %136 = vector.broadcast %cst_72 : f32 to vector<8x1xf32>
    %137 = arith.addf %133, %136 : vector<8x1xf32>
    %138 = math.rsqrt %137 : vector<8x1xf32>
    %139 = vector.broadcast %138 : vector<8x1xf32> to vector<8x32xf32>
    %140 = arith.mulf %135, %139 : vector<8x32xf32>
    %141 = vector.broadcast %121 : vector<1x32xf32> to vector<8x32xf32>
    %142 = arith.mulf %140, %141 : vector<8x32xf32>
    %143 = vector.broadcast %122 : vector<1x32xf32> to vector<8x32xf32>
    %144 = arith.addf %142, %143 : vector<8x32xf32>
    %c0_73 = arith.constant 0 : index
    %c0_74 = arith.constant 0 : index
    %c0_75 = arith.constant 0 : index
    %145 = vector.load %arg12[%c0_73, %c0_74, %c0_75] : memref<1x8x32xf32, #tpu.memory_space<vmem>>, vector<1x8x32xf32>
    %146 = vector.shape_cast %145 : vector<1x8x32xf32> to vector<8x32xf32>
    %147 = vector.shape_cast %144 : vector<8x32xf32> to vector<1x8x32xf32>
    tpu.vector_store %arg12[%c0_73, %c0_74, %c0_75], %147 {strides = array<i32>} : memref<1x8x32xf32, #tpu.memory_space<vmem>>, vector<1x8x32xf32>,
    return
  }
  func.func @transform_0(%arg0: i32) -> (i32, i32, i32) {
    %c0_i32 = arith.constant 0 : i32
    %c0_i32_0 = arith.constant 0 : i32
    %c0_i32_1 = arith.constant 0 : i32
    return %arg0, %c0_i32, %c0_i32_0 : i32, i32, i32
  }
  func.func @transform_1(%arg0: i32) -> (i32, i32, i32) {
    %c0_i32 = arith.constant 0 : i32
    %c0_i32_0 = arith.constant 0 : i32
    %c0_i32_1 = arith.constant 0 : i32
    return %arg0, %c0_i32, %c0_i32_0 : i32, i32, i32
  }
  func.func @transform_2(%arg0: i32) -> (i32, i32, i32, i32) {
    %c0_i32 = arith.constant 0 : i32
    %c0_i32_0 = arith.constant 0 : i32
    %c0_i32_1 = arith.constant 0 : i32
    %c0_i32_2 = arith.constant 0 : i32
    return %arg0, %c0_i32, %c0_i32_0, %c0_i32_1 : i32, i32, i32, i32
  }
  func.func @transform_3(%arg0: i32) -> (i32, i32) {
    %c0_i32 = arith.constant 0 : i32
    %c0_i32_0 = arith.constant 0 : i32
    %c0_i32_1 = arith.constant 0 : i32
    return %c0_i32, %c0_i32_0 : i32, i32
  }
  func.func @transform_4(%arg0: i32) -> (i32, i32) {
    %c0_i32 = arith.constant 0 : i32
    %c0_i32_0 = arith.constant 0 : i32
    %c0_i32_1 = arith.constant 0 : i32
    return %c0_i32, %c0_i32_0 : i32, i32
  }
  func.func @transform_5(%arg0: i32) -> (i32, i32) {
    %c0_i32 = arith.constant 0 : i32
    %c0_i32_0 = arith.constant 0 : i32
    %c0_i32_1 = arith.constant 0 : i32
    return %c0_i32, %c0_i32_0 : i32, i32
  }
  func.func @transform_6(%arg0: i32) -> (i32, i32) {
    %c0_i32 = arith.constant 0 : i32
    %c0_i32_0 = arith.constant 0 : i32
    %c0_i32_1 = arith.constant 0 : i32
    return %c0_i32, %c0_i32_0 : i32, i32
  }
  func.func @transform_7(%arg0: i32) -> (i32, i32) {
    %c0_i32 = arith.constant 0 : i32
    %c0_i32_0 = arith.constant 0 : i32
    %c0_i32_1 = arith.constant 0 : i32
    return %c0_i32, %c0_i32_0 : i32, i32
  }
  func.func @transform_8(%arg0: i32) -> (i32, i32) {
    %c0_i32 = arith.constant 0 : i32
    %c0_i32_0 = arith.constant 0 : i32
    %c0_i32_1 = arith.constant 0 : i32
    return %c0_i32, %c0_i32_0 : i32, i32
  }
  func.func @transform_9(%arg0: i32) -> (i32, i32) {
    %c0_i32 = arith.constant 0 : i32
    %c0_i32_0 = arith.constant 0 : i32
    %c0_i32_1 = arith.constant 0 : i32
    return %c0_i32, %c0_i32_0 : i32, i32
  }
  func.func @transform_10(%arg0: i32) -> (i32, i32) {
    %c0_i32 = arith.constant 0 : i32
    %c0_i32_0 = arith.constant 0 : i32
    %c0_i32_1 = arith.constant 0 : i32
    return %c0_i32, %c0_i32_0 : i32, i32
  }
  func.func @transform_11(%arg0: i32) -> (i32, i32, i32) {
    %c0_i32 = arith.constant 0 : i32
    %c0_i32_0 = arith.constant 0 : i32
    %c0_i32_1 = arith.constant 0 : i32
    return %arg0, %c0_i32, %c0_i32_0 : i32, i32, i32
  }
  func.func @transform_12(%arg0: i32) -> (i32, i32, i32, i32) {
    %c0_i32 = arith.constant 0 : i32
    %c0_i32_0 = arith.constant 0 : i32
    %c0_i32_1 = arith.constant 0 : i32
    %c0_i32_2 = arith.constant 0 : i32
    return %arg0, %c0_i32, %c0_i32_0, %c0_i32_1 : i32, i32, i32, i32
  }
}

module attributes {stable_mosaic.version = 11 : i64} {
  func.func @_out_proj_kernel(%arg0: i32, %arg1: memref<1x8x32xf32, #tpu.memory_space<vmem>>, %arg2: memref<32x50xf32, #tpu.memory_space<vmem>>, %arg3: memref<1x50xf32, #tpu.memory_space<vmem>>, %arg4: memref<1x8x50xf32, #tpu.memory_space<vmem>>) attributes {dimension_semantics = [#tpu.dimension_semantics<parallel>], iteration_bounds = array<i64: 2>, scalar_prefetch = 0 : i64, scratch_operands = 0 : i64, tpu.core_type = #tpu.core_type<tc>, window_params = [{transform_indices = @transform_0, window_bounds = array<i64: 1, 8, 32>}, {pipeline_mode = #tpu.pipeline_mode<synchronous>, transform_indices = @transform_1, window_bounds = array<i64: 32, 50>}, {pipeline_mode = #tpu.pipeline_mode<synchronous>, transform_indices = @transform_2, window_bounds = array<i64: 1, 50>}, {transform_indices = @transform_3, window_bounds = array<i64: 1, 8, 50>}]} {
    %c0 = arith.constant 0 : index
    %c0_0 = arith.constant 0 : index
    %c0_1 = arith.constant 0 : index
    %0 = vector.load %arg1[%c0, %c0_0, %c0_1] : memref<1x8x32xf32, #tpu.memory_space<vmem>>, vector<1x8x32xf32>
    %1 = vector.shape_cast %0 : vector<1x8x32xf32> to vector<8x32xf32>
    %c0_2 = arith.constant 0 : index
    %c0_3 = arith.constant 0 : index
    %2 = vector.load %arg2[%c0_2, %c0_3] : memref<32x50xf32, #tpu.memory_space<vmem>>, vector<32x50xf32>
    %cst = arith.constant dense<0.000000e+00> : vector<8x50xf32>
    %3 = tpu.matmul %1, %2, %cst {dimension_numbers = #tpu.dot_dimension_numbers<[1], [0], [0], [1], [0, 0, 1, 1], [], []>} : vector<8x32xf32>, vector<32x50xf32>, vector<8x50xf32> -> vector<8x50xf32>
    %c0_4 = arith.constant 0 : index
    %c0_5 = arith.constant 0 : index
    %4 = vector.load %arg3[%c0_4, %c0_5] : memref<1x50xf32, #tpu.memory_space<vmem>>, vector<1x50xf32>
    %5 = vector.broadcast %4 : vector<1x50xf32> to vector<8x50xf32>
    %6 = arith.addf %3, %5 : vector<8x50xf32>
    %c0_6 = arith.constant 0 : index
    %c0_7 = arith.constant 0 : index
    %c0_8 = arith.constant 0 : index
    %7 = vector.load %arg4[%c0_6, %c0_7, %c0_8] : memref<1x8x50xf32, #tpu.memory_space<vmem>>, vector<1x8x50xf32>
    %8 = vector.shape_cast %7 : vector<1x8x50xf32> to vector<8x50xf32>
    %9 = vector.shape_cast %6 : vector<8x50xf32> to vector<1x8x50xf32>
    tpu.vector_store %arg4[%c0_6, %c0_7, %c0_8], %9 {strides = array<i32>} : memref<1x8x50xf32, #tpu.memory_space<vmem>>, vector<1x8x50xf32>,
    return
  }
  func.func @transform_0(%arg0: i32) -> (i32, i32, i32) {
    %c0_i32 = arith.constant 0 : i32
    %c0_i32_0 = arith.constant 0 : i32
    %c0_i32_1 = arith.constant 0 : i32
    return %arg0, %c0_i32, %c0_i32_0 : i32, i32, i32
  }
  func.func @transform_1(%arg0: i32) -> (i32, i32) {
    %c0_i32 = arith.constant 0 : i32
    %c0_i32_0 = arith.constant 0 : i32
    %c0_i32_1 = arith.constant 0 : i32
    return %c0_i32, %c0_i32_0 : i32, i32
  }
  func.func @transform_2(%arg0: i32) -> (i32, i32) {
    %c0_i32 = arith.constant 0 : i32
    %c0_i32_0 = arith.constant 0 : i32
    %c0_i32_1 = arith.constant 0 : i32
    return %c0_i32, %c0_i32_0 : i32, i32
  }
  func.func @transform_3(%arg0: i32) -> (i32, i32, i32) {
    %c0_i32 = arith.constant 0 : i32
    %c0_i32_0 = arith.constant 0 : i32
    %c0_i32_1 = arith.constant 0 : i32
    return %arg0, %c0_i32, %c0_i32_0 : i32, i32, i32
  }
}

</mosaic_0001>

<llo_original>
// kernel: decoder_forward.9
$region0: #{decoder_forward.9}
  #allocation0 [shape = 'u32[]', space=smem, size = 0x4, offset = 0x4, fixed_abs, tag = 'smem constant byte address 0x4 - core index']
  #allocation1 [shape = 'u32[72,128]{1,0:T(1,128)}', space=vmem, size = 0x9000, scoped, tag = 'internal scratch']
  %s0 = inlined_call_operand.vmem [shape: f32[2,8,32], index: 0, kind: input, shape index: {}]
  %s1 = inlined_call_operand.vmem [shape: f32[32,64], index: 1, kind: input, shape index: {}]
  %s2 = inlined_call_operand.vmem [shape: f32[1,64], index: 2, kind: input, shape index: {}]
  %s3 = inlined_call_operand.vmem [shape: f32[64,32], index: 3, kind: input, shape index: {}]
  %s4 = inlined_call_operand.vmem [shape: f32[1,32], index: 4, kind: input, shape index: {}]
  %s5 = inlined_call_operand.vmem [shape: f32[1,32], index: 5, kind: input, shape index: {}]
  %s6 = inlined_call_operand.vmem [shape: f32[1,32], index: 6, kind: input, shape index: {}]
  %s7 = inlined_call_operand.vmem [shape: f32[2,8,32], index: 7, kind: output, shape index: {}]
  %s8 = sld [smem:[#allocation0]]
  $region61: #{decoder_forward.9} parent=0
    _
  %s10 = ssub.s32 1, %s8
  %s11 = scalar_select 0, %s10, %s8
  loop: start=0, step=1, limit=4
  $region2: #{decoder_forward.9} parent=0 // loop_pre_header
    _
  $region3: #{decoder_forward.9} parent=0 // loop_header
    %s13 = sphi 0, %s17
    %p14 = scmp.ge.s32.totalorder %s13, 4
    %s23 = sphi 0, %s25
    %s26 = sphi 0, %s23
    %s27 = sphi 0, %s26
    %s43 = sphi 0, %s27
    %s47 = sphi 0, %s47
    %s49 = sphi 0, %s47
    %s50 = sphi 0, %s49
    %s64 = sphi 0, %s50
    %s68 = sphi 0, %s68
    %s70 = sphi 0, %s68
    %s71 = sphi 0, %s70
    %s85 = sphi 0, %s71
    %s89 = sphi 0, %s89
    %s91 = sphi 0, %s89
    %s92 = sphi 0, %s91
    %s106 = sphi 0, %s92
    %s110 = sphi 0, %s110
    %s112 = sphi 0, %s110
    %s113 = sphi 0, %s112
    %s127 = sphi 0, %s113
    %s131 = sphi 0, %s131
    %s133 = sphi 0, %s131
    %s134 = sphi 0, %s133
    %s148 = sphi 0, %s134
    %s152 = sphi 0, %s152
    %s154 = sphi 0, %s152
    %s155 = sphi 0, %s154
    %s169 = sphi 0, %s155
    %s175 = sphi 0, %s177
    %s178 = sphi 0, %s175
    %s179 = sphi 0, %s178
    %s195 = sphi 0, %s179
  $region4: #{decoder_forward.9} parent=0 // loop_header_branch
    %16 = sbr.rel (%p14) target = $region8
  $region5: #{decoder_forward.9} parent=0 // loop_body
    %s18 = ssub.s32 %s13, 1
    %s19 = ssub.s32 %s13, 2
    %s20 = sadd.s32 %s13, 1
    %s21 = ssub.s32 %s13, %s20
    %p22 = scmp.eq.s32.totalorder %s21, 0
    %s24 = sadd.s32 %s23, 1
    %s25 = scalar_select %p22, %s23, %s24
    %p28 = pneg %p22
    %p29 = scmp.eq.s32.totalorder %s13, 1
    %p30 = por %p28, %p29
    %p31 = scmp.ne.s32.totalorder %s23, %s26
    %p32 = scmp.eq.s32.totalorder %s13, 0
    %p33 = por %p31, %p32
    %p34 = scmp.ne.s32.totalorder %s23, %s26
    %p35 = scmp.eq.s32.totalorder %s18, 1
    %p36 = por %p34, %p35
    %p37 = scmp.ne.s32.totalorder %s26, %s27
    %p38 = scmp.eq.s32.totalorder %s18, 0
    %p39 = por %p37, %p38
    %p40 = scmp.ne.s32.totalorder %s26, %s27
    %p41 = scmp.eq.s32.totalorder %s19, 1
    %p42 = por %p40, %p41
    %p44 = scmp.ne.s32.totalorder %s27, %s43
    %p45 = scmp.eq.s32.totalorder %s19, 0
    %p46 = por %p44, %p45
    %s48 = sadd.s32 %s47, 1
    %p51 = scmp.eq.s32.totalorder %s13, 1
    %p52 = scmp.ne.s32.totalorder %s47, %s49
    %p53 = scmp.eq.s32.totalorder %s13, 0
    %p54 = por %p52, %p53
    %p55 = scmp.ne.s32.totalorder %s47, %s49
    %p56 = scmp.eq.s32.totalorder %s18, 1
    %p57 = por %p55, %p56
    %p58 = scmp.ne.s32.totalorder %s49, %s50
    %p59 = scmp.eq.s32.totalorder %s18, 0
    %p60 = por %p58, %p59
    %p61 = scmp.ne.s32.totalorder %s49, %s50
    %p62 = scmp.eq.s32.totalorder %s19, 1
    %p63 = por %p61, %p62
    %p65 = scmp.ne.s32.totalorder %s50, %s64
    %p66 = scmp.eq.s32.totalorder %s19, 0
    %p67 = por %p65, %p66
    %s69 = sadd.s32 %s68, 1
    %p72 = scmp.eq.s32.totalorder %s13, 1
    %p73 = scmp.ne.s32.totalorder %s68, %s70
    %p74 = scmp.eq.s32.totalorder %s13, 0
    %p75 = por %p73, %p74
    %p76 = scmp.ne.s32.totalorder %s68, %s70
    %p77 = scmp.eq.s32.totalorder %s18, 1
    %p78 = por %p76, %p77
    %p79 = scmp.ne.s32.totalorder %s70, %s71
    %p80 = scmp.eq.s32.totalorder %s18, 0
    %p81 = por %p79, %p80
    %p82 = scmp.ne.s32.totalorder %s70, %s71
    %p83 = scmp.eq.s32.totalorder %s19, 1
    %p84 = por %p82, %p83
    %p86 = scmp.ne.s32.totalorder %s71, %s85
    %p87 = scmp.eq.s32.totalorder %s19, 0
    %p88 = por %p86, %p87
    %s90 = sadd.s32 %s89, 1
    %p93 = scmp.eq.s32.totalorder %s13, 1
    %p94 = scmp.ne.s32.totalorder %s89, %s91
    %p95 = scmp.eq.s32.totalorder %s13, 0
    %p96 = por %p94, %p95
    %p97 = scmp.ne.s32.totalorder %s89, %s91
    %p98 = scmp.eq.s32.totalorder %s18, 1
    %p99 = por %p97, %p98
    %p100 = scmp.ne.s32.totalorder %s91, %s92
    %p101 = scmp.eq.s32.totalorder %s18, 0
    %p102 = por %p100, %p101
    %p103 = scmp.ne.s32.totalorder %s91, %s92
    %p104 = scmp.eq.s32.totalorder %s19, 1
    %p105 = por %p103, %p104
    %p107 = scmp.ne.s32.totalorder %s92, %s106
    %p108 = scmp.eq.s32.totalorder %s19, 0
    %p109 = por %p107, %p108
    %s111 = sadd.s32 %s110, 1
    %p114 = scmp.eq.s32.totalorder %s13, 1
    %p115 = scmp.ne.s32.totalorder %s110, %s112
    %p116 = scmp.eq.s32.totalorder %s13, 0
    %p117 = por %p115, %p116
    %p118 = scmp.ne.s32.totalorder %s110, %s112
    %p119 = scmp.eq.s32.totalorder %s18, 1
    %p120 = por %p118, %p119
    %p121 = scmp.ne.s32.totalorder %s112, %s113
    %p122 = scmp.eq.s32.totalorder %s18, 0
    %p123 = por %p121, %p122
    %p124 = scmp.ne.s32.totalorder %s112, %s113
    %p125 = scmp.eq.s32.totalorder %s19, 1
    %p126 = por %p124, %p125
    %p128 = scmp.ne.s32.totalorder %s113, %s127
    %p129 = scmp.eq.s32.totalorder %s19, 0
    %p130 = por %p128, %p129
    %s132 = sadd.s32 %s131, 1
    %p135 = scmp.eq.s32.totalorder %s13, 1
    %p136 = scmp.ne.s32.totalorder %s131, %s133
    %p137 = scmp.eq.s32.totalorder %s13, 0
    %p138 = por %p136, %p137
    %p139 = scmp.ne.s32.totalorder %s131, %s133
    %p140 = scmp.eq.s32.totalorder %s18, 1
    %p141 = por %p139, %p140
    %p142 = scmp.ne.s32.totalorder %s133, %s134
    %p143 = scmp.eq.s32.totalorder %s18, 0
    %p144 = por %p142, %p143
    %p145 = scmp.ne.s32.totalorder %s133, %s134
    %p146 = scmp.eq.s32.totalorder %s19, 1
    %p147 = por %p145, %p146
    %p149 = scmp.ne.s32.totalorder %s134, %s148
    %p150 = scmp.eq.s32.totalorder %s19, 0
    %p151 = por %p149, %p150
    %s153 = sadd.s32 %s152, 1
    %p156 = scmp.eq.s32.totalorder %s13, 1
    %p157 = scmp.ne.s32.totalorder %s152, %s154
    %p158 = scmp.eq.s32.totalorder %s13, 0
    %p159 = por %p157, %p158
    %p160 = scmp.ne.s32.totalorder %s152, %s154
    %p161 = scmp.eq.s32.totalorder %s18, 1
    %p162 = por %p160, %p161
    %p163 = scmp.ne.s32.totalorder %s154, %s155
    %p164 = scmp.eq.s32.totalorder %s18, 0
    %p165 = por %p163, %p164
    %p166 = scmp.ne.s32.totalorder %s154, %s155
    %p167 = scmp.eq.s32.totalorder %s19, 1
    %p168 = por %p166, %p167
    %p170 = scmp.ne.s32.totalorder %s155, %s169
    %p171 = scmp.eq.s32.totalorder %s19, 0
    %p172 = por %p170, %p171
    %s173 = ssub.s32 %s13, %s20
    %p174 = scmp.eq.s32.totalorder %s173, 0
    %s176 = sadd.s32 %s175, 1
    %s177 = scalar_select %p174, %s175, %s176
    %p180 = pneg %p174
    %p181 = scmp.eq.s32.totalorder %s13, 1
    %p182 = por %p180, %p181
    %p183 = scmp.ne.s32.totalorder %s175, %s178
    %p184 = scmp.eq.s32.totalorder %s13, 0
    %p185 = por %p183, %p184
    %p186 = scmp.ne.s32.totalorder %s175, %s178
    %p187 = scmp.eq.s32.totalorder %s18, 1
    %p188 = por %p186, %p187
    %p189 = scmp.ne.s32.totalorder %s178, %s179
    %p190 = scmp.eq.s32.totalorder %s18, 0
    %p191 = por %p189, %p190
    %p192 = scmp.ne.s32.totalorder %s178, %s179
    %p193 = scmp.eq.s32.totalorder %s19, 1
    %p194 = por %p192, %p193
    %p196 = scmp.ne.s32.totalorder %s179, %s195
    %p197 = scmp.eq.s32.totalorder %s19, 0
    %p198 = por %p196, %p197
    %p199 = scmp.le.s32.totalorder 1, %s13
    %p200 = scmp.lt.s32.totalorder %s13, 3
    %p201 = pnand %p199, %p200
    %p202 = pneg %p201
    // Predicated region
    $region9: #{decoder_forward.9} parent=5 // pred_check
      _
    $region10: #{decoder_forward.9} parent=5 // pred_check_branch
      %204 = sbr.rel (%p201) target = $region12
    $region11: #{decoder_forward.9} parent=5 // pred_region
      %s205 = ssub.s32 %s13, 1
      // Predicated region
      $region13: #{decoder_forward.9} parent=11 // pred_check
        %p206 = pneg %p60
      $region14: #{decoder_forward.9} parent=11 // pred_check_branch
        %208 = sbr.rel (%p206) target = $region16
      $region15: #{decoder_forward.9} parent=11 // pred_region
        _
      $region16: #{decoder_forward.9} parent=11 // pred_fallthru
        _
      // Predicated region
      $region17: #{decoder_forward.9} parent=11 // pred_check
        %p209 = pneg %p81
      $region18: #{decoder_forward.9} parent=11 // pred_check_branch
        %211 = sbr.rel (%p209) target = $region20
      $region19: #{decoder_forward.9} parent=11 // pred_region
        _
      $region20: #{decoder_forward.9} parent=11 // pred_fallthru
        _
      // Predicated region
      $region21: #{decoder_forward.9} parent=11 // pred_check
        %p212 = pneg %p102
      $region22: #{decoder_forward.9} parent=11 // pred_check_branch
        %214 = sbr.rel (%p212) target = $region24
      $region23: #{decoder_forward.9} parent=11 // pred_region
        _
      $region24: #{decoder_forward.9} parent=11 // pred_fallthru
        _
      // Predicated region
      $region25: #{decoder_forward.9} parent=11 // pred_check
        %p215 = pneg %p123
      $region26: #{decoder_forward.9} parent=11 // pred_check_branch
        %217 = sbr.rel (%p215) target = $region28
      $region27: #{decoder_forward.9} parent=11 // pred_region
        _
      $region28: #{decoder_forward.9} parent=11 // pred_fallthru
        _
      // Predicated region
      $region29: #{decoder_forward.9} parent=11 // pred_check
        %p218 = pneg %p144
      $region30: #{decoder_forward.9} parent=11 // pred_check_branch
        %220 = sbr.rel (%p218) target = $region32
      $region31: #{decoder_forward.9} parent=11 // pred_region
        _
      $region32: #{decoder_forward.9} parent=11 // pred_fallthru
        _
      // Predicated region
      $region33: #{decoder_forward.9} parent=11 // pred_check
        %p221 = pneg %p165
      $region34: #{decoder_forward.9} parent=11 // pred_check_branch
        %223 = sbr.rel (%p221) target = $region36
      $region35: #{decoder_forward.9} parent=11 // pred_region
        _
      $region36: #{decoder_forward.9} parent=11 // pred_fallthru
        _
    $region12: #{decoder_forward.9} parent=5 // pred_fallthru
      _
    %p224 = scmp.lt.s32.totalorder %s13, 2
    // Predicated region
    $region37: #{decoder_forward.9} parent=5 // pred_check
      %p225 = pneg %p224
    $region38: #{decoder_forward.9} parent=5 // pred_check_branch
      %227 = sbr.rel (%p225) target = $region40
    $region39: #{decoder_forward.9} parent=5 // pred_region
      // Predicated region
      $region41: #{decoder_forward.9} parent=39 // pred_check
        %p228 = pneg %p33
      $region42: #{decoder_forward.9} parent=39 // pred_check_branch
        %230 = sbr.rel (%p228) target = $region44
      $region43: #{decoder_forward.9} parent=39 // pred_region
        %p231 = scmp.lt.s32.totalorder %s13, 1
        %s232 = scalar_select %p231, %s13, 1
        %s233 = smul.addr %s232, 8
        %s234 = scalar_lea.vmem %s0, %s233
      $region44: #{decoder_forward.9} parent=39 // pred_fallthru
        _
    $region40: #{decoder_forward.9} parent=5 // pred_fallthru
      _
    %p235 = scmp.le.s32.totalorder 1, %s13
    %p236 = scmp.lt.s32.totalorder %s13, 3
    %p237 = pnand %p235, %p236
    %p238 = pneg %p237
    // Predicated region
    $region45: #{decoder_forward.9} parent=5 // pred_check
      _
    $region46: #{decoder_forward.9} parent=5 // pred_check_branch
      %240 = sbr.rel (%p237) target = $region48
    $region47: #{decoder_forward.9} parent=5 // pred_region
      %s241 = ssub.s32 %s13, 1
      %p242 = scmp.lt.s32.totalorder %s18, 1
      %s243 = scalar_select %p242, %s18, 1
      %s244 = smul.addr %s243, 8
      %s245 = scalar_lea.vmem %s0, %s244
      %p246 = pneg %p39
      %p247 = pneg %p36
      %p248 = pneg %p60
      %p249 = pneg %p57
      %p250 = pneg %p81
      %p251 = pneg %p78
      %p252 = pneg %p102
      %p253 = pneg %p99
      %p254 = pneg %p123
      %p255 = pneg %p120
      %p256 = pneg %p144
      %p257 = pneg %p141
      %p258 = pneg %p165
      %p259 = pneg %p162
      %p260 = pneg %p191
      %p261 = pneg %p188
      %p262 = scmp.lt.s32.totalorder %s18, 1
      %s263 = scalar_select %p262, %s18, 1
      %s264 = smul.addr %s263, 8
      %s265 = scalar_lea.vmem %s7, %s264
      %p266 = scmp.lt.s32.totalorder %s18, 1
      %s267 = scalar_select %p266, %s18, 1
      %s268 = smul.addr %s267, 8
      %s269 = scalar_lea.vmem %s0, %s268
      %p270 = scmp.lt.s32.totalorder %s18, 1
      %s271 = scalar_select %p270, %s18, 1
      %s272 = smul.addr %s271, 8
      %s273 = scalar_lea.vmem %s7, %s272
      %v274 = vld [vmem:[%s269] sm:$0xff]
      %v275 = vld [vmem:[%s1] sm:$0xff]
      %v276 = vld [vmem:[%s1 + $0x8] sm:$0xff]
      %v277 = vld [vmem:[%s1 + $0x10] sm:$0xff]
      %v278 = vld [vmem:[%s1 + $0x18] sm:$0xff]
      %v279 = vld [vmem:[%s2] sm:$0x1]
      %v281 = vperm.slane %v279, 0
      %vm283 = vcmask 261120
      %v285 = vsel %vm283, %v274, 0
      %287 = vmatpush.msra.mxu0 0.0
      %288 = vmatpush.msra.mxu0 0.0
      %289 = vmatpush.msra.mxu0 0.0
      %290 = vmatpush.msra.mxu0 0.0
      %291 = vmatpush.msra.mxu0 0.0
      %292 = vmatpush.msra.mxu0 0.0
      %293 = vmatpush.msra.mxu0 0.0
      %294 = vmatpush.msra.mxu0 0.0
      %295 = vmatpush.msra.mxu0 0.0
      %296 = vmatpush.msra.mxu0 0.0
      %297 = vmatpush.msra.mxu0 0.0
      %298 = vmatpush.msra.mxu0 0.0
      %299 = vmatpush.msra.mxu0 %v278
      %300 = vmatpush.msra.mxu0 %v277
      %301 = vmatpush.msra.mxu0 %v276
      %302 = vmatpush.msra.mxu0 %v275
      %303 = vmatmul.f32.gmra.mxu0 %v285
      %v304 = vpop.f32.mrf.mxu0
      %v305 = vadd.f32 %v281, %v304
      %306 = vdwg.mxu0
      %v307 = vmax.f32 %v305, 0.0
      %v308 = vld [vmem:[%s3] sm:$0xff]
      %v309 = vld [vmem:[%s3 + $0x8] sm:$0xff]
      %v310 = vld [vmem:[%s3 + $0x10] sm:$0xff]
      %v311 = vld [vmem:[%s3 + $0x18] sm:$0xff]
      %v312 = vld [vmem:[%s3 + $0x20] sm:$0xff]
      %v313 = vld [vmem:[%s3 + $0x28] sm:$0xff]
      %v314 = vld [vmem:[%s3 + $0x30] sm:$0xff]
      %v315 = vld [vmem:[%s3 + $0x38] sm:$0xff]
      %v316 = vld [vmem:[%s4] sm:$0x1]
      %v318 = vperm.slane %v316, 0
      %vm320 = vcmask 523264
      %v322 = vsel %vm320, %v307, 0
      %324 = vmatpush.msra.mxu0 0.0
      %325 = vmatpush.msra.mxu0 0.0
      %326 = vmatpush.msra.mxu0 0.0
      %327 = vmatpush.msra.mxu0 0.0
      %328 = vmatpush.msra.mxu0 0.0
      %329 = vmatpush.msra.mxu0 0.0
      %330 = vmatpush.msra.mxu0 0.0
      %331 = vmatpush.msra.mxu0 0.0
      %332 = vmatpush.msra.mxu0 %v315
      %333 = vmatpush.msra.mxu0 %v314
      %334 = vmatpush.msra.mxu0 %v313
      %335 = vmatpush.msra.mxu0 %v312
      %336 = vmatpush.msra.mxu0 %v311
      %337 = vmatpush.msra.mxu0 %v310
      %338 = vmatpush.msra.mxu0 %v309
      %339 = vmatpush.msra.mxu0 %v308
      %340 = vmatmul.f32.gmra.mxu0 %v322
      %v341 = vpop.f32.mrf.mxu0
      %v342 = vadd.f32 %v318, %v341
      %343 = vdwg.mxu0
      %v344 = vadd.f32 %v274, %v342
      %v345 = vld [vmem:[%s5] sm:$0x1]
      %v346 = vld [vmem:[%s6] sm:$0x1]
      %v347 = vsel %vm283, %v344, 0.0
      %348 = vadd.xlane.f32.xlu0 %v347
      %v349 = vpop.xlane.xlu0 %348
      %v350 = vrcp.pop 32.0
      %v351 = vmul.f32 32.0, %v350
      %v352 = vsub.f32 1.0, %v351
      %v353 = vmul.f32 %v350, %v352
      %v354 = vadd.f32 %v350, %v353
      %vm355 = vweird.f32 %v350
      %v356 = vsel %vm355, %v350, %v354
      %v357 = vmul.f32 %v349, %v356
      %v358 = vsub.f32 %v344, %v357
      %v359 = vmul.f32 %v358, %v358
      %v360 = vsel %vm283, %v359, 0.0
      %361 = vadd.xlane.f32.xlu0 %v360
      %v362 = vpop.xlane.xlu0 %361
      %v363 = vmul.f32 %v362, %v356
      %v364 = vadd.f32 %v363, 1e-05
      %v365 = vrsqrt.pop %v364
      %v366 = vmul.f32 %v365, %v364
      %v367 = vmul.f32 %v366, %v365
      %v368 = vmul.f32 0.5, %v367
      %v369 = vsub.f32 1.5, %v368
      %v370 = vmul.f32 %v365, %v369
      %vm371 = vweird.f32 %v364
      %vm372 = vweird.f32 %v365
      %vm373 = vmor %vm371, %vm372
      %v374 = vsel %vm373, %v365, %v370
      %v375 = vmul.f32 %v358, %v374
      %v377 = vperm.slane %v345, 0
      %v379 = vmul.f32 %v375, %v377
      %v381 = vperm.slane %v346, 0
      %v383 = vadd.f32 %v379, %v381
      %384 = vst.msk [vmem:[%s273] sm:$0xff] %vm283, %v383
      %p385 = scmp.lt.s32.totalorder %s18, 1
      %s386 = scalar_select %p385, %s18, 1
      %s387 = smul.addr %s386, 8
      %s388 = scalar_lea.vmem %s7, %s387
      // Predicated region
      $region49: #{decoder_forward.9} parent=47 // pred_check
        %p389 = pneg %p188
      $region50: #{decoder_forward.9} parent=47 // pred_check_branch
        %391 = sbr.rel (%p389) target = $region52
      $region51: #{decoder_forward.9} parent=47 // pred_region
        _
      $region52: #{decoder_forward.9} parent=47 // pred_fallthru
        _
    $region48: #{decoder_forward.9} parent=5 // pred_fallthru
      _
    %p392 = scmp.le.s32.totalorder 2, %s13
    // Predicated region
    $region53: #{decoder_forward.9} parent=5 // pred_check
      %p393 = pneg %p392
    $region54: #{decoder_forward.9} parent=5 // pred_check_branch
      %395 = sbr.rel (%p393) target = $region56
    $region55: #{decoder_forward.9} parent=5 // pred_region
      %s396 = ssub.s32 %s13, 2
      // Predicated region
      $region57: #{decoder_forward.9} parent=55 // pred_check
        %p397 = pneg %p194
      $region58: #{decoder_forward.9} parent=55 // pred_check_branch
        %399 = sbr.rel (%p397) target = $region60
      $region59: #{decoder_forward.9} parent=55 // pred_region
        %p400 = scmp.lt.s32.totalorder %s19, 1
        %s401 = scalar_select %p400, %s19, 1
        %s402 = smul.addr %s401, 8
        %s403 = scalar_lea.vmem %s7, %s402
      $region60: #{decoder_forward.9} parent=55 // pred_fallthru
        _
    $region56: #{decoder_forward.9} parent=5 // pred_fallthru
      _
  $region6: #{decoder_forward.9} parent=0 // loop_footer
    %s17 = sadd.s32 1, %s13
  $region7: #{decoder_forward.9} parent=0 // loop_footer_branch
    %12 = sbr.rel target = $region3
  $region8: #{decoder_forward.9} parent=0 // loop_exit
    _

// kernel: decoder_forward.8
$region0: #{decoder_forward.8}
  #allocation0 [shape = 'u32[]', space=smem, size = 0x4, offset = 0x4, fixed_abs, tag = 'smem constant byte address 0x4 - core index']
  #allocation1 [shape = 'u32[72,128]{1,0:T(1,128)}', space=vmem, size = 0x9000, scoped, tag = 'internal scratch']
  %s0 = inlined_call_operand.vmem [shape: f32[2,8,32], index: 0, kind: input, shape index: {}]
  %s1 = inlined_call_operand.vmem [shape: f32[2,10,32], index: 1, kind: input, shape index: {}]
  %s2 = inlined_call_operand.vmem [shape: f32[2,1,8,10], index: 2, kind: input, shape index: {}]
  %s3 = inlined_call_operand.vmem [shape: f32[32,32], index: 3, kind: input, shape index: {}]
  %s4 = inlined_call_operand.vmem [shape: f32[1,32], index: 4, kind: input, shape index: {}]
  %s5 = inlined_call_operand.vmem [shape: f32[32,64], index: 5, kind: input, shape index: {}]
  %s6 = inlined_call_operand.vmem [shape: f32[1,64], index: 6, kind: input, shape index: {}]
  %s7 = inlined_call_operand.vmem [shape: f32[32,32], index: 7, kind: input, shape index: {}]
  %s8 = inlined_call_operand.vmem [shape: f32[1,32], index: 8, kind: input, shape index: {}]
  %s9 = inlined_call_operand.vmem [shape: f32[1,32], index: 9, kind: input, shape index: {}]
  %s10 = inlined_call_operand.vmem [shape: f32[1,32], index: 10, kind: input, shape index: {}]
  %s11 = inlined_call_operand.vmem [shape: f32[2,8,32], index: 11, kind: output, shape index: {}]
  %s12 = sld [smem:[#allocation0]]
  $region77: #{decoder_forward.8} parent=0
    _
  %s14 = ssub.s32 1, %s12
  %s15 = scalar_select 0, %s14, %s12
  loop: start=0, step=1, limit=4
  $region2: #{decoder_forward.8} parent=0 // loop_pre_header
    _
  $region3: #{decoder_forward.8} parent=0 // loop_header
    %s17 = sphi 0, %s21
    %p18 = scmp.ge.s32.totalorder %s17, 4
    %s27 = sphi 0, %s29
    %s30 = sphi 0, %s27
    %s31 = sphi 0, %s30
    %s47 = sphi 0, %s31
    %s53 = sphi 0, %s55
    %s56 = sphi 0, %s53
    %s57 = sphi 0, %s56
    %s73 = sphi 0, %s57
    %s79 = sphi 0, %s81
    %s82 = sphi 0, %s79
    %s83 = sphi 0, %s82
    %s99 = sphi 0, %s83
    %s103 = sphi 0, %s103
    %s105 = sphi 0, %s103
    %s106 = sphi 0, %s105
    %s120 = sphi 0, %s106
    %s124 = sphi 0, %s124
    %s126 = sphi 0, %s124
    %s127 = sphi 0, %s126
    %s141 = sphi 0, %s127
    %s145 = sphi 0, %s145
    %s147 = sphi 0, %s145
    %s148 = sphi 0, %s147
    %s162 = sphi 0, %s148
    %s166 = sphi 0, %s166
    %s168 = sphi 0, %s166
    %s169 = sphi 0, %s168
    %s183 = sphi 0, %s169
    %s187 = sphi 0, %s187
    %s189 = sphi 0, %s187
    %s190 = sphi 0, %s189
    %s204 = sphi 0, %s190
    %s208 = sphi 0, %s208
    %s210 = sphi 0, %s208
    %s211 = sphi 0, %s210
    %s225 = sphi 0, %s211
    %s229 = sphi 0, %s229
    %s231 = sphi 0, %s229
    %s232 = sphi 0, %s231
    %s246 = sphi 0, %s232
    %s250 = sphi 0, %s250
    %s252 = sphi 0, %s250
    %s253 = sphi 0, %s252
    %s267 = sphi 0, %s253
    %s273 = sphi 0, %s275
    %s276 = sphi 0, %s273
    %s277 = sphi 0, %s276
    %s293 = sphi 0, %s277
  $region4: #{decoder_forward.8} parent=0 // loop_header_branch
    %20 = sbr.rel (%p18) target = $region8
  $region5: #{decoder_forward.8} parent=0 // loop_body
    %s22 = ssub.s32 %s17, 1
    %s23 = ssub.s32 %s17, 2
    %s24 = sadd.s32 %s17, 1
    %s25 = ssub.s32 %s17, %s24
    %p26 = scmp.eq.s32.totalorder %s25, 0
    %s28 = sadd.s32 %s27, 1
    %s29 = scalar_select %p26, %s27, %s28
    %p32 = pneg %p26
    %p33 = scmp.eq.s32.totalorder %s17, 1
    %p34 = por %p32, %p33
    %p35 = scmp.ne.s32.totalorder %s27, %s30
    %p36 = scmp.eq.s32.totalorder %s17, 0
    %p37 = por %p35, %p36
    %p38 = scmp.ne.s32.totalorder %s27, %s30
    %p39 = scmp.eq.s32.totalorder %s22, 1
    %p40 = por %p38, %p39
    %p41 = scmp.ne.s32.totalorder %s30, %s31
    %p42 = scmp.eq.s32.totalorder %s22, 0
    %p43 = por %p41, %p42
    %p44 = scmp.ne.s32.totalorder %s30, %s31
    %p45 = scmp.eq.s32.totalorder %s23, 1
    %p46 = por %p44, %p45
    %p48 = scmp.ne.s32.totalorder %s31, %s47
    %p49 = scmp.eq.s32.totalorder %s23, 0
    %p50 = por %p48, %p49
    %s51 = ssub.s32 %s17, %s24
    %p52 = scmp.eq.s32.totalorder %s51, 0
    %s54 = sadd.s32 %s53, 1
    %s55 = scalar_select %p52, %s53, %s54
    %p58 = pneg %p52
    %p59 = scmp.eq.s32.totalorder %s17, 1
    %p60 = por %p58, %p59
    %p61 = scmp.ne.s32.totalorder %s53, %s56
    %p62 = scmp.eq.s32.totalorder %s17, 0
    %p63 = por %p61, %p62
    %p64 = scmp.ne.s32.totalorder %s53, %s56
    %p65 = scmp.eq.s32.totalorder %s22, 1
    %p66 = por %p64, %p65
    %p67 = scmp.ne.s32.totalorder %s56, %s57
    %p68 = scmp.eq.s32.totalorder %s22, 0
    %p69 = por %p67, %p68
    %p70 = scmp.ne.s32.totalorder %s56, %s57
    %p71 = scmp.eq.s32.totalorder %s23, 1
    %p72 = por %p70, %p71
    %p74 = scmp.ne.s32.totalorder %s57, %s73
    %p75 = scmp.eq.s32.totalorder %s23, 0
    %p76 = por %p74, %p75
    %s77 = ssub.s32 %s17, %s24
    %p78 = scmp.eq.s32.totalorder %s77, 0
    %s80 = sadd.s32 %s79, 1
    %s81 = scalar_select %p78, %s79, %s80
    %p84 = pneg %p78
    %p85 = scmp.eq.s32.totalorder %s17, 1
    %p86 = por %p84, %p85
    %p87 = scmp.ne.s32.totalorder %s79, %s82
    %p88 = scmp.eq.s32.totalorder %s17, 0
    %p89 = por %p87, %p88
    %p90 = scmp.ne.s32.totalorder %s79, %s82
    %p91 = scmp.eq.s32.totalorder %s22, 1
    %p92 = por %p90, %p91
    %p93 = scmp.ne.s32.totalorder %s82, %s83
    %p94 = scmp.eq.s32.totalorder %s22, 0
    %p95 = por %p93, %p94
    %p96 = scmp.ne.s32.totalorder %s82, %s83
    %p97 = scmp.eq.s32.totalorder %s23, 1
    %p98 = por %p96, %p97
    %p100 = scmp.ne.s32.totalorder %s83, %s99
    %p101 = scmp.eq.s32.totalorder %s23, 0
    %p102 = por %p100, %p101
    %s104 = sadd.s32 %s103, 1
    %p107 = scmp.eq.s32.totalorder %s17, 1
    %p108 = scmp.ne.s32.totalorder %s103, %s105
    %p109 = scmp.eq.s32.totalorder %s17, 0
    %p110 = por %p108, %p109
    %p111 = scmp.ne.s32.totalorder %s103, %s105
    %p112 = scmp.eq.s32.totalorder %s22, 1
    %p113 = por %p111, %p112
    %p114 = scmp.ne.s32.totalorder %s105, %s106
    %p115 = scmp.eq.s32.totalorder %s22, 0
    %p116 = por %p114, %p115
    %p117 = scmp.ne.s32.totalorder %s105, %s106
    %p118 = scmp.eq.s32.totalorder %s23, 1
    %p119 = por %p117, %p118
    %p121 = scmp.ne.s32.totalorder %s106, %s120
    %p122 = scmp.eq.s32.totalorder %s23, 0
    %p123 = por %p121, %p122
    %s125 = sadd.s32 %s124, 1
    %p128 = scmp.eq.s32.totalorder %s17, 1
    %p129 = scmp.ne.s32.totalorder %s124, %s126
    %p130 = scmp.eq.s32.totalorder %s17, 0
    %p131 = por %p129, %p130
    %p132 = scmp.ne.s32.totalorder %s124, %s126
    %p133 = scmp.eq.s32.totalorder %s22, 1
    %p134 = por %p132, %p133
    %p135 = scmp.ne.s32.totalorder %s126, %s127
    %p136 = scmp.eq.s32.totalorder %s22, 0
    %p137 = por %p135, %p136
    %p138 = scmp.ne.s32.totalorder %s126, %s127
    %p139 = scmp.eq.s32.totalorder %s23, 1
    %p140 = por %p138, %p139
    %p142 = scmp.ne.s32.totalorder %s127, %s141
    %p143 = scmp.eq.s32.totalorder %s23, 0
    %p144 = por %p142, %p143
    %s146 = sadd.s32 %s145, 1
    %p149 = scmp.eq.s32.totalorder %s17, 1
    %p150 = scmp.ne.s32.totalorder %s145, %s147
    %p151 = scmp.eq.s32.totalorder %s17, 0
    %p152 = por %p150, %p151
    %p153 = scmp.ne.s32.totalorder %s145, %s147
    %p154 = scmp.eq.s32.totalorder %s22, 1
    %p155 = por %p153, %p154
    %p156 = scmp.ne.s32.totalorder %s147, %s148
    %p157 = scmp.eq.s32.totalorder %s22, 0
    %p158 = por %p156, %p157
    %p159 = scmp.ne.s32.totalorder %s147, %s148
    %p160 = scmp.eq.s32.totalorder %s23, 1
    %p161 = por %p159, %p160
    %p163 = scmp.ne.s32.totalorder %s148, %s162
    %p164 = scmp.eq.s32.totalorder %s23, 0
    %p165 = por %p163, %p164
    %s167 = sadd.s32 %s166, 1
    %p170 = scmp.eq.s32.totalorder %s17, 1
    %p171 = scmp.ne.s32.totalorder %s166, %s168
    %p172 = scmp.eq.s32.totalorder %s17, 0
    %p173 = por %p171, %p172
    %p174 = scmp.ne.s32.totalorder %s166, %s168
    %p175 = scmp.eq.s32.totalorder %s22, 1
    %p176 = por %p174, %p175
    %p177 = scmp.ne.s32.totalorder %s168, %s169
    %p178 = scmp.eq.s32.totalorder %s22, 0
    %p179 = por %p177, %p178
    %p180 = scmp.ne.s32.totalorder %s168, %s169
    %p181 = scmp.eq.s32.totalorder %s23, 1
    %p182 = por %p180, %p181
    %p184 = scmp.ne.s32.totalorder %s169, %s183
    %p185 = scmp.eq.s32.totalorder %s23, 0
    %p186 = por %p184, %p185
    %s188 = sadd.s32 %s187, 1
    %p191 = scmp.eq.s32.totalorder %s17, 1
    %p192 = scmp.ne.s32.totalorder %s187, %s189
    %p193 = scmp.eq.s32.totalorder %s17, 0
    %p194 = por %p192, %p193
    %p195 = scmp.ne.s32.totalorder %s187, %s189
    %p196 = scmp.eq.s32.totalorder %s22, 1
    %p197 = por %p195, %p196
    %p198 = scmp.ne.s32.totalorder %s189, %s190
    %p199 = scmp.eq.s32.totalorder %s22, 0
    %p200 = por %p198, %p199
    %p201 = scmp.ne.s32.totalorder %s189, %s190
    %p202 = scmp.eq.s32.totalorder %s23, 1
    %p203 = por %p201, %p202
    %p205 = scmp.ne.s32.totalorder %s190, %s204
    %p206 = scmp.eq.s32.totalorder %s23, 0
    %p207 = por %p205, %p206
    %s209 = sadd.s32 %s208, 1
    %p212 = scmp.eq.s32.totalorder %s17, 1
    %p213 = scmp.ne.s32.totalorder %s208, %s210
    %p214 = scmp.eq.s32.totalorder %s17, 0
    %p215 = por %p213, %p214
    %p216 = scmp.ne.s32.totalorder %s208, %s210
    %p217 = scmp.eq.s32.totalorder %s22, 1
    %p218 = por %p216, %p217
    %p219 = scmp.ne.s32.totalorder %s210, %s211
    %p220 = scmp.eq.s32.totalorder %s22, 0
    %p221 = por %p219, %p220
    %p222 = scmp.ne.s32.totalorder %s210, %s211
    %p223 = scmp.eq.s32.totalorder %s23, 1
    %p224 = por %p222, %p223
    %p226 = scmp.ne.s32.totalorder %s211, %s225
    %p227 = scmp.eq.s32.totalorder %s23, 0
    %p228 = por %p226, %p227
    %s230 = sadd.s32 %s229, 1
    %p233 = scmp.eq.s32.totalorder %s17, 1
    %p234 = scmp.ne.s32.totalorder %s229, %s231
    %p235 = scmp.eq.s32.totalorder %s17, 0
    %p236 = por %p234, %p235
    %p237 = scmp.ne.s32.totalorder %s229, %s231
    %p238 = scmp.eq.s32.totalorder %s22, 1
    %p239 = por %p237, %p238
    %p240 = scmp.ne.s32.totalorder %s231, %s232
    %p241 = scmp.eq.s32.totalorder %s22, 0
    %p242 = por %p240, %p241
    %p243 = scmp.ne.s32.totalorder %s231, %s232
    %p244 = scmp.eq.s32.totalorder %s23, 1
    %p245 = por %p243, %p244
    %p247 = scmp.ne.s32.totalorder %s232, %s246
    %p248 = scmp.eq.s32.totalorder %s23, 0
    %p249 = por %p247, %p248
    %s251 = sadd.s32 %s250, 1
    %p254 = scmp.eq.s32.totalorder %s17, 1
    %p255 = scmp.ne.s32.totalorder %s250, %s252
    %p256 = scmp.eq.s32.totalorder %s17, 0
    %p257 = por %p255, %p256
    %p258 = scmp.ne.s32.totalorder %s250, %s252
    %p259 = scmp.eq.s32.totalorder %s22, 1
    %p260 = por %p258, %p259
    %p261 = scmp.ne.s32.totalorder %s252, %s253
    %p262 = scmp.eq.s32.totalorder %s22, 0
    %p263 = por %p261, %p262
    %p264 = scmp.ne.s32.totalorder %s252, %s253
    %p265 = scmp.eq.s32.totalorder %s23, 1
    %p266 = por %p264, %p265
    %p268 = scmp.ne.s32.totalorder %s253, %s267
    %p269 = scmp.eq.s32.totalorder %s23, 0
    %p270 = por %p268, %p269
    %s271 = ssub.s32 %s17, %s24
    %p272 = scmp.eq.s32.totalorder %s271, 0
    %s274 = sadd.s32 %s273, 1
    %s275 = scalar_select %p272, %s273, %s274
    %p278 = pneg %p272
    %p279 = scmp.eq.s32.totalorder %s17, 1
    %p280 = por %p278, %p279
    %p281 = scmp.ne.s32.totalorder %s273, %s276
    %p282 = scmp.eq.s32.totalorder %s17, 0
    %p283 = por %p281, %p282
    %p284 = scmp.ne.s32.totalorder %s273, %s276
    %p285 = scmp.eq.s32.totalorder %s22, 1
    %p286 = por %p284, %p285
    %p287 = scmp.ne.s32.totalorder %s276, %s277
    %p288 = scmp.eq.s32.totalorder %s22, 0
    %p289 = por %p287, %p288
    %p290 = scmp.ne.s32.totalorder %s276, %s277
    %p291 = scmp.eq.s32.totalorder %s23, 1
    %p292 = por %p290, %p291
    %p294 = scmp.ne.s32.totalorder %s277, %s293
    %p295 = scmp.eq.s32.totalorder %s23, 0
    %p296 = por %p294, %p295
    %p297 = scmp.le.s32.totalorder 1, %s17
    %p298 = scmp.lt.s32.totalorder %s17, 3
    %p299 = pnand %p297, %p298
    %p300 = pneg %p299
    // Predicated region
    $region9: #{decoder_forward.8} parent=5 // pred_check
      _
    $region10: #{decoder_forward.8} parent=5 // pred_check_branch
      %302 = sbr.rel (%p299) target = $region12
    $region11: #{decoder_forward.8} parent=5 // pred_region
      %s303 = ssub.s32 %s17, 1
      // Predicated region
      $region13: #{decoder_forward.8} parent=11 // pred_check
        %p304 = pneg %p116
      $region14: #{decoder_forward.8} parent=11 // pred_check_branch
        %306 = sbr.rel (%p304) target = $region16
      $region15: #{decoder_forward.8} parent=11 // pred_region
        _
      $region16: #{decoder_forward.8} parent=11 // pred_fallthru
        _
      // Predicated region
      $region17: #{decoder_forward.8} parent=11 // pred_check
        %p307 = pneg %p137
      $region18: #{decoder_forward.8} parent=11 // pred_check_branch
        %309 = sbr.rel (%p307) target = $region20
      $region19: #{decoder_forward.8} parent=11 // pred_region
        _
      $region20: #{decoder_forward.8} parent=11 // pred_fallthru
        _
      // Predicated region
      $region21: #{decoder_forward.8} parent=11 // pred_check
        %p310 = pneg %p158
      $region22: #{decoder_forward.8} parent=11 // pred_check_branch
        %312 = sbr.rel (%p310) target = $region24
      $region23: #{decoder_forward.8} parent=11 // pred_region
        _
      $region24: #{decoder_forward.8} parent=11 // pred_fallthru
        _
      // Predicated region
      $region25: #{decoder_forward.8} parent=11 // pred_check
        %p313 = pneg %p179
      $region26: #{decoder_forward.8} parent=11 // pred_check_branch
        %315 = sbr.rel (%p313) target = $region28
      $region27: #{decoder_forward.8} parent=11 // pred_region
        _
      $region28: #{decoder_forward.8} parent=11 // pred_fallthru
        _
      // Predicated region
      $region29: #{decoder_forward.8} parent=11 // pred_check
        %p316 = pneg %p200
      $region30: #{decoder_forward.8} parent=11 // pred_check_branch
        %318 = sbr.rel (%p316) target = $region32
      $region31: #{decoder_forward.8} parent=11 // pred_region
        _
      $region32: #{decoder_forward.8} parent=11 // pred_fallthru
        _
      // Predicated region
      $region33: #{decoder_forward.8} parent=11 // pred_check
        %p319 = pneg %p221
      $region34: #{decoder_forward.8} parent=11 // pred_check_branch
        %321 = sbr.rel (%p319) target = $region36
      $region35: #{decoder_forward.8} parent=11 // pred_region
        _
      $region36: #{decoder_forward.8} parent=11 // pred_fallthru
        _
      // Predicated region
      $region37: #{decoder_forward.8} parent=11 // pred_check
        %p322 = pneg %p242
      $region38: #{decoder_forward.8} parent=11 // pred_check_branch
        %324 = sbr.rel (%p322) target = $region40
      $region39: #{decoder_forward.8} parent=11 // pred_region
        _
      $region40: #{decoder_forward.8} parent=11 // pred_fallthru
        _
      // Predicated region
      $region41: #{decoder_forward.8} parent=11 // pred_check
        %p325 = pneg %p263
      $region42: #{decoder_forward.8} parent=11 // pred_check_branch
        %327 = sbr.rel (%p325) target = $region44
      $region43: #{decoder_forward.8} parent=11 // pred_region
        _
      $region44: #{decoder_forward.8} parent=11 // pred_fallthru
        _
    $region12: #{decoder_forward.8} parent=5 // pred_fallthru
      _
    %p328 = scmp.lt.s32.totalorder %s17, 2
    // Predicated region
    $region45: #{decoder_forward.8} parent=5 // pred_check
      %p329 = pneg %p328
    $region46: #{decoder_forward.8} parent=5 // pred_check_branch
      %331 = sbr.rel (%p329) target = $region48
    $region47: #{decoder_forward.8} parent=5 // pred_region
      // Predicated region
      $region49: #{decoder_forward.8} parent=47 // pred_check
        %p332 = pneg %p37
      $region50: #{decoder_forward.8} parent=47 // pred_check_branch
        %334 = sbr.rel (%p332) target = $region52
      $region51: #{decoder_forward.8} parent=47 // pred_region
        %p335 = scmp.lt.s32.totalorder %s17, 1
        %s336 = scalar_select %p335, %s17, 1
        %s337 = smul.addr %s336, 8
        %s338 = scalar_lea.vmem %s0, %s337
      $region52: #{decoder_forward.8} parent=47 // pred_fallthru
        _
      // Predicated region
      $region53: #{decoder_forward.8} parent=47 // pred_check
        %p339 = pneg %p63
      $region54: #{decoder_forward.8} parent=47 // pred_check_branch
        %341 = sbr.rel (%p339) target = $region56
      $region55: #{decoder_forward.8} parent=47 // pred_region
        %p342 = scmp.lt.s32.totalorder %s17, 1
        %s343 = scalar_select %p342, %s17, 1
        %s344 = smul.addr %s343, 2
        %s345 = smul.addr %s344, 8
        %s346 = scalar_lea.vmem %s1, %s345
      $region56: #{decoder_forward.8} parent=47 // pred_fallthru
        _
      // Predicated region
      $region57: #{decoder_forward.8} parent=47 // pred_check
        %p347 = pneg %p89
      $region58: #{decoder_forward.8} parent=47 // pred_check_branch
        %349 = sbr.rel (%p347) target = $region60
      $region59: #{decoder_forward.8} parent=47 // pred_region
        %p350 = scmp.lt.s32.totalorder %s17, 1
        %s351 = scalar_select %p350, %s17, 1
        %s352 = smul.addr %s351, 8
        %s353 = scalar_lea.vmem %s2, %s352
      $region60: #{decoder_forward.8} parent=47 // pred_fallthru
        _
    $region48: #{decoder_forward.8} parent=5 // pred_fallthru
      _
    %p354 = scmp.le.s32.totalorder 1, %s17
    %p355 = scmp.lt.s32.totalorder %s17, 3
    %p356 = pnand %p354, %p355
    %p357 = pneg %p356
    // Predicated region
    $region61: #{decoder_forward.8} parent=5 // pred_check
      _
    $region62: #{decoder_forward.8} parent=5 // pred_check_branch
      %359 = sbr.rel (%p356) target = $region64
    $region63: #{decoder_forward.8} parent=5 // pred_region
      %s360 = ssub.s32 %s17, 1
      %p361 = scmp.lt.s32.totalorder %s22, 1
      %s362 = scalar_select %p361, %s22, 1
      %s363 = smul.addr %s362, 8
      %s364 = scalar_lea.vmem %s0, %s363
      %p365 = pneg %p43
      %p366 = pneg %p40
      %p367 = scmp.lt.s32.totalorder %s22, 1
      %s368 = scalar_select %p367, %s22, 1
      %s369 = smul.addr %s368, 2
      %s370 = smul.addr %s369, 8
      %s371 = scalar_lea.vmem %s1, %s370
      %p372 = pneg %p69
      %p373 = pneg %p66
      %p374 = scmp.lt.s32.totalorder %s22, 1
      %s375 = scalar_select %p374, %s22, 1
      %s376 = smul.addr %s375, 8
      %s377 = scalar_lea.vmem %s2, %s376
      %p378 = pneg %p95
      %p379 = pneg %p92
      %p380 = pneg %p116
      %p381 = pneg %p113
      %p382 = pneg %p137
      %p383 = pneg %p134
      %p384 = pneg %p158
      %p385 = pneg %p155
      %p386 = pneg %p179
      %p387 = pneg %p176
      %p388 = pneg %p200
      %p389 = pneg %p197
      %p390 = pneg %p221
      %p391 = pneg %p218
      %p392 = pneg %p242
      %p393 = pneg %p239
      %p394 = pneg %p263
      %p395 = pneg %p260
      %p396 = pneg %p289
      %p397 = pneg %p286
      %p398 = scmp.lt.s32.totalorder %s22, 1
      %s399 = scalar_select %p398, %s22, 1
      %s400 = smul.addr %s399, 8
      %s401 = scalar_lea.vmem %s11, %s400
      %p402 = scmp.lt.s32.totalorder %s22, 1
      %s403 = scalar_select %p402, %s22, 1
      %s404 = smul.addr %s403, 8
      %s405 = scalar_lea.vmem %s0, %s404
      %p406 = scmp.lt.s32.totalorder %s22, 1
      %s407 = scalar_select %p406, %s22, 1
      %s408 = smul.addr %s407, 2
      %s409 = smul.addr %s408, 8
      %s410 = scalar_lea.vmem %s1, %s409
      %p411 = scmp.lt.s32.totalorder %s22, 1
      %s412 = scalar_select %p411, %s22, 1
      %s413 = smul.addr %s412, 8
      %s414 = scalar_lea.vmem %s2, %s413
      %p415 = scmp.lt.s32.totalorder %s22, 1
      %s416 = scalar_select %p415, %s22, 1
      %s417 = smul.addr %s416, 8
      %s418 = scalar_lea.vmem %s11, %s417
      %v419 = vld [vmem:[%s405] sm:$0xff]
      %v420 = vld [vmem:[%s410] sm:$0xff]
      %v421 = vld [vmem:[%s410 + $0x8] sm:$0x3]
      %v422 = vld [vmem:[%s414] sm:$0xff]
      %v423 = vld [vmem:[%s3] sm:$0xff]
      %v424 = vld [vmem:[%s3 + $0x8] sm:$0xff]
      %v425 = vld [vmem:[%s3 + $0x10] sm:$0xff]
      %v426 = vld [vmem:[%s3 + $0x18] sm:$0xff]
      %v427 = vld [vmem:[%s4] sm:$0x1]
      %v429 = vperm.slane %v427, 0
      %vm431 = vcmask 261120
      %v433 = vsel %vm431, %v419, 0
      %435 = vmatpush.msra.mxu0 0.0
      %436 = vmatpush.msra.mxu0 0.0
      %437 = vmatpush.msra.mxu0 0.0
      %438 = vmatpush.msra.mxu0 0.0
      %439 = vmatpush.msra.mxu0 0.0
      %440 = vmatpush.msra.mxu0 0.0
      %441 = vmatpush.msra.mxu0 0.0
      %442 = vmatpush.msra.mxu0 0.0
      %443 = vmatpush.msra.mxu0 0.0
      %444 = vmatpush.msra.mxu0 0.0
      %445 = vmatpush.msra.mxu0 0.0
      %446 = vmatpush.msra.mxu0 0.0
      %447 = vmatpush.msra.mxu0 %v426
      %448 = vmatpush.msra.mxu0 %v425
      %449 = vmatpush.msra.mxu0 %v424
      %450 = vmatpush.msra.mxu0 %v423
      %451 = vmatmul.f32.gmra.mxu0 %v433
      %v452 = vpop.f32.mrf.mxu0
      %v453 = vadd.f32 %v429, %v452
      %454 = vdwg.mxu0
      %v455 = vld [vmem:[%s5] sm:$0xff]
      %v456 = vld [vmem:[%s5 + $0x8] sm:$0xff]
      %v457 = vld [vmem:[%s5 + $0x10] sm:$0xff]
      %v458 = vld [vmem:[%s5 + $0x18] sm:$0xff]
      %v459 = vld [vmem:[%s6] sm:$0x1]
      %v461 = vperm.slane %v459, 0
      %v464 = vsel %vm431, %v420, 0
      %v467 = vsel %vm431, %v421, 0
      %469 = vmatpush.msra.mxu0 0.0
      %470 = vmatpush.msra.mxu0 0.0
      %471 = vmatpush.msra.mxu0 0.0
      %472 = vmatpush.msra.mxu0 0.0
      %473 = vmatpush.msra.mxu0 0.0
      %474 = vmatpush.msra.mxu0 0.0
      %475 = vmatpush.msra.mxu0 0.0
      %476 = vmatpush.msra.mxu0 0.0
      %477 = vmatpush.msra.mxu0 0.0
      %478 = vmatpush.msra.mxu0 0.0
      %479 = vmatpush.msra.mxu0 0.0
      %480 = vmatpush.msra.mxu0 0.0
      %481 = vmatpush.msra.mxu0 %v458
      %482 = vmatpush.msra.mxu0 %v457
      %483 = vmatpush.msra.mxu0 %v456
      %484 = vmatpush.msra.mxu0 %v455
      %485 = vmatmul.f32.gmra.mxu0 %v464
      %v486 = vpop.f32.mrf.mxu0
      %v487 = vadd.f32 %v461, %v486
      %488 = vmatmul.f32.gmra.mxu0 %v467
      %v489 = vpop.f32.mrf.mxu0
      %v490 = vadd.f32 %v461, %v489
      %491 = vdwg.mxu0
      %vm492 = vcmask 64512
      %v494 = vsel %vm492, %v453, 0
      %v497 = vsel %vm492, %v487, 0
      %v500 = vsel %vm492, %v490, 0
      %502 = vmatpush.xpose.msra.mxu0 0.0
      %503 = vmatpush.xpose.msra.mxu0 0.0
      %504 = vmatpush.xpose.msra.mxu0 0.0
      %505 = vmatpush.xpose.msra.mxu0 0.0
      %506 = vmatpush.xpose.msra.mxu0 0.0
      %507 = vmatpush.xpose.msra.mxu0 0.0
      %508 = vmatpush.xpose.msra.mxu0 0.0
      %509 = vmatpush.xpose.msra.mxu0 0.0
      %510 = vmatpush.xpose.msra.mxu0 0.0
      %511 = vmatpush.xpose.msra.mxu0 0.0
      %512 = vmatpush.xpose.msra.mxu0 0.0
      %513 = vmatpush.xpose.msra.mxu0 0.0
      %514 = vmatpush.xpose.msra.mxu0 0.0
      %515 = vmatpush.xpose.msra.mxu0 0.0
      %516 = vmatpush.xpose.msra.mxu0 %v500
      %517 = vmatpush.xpose.msra.mxu0 %v497
      %518 = vmatmul.f32.gmra.mxu0 %v494
      %v519 = vpop.f32.mrf.mxu0
      %v520 = vadd.f32 0.0, %v519
      %521 = vdwg.mxu0
      %v522 = vmul.f32 %v520, 0.35355338
      %vm523 = vcmp.eq.f32.partialorder %v422, 0.0
      %v524 = vsel %vm523, -1e+10, %v522
      %vm525 = vcmask 80896
      %v526 = vsel %vm525, %v524, -inf
      %527 = vmax.xlane.f32.xlu0 %v526
      %v528 = vpop.xlane.xlu0 %527
      %v529 = vsub.f32 %v524, %v528
      %v530 = vmul.f32 %v529, 1.442695
      %v531 = vpow.pop %v530
      %v532 = vsel %vm525, %v531, 0.0
      %533 = vadd.xlane.f32.xlu0 %v532
      %v534 = vpop.xlane.xlu0 %533
      %v535 = vrcp.pop %v534
      %v536 = vmul.f32 %v531, %v535
      %537 = vrot.lane.b32.xlu0 %v487, 96
      %v538 = vpop.permute.xlu0 %537
      %539 = vrot.lane.b32.xlu0 %v490, 96
      %v540 = vpop.permute.xlu0 %539
      %v543 = vsel %vm525, %v536, 0
      %vm545 = vcmask 1041408
      %v546 = vsel %vm545, %v540, 0
      %548 = vmatpush.msra.mxu0 0.0
      %549 = vmatpush.msra.mxu0 0.0
      %550 = vmatpush.msra.mxu0 0.0
      %551 = vmatpush.msra.mxu0 0.0
      %552 = vmatpush.msra.mxu0 0.0
      %553 = vmatpush.msra.mxu0 0.0
      %554 = vmatpush.msra.mxu0 0.0
      %555 = vmatpush.msra.mxu0 0.0
      %556 = vmatpush.msra.mxu0 0.0
      %557 = vmatpush.msra.mxu0 0.0
      %558 = vmatpush.msra.mxu0 0.0
      %559 = vmatpush.msra.mxu0 0.0
      %560 = vmatpush.msra.mxu0 0.0
      %561 = vmatpush.msra.mxu0 0.0
      %562 = vmatpush.msra.mxu0 %v546
      %563 = vmatpush.msra.mxu0 %v538
      %564 = vmatmul.f32.gmra.mxu0 %v543
      %v565 = vpop.f32.mrf.mxu0
      %v566 = vadd.f32 0.0, %v565
      %567 = vdwg.mxu0
      %568 = vrot.lane.b32.xlu0 %v453, 120
      %v569 = vpop.permute.xlu0 %568
      %570 = vrot.lane.b32.xlu0 %v487, 120
      %v571 = vpop.permute.xlu0 %570
      %572 = vrot.lane.b32.xlu0 %v490, 120
      %v573 = vpop.permute.xlu0 %572
      %v574 = vsel %vm492, %v569, 0
      %v576 = vsel %vm492, %v571, 0
      %v578 = vsel %vm492, %v573, 0
      %580 = vmatpush.xpose.msra.mxu0 0.0
      %581 = vmatpush.xpose.msra.mxu0 0.0
      %582 = vmatpush.xpose.msra.mxu0 0.0
      %583 = vmatpush.xpose.msra.mxu0 0.0
      %584 = vmatpush.xpose.msra.mxu0 0.0
      %585 = vmatpush.xpose.msra.mxu0 0.0
      %586 = vmatpush.xpose.msra.mxu0 0.0
      %587 = vmatpush.xpose.msra.mxu0 0.0
      %588 = vmatpush.xpose.msra.mxu0 0.0
      %589 = vmatpush.xpose.msra.mxu0 0.0
      %590 = vmatpush.xpose.msra.mxu0 0.0
      %591 = vmatpush.xpose.msra.mxu0 0.0
      %592 = vmatpush.xpose.msra.mxu0 0.0
      %593 = vmatpush.xpose.msra.mxu0 0.0
      %594 = vmatpush.xpose.msra.mxu0 %v578
      %595 = vmatpush.xpose.msra.mxu0 %v576
      %596 = vmatmul.f32.gmra.mxu0 %v574
      %v597 = vpop.f32.mrf.mxu0
      %v598 = vadd.f32 0.0, %v597
      %599 = vdwg.mxu0
      %v600 = vmul.f32 %v598, 0.35355338
      %v601 = vsel %vm523, -1e+10, %v600
      %v602 = vsel %vm525, %v601, -inf
      %603 = vmax.xlane.f32.xlu0 %v602
      %v604 = vpop.xlane.xlu0 %603
      %v605 = vsub.f32 %v601, %v604
      %v606 = vmul.f32 %v605, 1.442695
      %v607 = vpow.pop %v606
      %v608 = vsel %vm525, %v607, 0.0
      %609 = vadd.xlane.f32.xlu0 %v608
      %v610 = vpop.xlane.xlu0 %609
      %v611 = vrcp.pop %v610
      %v612 = vmul.f32 %v607, %v611
      %613 = vrot.lane.b32.xlu0 %v487, 88
      %v614 = vpop.permute.xlu0 %613
      %615 = vrot.lane.b32.xlu0 %v490, 88
      %v616 = vpop.permute.xlu0 %615
      %v619 = vsel %vm525, %v612, 0
      %v621 = vsel %vm545, %v616, 0
      %623 = vmatpush.msra.mxu0 0.0
      %624 = vmatpush.msra.mxu0 0.0
      %625 = vmatpush.msra.mxu0 0.0
      %626 = vmatpush.msra.mxu0 0.0
      %627 = vmatpush.msra.mxu0 0.0
      %628 = vmatpush.msra.mxu0 0.0
      %629 = vmatpush.msra.mxu0 0.0
      %630 = vmatpush.msra.mxu0 0.0
      %631 = vmatpush.msra.mxu0 0.0
      %632 = vmatpush.msra.mxu0 0.0
      %633 = vmatpush.msra.mxu0 0.0
      %634 = vmatpush.msra.mxu0 0.0
      %635 = vmatpush.msra.mxu0 0.0
      %636 = vmatpush.msra.mxu0 0.0
      %637 = vmatpush.msra.mxu0 %v621
      %638 = vmatpush.msra.mxu0 %v614
      %639 = vmatmul.f32.gmra.mxu0 %v619
      %v640 = vpop.f32.mrf.mxu0
      %v641 = vadd.f32 0.0, %v640
      %642 = vdwg.mxu0
      %643 = vrot.lane.b32.xlu0 %v453, 112
      %v644 = vpop.permute.xlu0 %643
      %645 = vrot.lane.b32.xlu0 %v487, 112
      %v646 = vpop.permute.xlu0 %645
      %647 = vrot.lane.b32.xlu0 %v490, 112
      %v648 = vpop.permute.xlu0 %647
      %v649 = vsel %vm492, %v644, 0
      %v651 = vsel %vm492, %v646, 0
      %v653 = vsel %vm492, %v648, 0
      %655 = vmatpush.xpose.msra.mxu0 0.0
      %656 = vmatpush.xpose.msra.mxu0 0.0
      %657 = vmatpush.xpose.msra.mxu0 0.0
      %658 = vmatpush.xpose.msra.mxu0 0.0
      %659 = vmatpush.xpose.msra.mxu0 0.0
      %660 = vmatpush.xpose.msra.mxu0 0.0
      %661 = vmatpush.xpose.msra.mxu0 0.0
      %662 = vmatpush.xpose.msra.mxu0 0.0
      %663 = vmatpush.xpose.msra.mxu0 0.0
      %664 = vmatpush.xpose.msra.mxu0 0.0
      %665 = vmatpush.xpose.msra.mxu0 0.0
      %666 = vmatpush.xpose.msra.mxu0 0.0
      %667 = vmatpush.xpose.msra.mxu0 0.0
      %668 = vmatpush.xpose.msra.mxu0 0.0
      %669 = vmatpush.xpose.msra.mxu0 %v653
      %670 = vmatpush.xpose.msra.mxu0 %v651
      %671 = vmatmul.f32.gmra.mxu0 %v649
      %v672 = vpop.f32.mrf.mxu0
      %v673 = vadd.f32 0.0, %v672
      %674 = vdwg.mxu0
      %v675 = vmul.f32 %v673, 0.35355338
      %v676 = vsel %vm523, -1e+10, %v675
      %v677 = vsel %vm525, %v676, -inf
      %678 = vmax.xlane.f32.xlu0 %v677
      %v679 = vpop.xlane.xlu0 %678
      %v680 = vsub.f32 %v676, %v679
      %v681 = vmul.f32 %v680, 1.442695
      %v682 = vpow.pop %v681
      %v683 = vsel %vm525, %v682, 0.0
      %684 = vadd.xlane.f32.xlu0 %v683
      %v685 = vpop.xlane.xlu0 %684
      %v686 = vrcp.pop %v685
      %v687 = vmul.f32 %v682, %v686
      %688 = vrot.lane.b32.xlu0 %v487, 80
      %v689 = vpop.permute.xlu0 %688
      %690 = vrot.lane.b32.xlu0 %v490, 80
      %v691 = vpop.permute.xlu0 %690
      %v694 = vsel %vm525, %v687, 0
      %v696 = vsel %vm545, %v691, 0
      %698 = vmatpush.msra.mxu0 0.0
      %699 = vmatpush.msra.mxu0 0.0
      %700 = vmatpush.msra.mxu0 0.0
      %701 = vmatpush.msra.mxu0 0.0
      %702 = vmatpush.msra.mxu0 0.0
      %703 = vmatpush.msra.mxu0 0.0
      %704 = vmatpush.msra.mxu0 0.0
      %705 = vmatpush.msra.mxu0 0.0
      %706 = vmatpush.msra.mxu0 0.0
      %707 = vmatpush.msra.mxu0 0.0
      %708 = vmatpush.msra.mxu0 0.0
      %709 = vmatpush.msra.mxu0 0.0
      %710 = vmatpush.msra.mxu0 0.0
      %711 = vmatpush.msra.mxu0 0.0
      %712 = vmatpush.msra.mxu0 %v696
      %713 = vmatpush.msra.mxu0 %v689
      %714 = vmatmul.f32.gmra.mxu0 %v694
      %v715 = vpop.f32.mrf.mxu0
      %v716 = vadd.f32 0.0, %v715
      %717 = vdwg.mxu0
      %718 = vrot.lane.b32.xlu0 %v453, 104
      %v719 = vpop.permute.xlu0 %718
      %720 = vrot.lane.b32.xlu0 %v487, 104
      %v721 = vpop.permute.xlu0 %720
      %722 = vrot.lane.b32.xlu0 %v490, 104
      %v723 = vpop.permute.xlu0 %722
      %v724 = vsel %vm492, %v719, 0
      %v726 = vsel %vm492, %v721, 0
      %v728 = vsel %vm492, %v723, 0
      %730 = vmatpush.xpose.msra.mxu0 0.0
      %731 = vmatpush.xpose.msra.mxu0 0.0
      %732 = vmatpush.xpose.msra.mxu0 0.0
      %733 = vmatpush.xpose.msra.mxu0 0.0
      %734 = vmatpush.xpose.msra.mxu0 0.0
      %735 = vmatpush.xpose.msra.mxu0 0.0
      %736 = vmatpush.xpose.msra.mxu0 0.0
      %737 = vmatpush.xpose.msra.mxu0 0.0
      %738 = vmatpush.xpose.msra.mxu0 0.0
      %739 = vmatpush.xpose.msra.mxu0 0.0
      %740 = vmatpush.xpose.msra.mxu0 0.0
      %741 = vmatpush.xpose.msra.mxu0 0.0
      %742 = vmatpush.xpose.msra.mxu0 0.0
      %743 = vmatpush.xpose.msra.mxu0 0.0
      %744 = vmatpush.xpose.msra.mxu0 %v728
      %745 = vmatpush.xpose.msra.mxu0 %v726
      %746 = vmatmul.f32.gmra.mxu0 %v724
      %v747 = vpop.f32.mrf.mxu0
      %v748 = vadd.f32 0.0, %v747
      %749 = vdwg.mxu0
      %v750 = vmul.f32 %v748, 0.35355338
      %v751 = vsel %vm523, -1e+10, %v750
      %v752 = vsel %vm525, %v751, -inf
      %753 = vmax.xlane.f32.xlu0 %v752
      %v754 = vpop.xlane.xlu0 %753
      %v755 = vsub.f32 %v751, %v754
      %v756 = vmul.f32 %v755, 1.442695
      %v757 = vpow.pop %v756
      %v758 = vsel %vm525, %v757, 0.0
      %759 = vadd.xlane.f32.xlu0 %v758
      %v760 = vpop.xlane.xlu0 %759
      %v761 = vrcp.pop %v760
      %v762 = vmul.f32 %v757, %v761
      %763 = vrot.lane.b32.xlu0 %v487, 72
      %v764 = vpop.permute.xlu0 %763
      %765 = vrot.lane.b32.xlu0 %v490, 72
      %v766 = vpop.permute.xlu0 %765
      %v769 = vsel %vm525, %v762, 0
      %v771 = vsel %vm545, %v766, 0
      %773 = vmatpush.msra.mxu0 0.0
      %774 = vmatpush.msra.mxu0 0.0
      %775 = vmatpush.msra.mxu0 0.0
      %776 = vmatpush.msra.mxu0 0.0
      %777 = vmatpush.msra.mxu0 0.0
      %778 = vmatpush.msra.mxu0 0.0
      %779 = vmatpush.msra.mxu0 0.0
      %780 = vmatpush.msra.mxu0 0.0
      %781 = vmatpush.msra.mxu0 0.0
      %782 = vmatpush.msra.mxu0 0.0
      %783 = vmatpush.msra.mxu0 0.0
      %784 = vmatpush.msra.mxu0 0.0
      %785 = vmatpush.msra.mxu0 0.0
      %786 = vmatpush.msra.mxu0 0.0
      %787 = vmatpush.msra.mxu0 %v771
      %788 = vmatpush.msra.mxu0 %v764
      %789 = vmatmul.f32.gmra.mxu0 %v769
      %v790 = vpop.f32.mrf.mxu0
      %v791 = vadd.f32 0.0, %v790
      %792 = vdwg.mxu0
      %794 = vrot.lane.b32.xlu0 %v641, 8
      %v795 = vpop.permute.xlu0 %794
      %798 = vrot.lane.b32.xlu0 %v716, 16
      %v799 = vpop.permute.xlu0 %798
      %802 = vrot.lane.b32.xlu0 %v791, 24
      %v803 = vpop.permute.xlu0 %802
      %v805 = vsel %vm492, %v566, %v795
      %vm806 = vcmask 130048
      %v807 = vsel %vm806, %v805, %v799
      %vm808 = vcmask 195584
      %v809 = vsel %vm808, %v807, %v803
      %v810 = vld [vmem:[%s7] sm:$0xff]
      %v811 = vld [vmem:[%s7 + $0x8] sm:$0xff]
      %v812 = vld [vmem:[%s7 + $0x10] sm:$0xff]
      %v813 = vld [vmem:[%s7 + $0x18] sm:$0xff]
      %v814 = vld [vmem:[%s8] sm:$0x1]
      %v816 = vperm.slane %v814, 0
      %v819 = vsel %vm431, %v809, 0
      %821 = vmatpush.msra.mxu0 0.0
      %822 = vmatpush.msra.mxu0 0.0
      %823 = vmatpush.msra.mxu0 0.0
      %824 = vmatpush.msra.mxu0 0.0
      %825 = vmatpush.msra.mxu0 0.0
      %826 = vmatpush.msra.mxu0 0.0
      %827 = vmatpush.msra.mxu0 0.0
      %828 = vmatpush.msra.mxu0 0.0
      %829 = vmatpush.msra.mxu0 0.0
      %830 = vmatpush.msra.mxu0 0.0
      %831 = vmatpush.msra.mxu0 0.0
      %832 = vmatpush.msra.mxu0 0.0
      %833 = vmatpush.msra.mxu0 %v813
      %834 = vmatpush.msra.mxu0 %v812
      %835 = vmatpush.msra.mxu0 %v811
      %836 = vmatpush.msra.mxu0 %v810
      %837 = vmatmul.f32.gmra.mxu0 %v819
      %v838 = vpop.f32.mrf.mxu0
      %v839 = vadd.f32 %v816, %v838
      %840 = vdwg.mxu0
      %v841 = vadd.f32 %v419, %v839
      %v842 = vld [vmem:[%s9] sm:$0x1]
      %v843 = vld [vmem:[%s10] sm:$0x1]
      %v844 = vsel %vm431, %v841, 0.0
      %845 = vadd.xlane.f32.xlu0 %v844
      %v846 = vpop.xlane.xlu0 %845
      %v847 = vrcp.pop 32.0
      %v848 = vmul.f32 32.0, %v847
      %v849 = vsub.f32 1.0, %v848
      %v850 = vmul.f32 %v847, %v849
      %v851 = vadd.f32 %v847, %v850
      %vm852 = vweird.f32 %v847
      %v853 = vsel %vm852, %v847, %v851
      %v854 = vmul.f32 %v846, %v853
      %v855 = vsub.f32 %v841, %v854
      %v856 = vmul.f32 %v855, %v855
      %v857 = vsel %vm431, %v856, 0.0
      %858 = vadd.xlane.f32.xlu0 %v857
      %v859 = vpop.xlane.xlu0 %858
      %v860 = vmul.f32 %v859, %v853
      %v861 = vadd.f32 %v860, 1e-05
      %v862 = vrsqrt.pop %v861
      %v863 = vmul.f32 %v862, %v861
      %v864 = vmul.f32 %v863, %v862
      %v865 = vmul.f32 0.5, %v864
      %v866 = vsub.f32 1.5, %v865
      %v867 = vmul.f32 %v862, %v866
      %vm868 = vweird.f32 %v861
      %vm869 = vweird.f32 %v862
      %vm870 = vmor %vm868, %vm869
      %v871 = vsel %vm870, %v862, %v867
      %v872 = vmul.f32 %v855, %v871
      %v874 = vperm.slane %v842, 0
      %v876 = vmul.f32 %v872, %v874
      %v878 = vperm.slane %v843, 0
      %v880 = vadd.f32 %v876, %v878
      %881 = vst.msk [vmem:[%s418] sm:$0xff] %vm431, %v880
      %p882 = scmp.lt.s32.totalorder %s22, 1
      %s883 = scalar_select %p882, %s22, 1
      %s884 = smul.addr %s883, 8
      %s885 = scalar_lea.vmem %s11, %s884
      // Predicated region
      $region65: #{decoder_forward.8} parent=63 // pred_check
        %p886 = pneg %p286
      $region66: #{decoder_forward.8} parent=63 // pred_check_branch
        %888 = sbr.rel (%p886) target = $region68
      $region67: #{decoder_forward.8} parent=63 // pred_region
        _
      $region68: #{decoder_forward.8} parent=63 // pred_fallthru
        _
    $region64: #{decoder_forward.8} parent=5 // pred_fallthru
      _
    %p889 = scmp.le.s32.totalorder 2, %s17
    // Predicated region
    $region69: #{decoder_forward.8} parent=5 // pred_check
      %p890 = pneg %p889
    $region70: #{decoder_forward.8} parent=5 // pred_check_branch
      %892 = sbr.rel (%p890) target = $region72
    $region71: #{decoder_forward.8} parent=5 // pred_region
      %s893 = ssub.s32 %s17, 2
      // Predicated region
      $region73: #{decoder_forward.8} parent=71 // pred_check
        %p894 = pneg %p292
      $region74: #{decoder_forward.8} parent=71 // pred_check_branch
        %896 = sbr.rel (%p894) target = $region76
      $region75: #{decoder_forward.8} parent=71 // pred_region
        %p897 = scmp.lt.s32.totalorder %s23, 1
        %s898 = scalar_select %p897, %s23, 1
        %s899 = smul.addr %s898, 8
        %s900 = scalar_lea.vmem %s11, %s899
      $region76: #{decoder_forward.8} parent=71 // pred_fallthru
        _
    $region72: #{decoder_forward.8} parent=5 // pred_fallthru
      _
  $region6: #{decoder_forward.8} parent=0 // loop_footer
    %s21 = sadd.s32 1, %s17
  $region7: #{decoder_forward.8} parent=0 // loop_footer_branch
    %16 = sbr.rel target = $region3
  $region8: #{decoder_forward.8} parent=0 // loop_exit
    _

// kernel: decoder_forward.7
$region0: #{decoder_forward.7}
  #allocation0 [shape = 'u32[]', space=smem, size = 0x4, offset = 0x4, fixed_abs, tag = 'smem constant byte address 0x4 - core index']
  #allocation1 [shape = 'u32[72,128]{1,0:T(1,128)}', space=vmem, size = 0x9000, scoped, tag = 'internal scratch']
  %s0 = inlined_call_operand.vmem [shape: f32[2,8,32], index: 0, kind: input, shape index: {}, may-alias: {0,1}]
  %s1 = inlined_call_operand.vmem [shape: f32[2,8,32], index: 1, kind: input, shape index: {}, may-alias: {0,1}]
  %s2 = inlined_call_operand.vmem [shape: f32[2,1,8,8], index: 2, kind: input, shape index: {}]
  %s3 = inlined_call_operand.vmem [shape: f32[32,32], index: 3, kind: input, shape index: {}]
  %s4 = inlined_call_operand.vmem [shape: f32[1,32], index: 4, kind: input, shape index: {}]
  %s5 = inlined_call_operand.vmem [shape: f32[32,64], index: 5, kind: input, shape index: {}]
  %s6 = inlined_call_operand.vmem [shape: f32[1,64], index: 6, kind: input, shape index: {}]
  %s7 = inlined_call_operand.vmem [shape: f32[32,32], index: 7, kind: input, shape index: {}]
  %s8 = inlined_call_operand.vmem [shape: f32[1,32], index: 8, kind: input, shape index: {}]
  %s9 = inlined_call_operand.vmem [shape: f32[1,32], index: 9, kind: input, shape index: {}]
  %s10 = inlined_call_operand.vmem [shape: f32[1,32], index: 10, kind: input, shape index: {}]
  %s11 = inlined_call_operand.vmem [shape: f32[2,8,32], index: 11, kind: output, shape index: {}]
  %s12 = sld [smem:[#allocation0]]
  $region77: #{decoder_forward.7} parent=0
    _
  %s14 = ssub.s32 1, %s12
  %s15 = scalar_select 0, %s14, %s12
  loop: start=0, step=1, limit=4
  $region2: #{decoder_forward.7} parent=0 // loop_pre_header
    _
  $region3: #{decoder_forward.7} parent=0 // loop_header
    %s17 = sphi 0, %s21
    %p18 = scmp.ge.s32.totalorder %s17, 4
    %s27 = sphi 0, %s29
    %s30 = sphi 0, %s27
    %s31 = sphi 0, %s30
    %s47 = sphi 0, %s31
    %s53 = sphi 0, %s55
    %s56 = sphi 0, %s53
    %s57 = sphi 0, %s56
    %s73 = sphi 0, %s57
    %s79 = sphi 0, %s81
    %s82 = sphi 0, %s79
    %s83 = sphi 0, %s82
    %s99 = sphi 0, %s83
    %s103 = sphi 0, %s103
    %s105 = sphi 0, %s103
    %s106 = sphi 0, %s105
    %s120 = sphi 0, %s106
    %s124 = sphi 0, %s124
    %s126 = sphi 0, %s124
    %s127 = sphi 0, %s126
    %s141 = sphi 0, %s127
    %s145 = sphi 0, %s145
    %s147 = sphi 0, %s145
    %s148 = sphi 0, %s147
    %s162 = sphi 0, %s148
    %s166 = sphi 0, %s166
    %s168 = sphi 0, %s166
    %s169 = sphi 0, %s168
    %s183 = sphi 0, %s169
    %s187 = sphi 0, %s187
    %s189 = sphi 0, %s187
    %s190 = sphi 0, %s189
    %s204 = sphi 0, %s190
    %s208 = sphi 0, %s208
    %s210 = sphi 0, %s208
    %s211 = sphi 0, %s210
    %s225 = sphi 0, %s211
    %s229 = sphi 0, %s229
    %s231 = sphi 0, %s229
    %s232 = sphi 0, %s231
    %s246 = sphi 0, %s232
    %s250 = sphi 0, %s250
    %s252 = sphi 0, %s250
    %s253 = sphi 0, %s252
    %s267 = sphi 0, %s253
    %s273 = sphi 0, %s275
    %s276 = sphi 0, %s273
    %s277 = sphi 0, %s276
    %s293 = sphi 0, %s277
  $region4: #{decoder_forward.7} parent=0 // loop_header_branch
    %20 = sbr.rel (%p18) target = $region8
  $region5: #{decoder_forward.7} parent=0 // loop_body
    %s22 = ssub.s32 %s17, 1
    %s23 = ssub.s32 %s17, 2
    %s24 = sadd.s32 %s17, 1
    %s25 = ssub.s32 %s17, %s24
    %p26 = scmp.eq.s32.totalorder %s25, 0
    %s28 = sadd.s32 %s27, 1
    %s29 = scalar_select %p26, %s27, %s28
    %p32 = pneg %p26
    %p33 = scmp.eq.s32.totalorder %s17, 1
    %p34 = por %p32, %p33
    %p35 = scmp.ne.s32.totalorder %s27, %s30
    %p36 = scmp.eq.s32.totalorder %s17, 0
    %p37 = por %p35, %p36
    %p38 = scmp.ne.s32.totalorder %s27, %s30
    %p39 = scmp.eq.s32.totalorder %s22, 1
    %p40 = por %p38, %p39
    %p41 = scmp.ne.s32.totalorder %s30, %s31
    %p42 = scmp.eq.s32.totalorder %s22, 0
    %p43 = por %p41, %p42
    %p44 = scmp.ne.s32.totalorder %s30, %s31
    %p45 = scmp.eq.s32.totalorder %s23, 1
    %p46 = por %p44, %p45
    %p48 = scmp.ne.s32.totalorder %s31, %s47
    %p49 = scmp.eq.s32.totalorder %s23, 0
    %p50 = por %p48, %p49
    %s51 = ssub.s32 %s17, %s24
    %p52 = scmp.eq.s32.totalorder %s51, 0
    %s54 = sadd.s32 %s53, 1
    %s55 = scalar_select %p52, %s53, %s54
    %p58 = pneg %p52
    %p59 = scmp.eq.s32.totalorder %s17, 1
    %p60 = por %p58, %p59
    %p61 = scmp.ne.s32.totalorder %s53, %s56
    %p62 = scmp.eq.s32.totalorder %s17, 0
    %p63 = por %p61, %p62
    %p64 = scmp.ne.s32.totalorder %s53, %s56
    %p65 = scmp.eq.s32.totalorder %s22, 1
    %p66 = por %p64, %p65
    %p67 = scmp.ne.s32.totalorder %s56, %s57
    %p68 = scmp.eq.s32.totalorder %s22, 0
    %p69 = por %p67, %p68
    %p70 = scmp.ne.s32.totalorder %s56, %s57
    %p71 = scmp.eq.s32.totalorder %s23, 1
    %p72 = por %p70, %p71
    %p74 = scmp.ne.s32.totalorder %s57, %s73
    %p75 = scmp.eq.s32.totalorder %s23, 0
    %p76 = por %p74, %p75
    %s77 = ssub.s32 %s17, %s24
    %p78 = scmp.eq.s32.totalorder %s77, 0
    %s80 = sadd.s32 %s79, 1
    %s81 = scalar_select %p78, %s79, %s80
    %p84 = pneg %p78
    %p85 = scmp.eq.s32.totalorder %s17, 1
    %p86 = por %p84, %p85
    %p87 = scmp.ne.s32.totalorder %s79, %s82
    %p88 = scmp.eq.s32.totalorder %s17, 0
    %p89 = por %p87, %p88
    %p90 = scmp.ne.s32.totalorder %s79, %s82
    %p91 = scmp.eq.s32.totalorder %s22, 1
    %p92 = por %p90, %p91
    %p93 = scmp.ne.s32.totalorder %s82, %s83
    %p94 = scmp.eq.s32.totalorder %s22, 0
    %p95 = por %p93, %p94
    %p96 = scmp.ne.s32.totalorder %s82, %s83
    %p97 = scmp.eq.s32.totalorder %s23, 1
    %p98 = por %p96, %p97
    %p100 = scmp.ne.s32.totalorder %s83, %s99
    %p101 = scmp.eq.s32.totalorder %s23, 0
    %p102 = por %p100, %p101
    %s104 = sadd.s32 %s103, 1
    %p107 = scmp.eq.s32.totalorder %s17, 1
    %p108 = scmp.ne.s32.totalorder %s103, %s105
    %p109 = scmp.eq.s32.totalorder %s17, 0
    %p110 = por %p108, %p109
    %p111 = scmp.ne.s32.totalorder %s103, %s105
    %p112 = scmp.eq.s32.totalorder %s22, 1
    %p113 = por %p111, %p112
    %p114 = scmp.ne.s32.totalorder %s105, %s106
    %p115 = scmp.eq.s32.totalorder %s22, 0
    %p116 = por %p114, %p115
    %p117 = scmp.ne.s32.totalorder %s105, %s106
    %p118 = scmp.eq.s32.totalorder %s23, 1
    %p119 = por %p117, %p118
    %p121 = scmp.ne.s32.totalorder %s106, %s120
    %p122 = scmp.eq.s32.totalorder %s23, 0
    %p123 = por %p121, %p122
    %s125 = sadd.s32 %s124, 1
    %p128 = scmp.eq.s32.totalorder %s17, 1
    %p129 = scmp.ne.s32.totalorder %s124, %s126
    %p130 = scmp.eq.s32.totalorder %s17, 0
    %p131 = por %p129, %p130
    %p132 = scmp.ne.s32.totalorder %s124, %s126
    %p133 = scmp.eq.s32.totalorder %s22, 1
    %p134 = por %p132, %p133
    %p135 = scmp.ne.s32.totalorder %s126, %s127
    %p136 = scmp.eq.s32.totalorder %s22, 0
    %p137 = por %p135, %p136
    %p138 = scmp.ne.s32.totalorder %s126, %s127
    %p139 = scmp.eq.s32.totalorder %s23, 1
    %p140 = por %p138, %p139
    %p142 = scmp.ne.s32.totalorder %s127, %s141
    %p143 = scmp.eq.s32.totalorder %s23, 0
    %p144 = por %p142, %p143
    %s146 = sadd.s32 %s145, 1
    %p149 = scmp.eq.s32.totalorder %s17, 1
    %p150 = scmp.ne.s32.totalorder %s145, %s147
    %p151 = scmp.eq.s32.totalorder %s17, 0
    %p152 = por %p150, %p151
    %p153 = scmp.ne.s32.totalorder %s145, %s147
    %p154 = scmp.eq.s32.totalorder %s22, 1
    %p155 = por %p153, %p154
    %p156 = scmp.ne.s32.totalorder %s147, %s148
    %p157 = scmp.eq.s32.totalorder %s22, 0
    %p158 = por %p156, %p157
    %p159 = scmp.ne.s32.totalorder %s147, %s148
    %p160 = scmp.eq.s32.totalorder %s23, 1
    %p161 = por %p159, %p160
    %p163 = scmp.ne.s32.totalorder %s148, %s162
    %p164 = scmp.eq.s32.totalorder %s23, 0
    %p165 = por %p163, %p164
    %s167 = sadd.s32 %s166, 1
    %p170 = scmp.eq.s32.totalorder %s17, 1
    %p171 = scmp.ne.s32.totalorder %s166, %s168
    %p172 = scmp.eq.s32.totalorder %s17, 0
    %p173 = por %p171, %p172
    %p174 = scmp.ne.s32.totalorder %s166, %s168
    %p175 = scmp.eq.s32.totalorder %s22, 1
    %p176 = por %p174, %p175
    %p177 = scmp.ne.s32.totalorder %s168, %s169
    %p178 = scmp.eq.s32.totalorder %s22, 0
    %p179 = por %p177, %p178
    %p180 = scmp.ne.s32.totalorder %s168, %s169
    %p181 = scmp.eq.s32.totalorder %s23, 1
    %p182 = por %p180, %p181
    %p184 = scmp.ne.s32.totalorder %s169, %s183
    %p185 = scmp.eq.s32.totalorder %s23, 0
    %p186 = por %p184, %p185
    %s188 = sadd.s32 %s187, 1
    %p191 = scmp.eq.s32.totalorder %s17, 1
    %p192 = scmp.ne.s32.totalorder %s187, %s189
    %p193 = scmp.eq.s32.totalorder %s17, 0
    %p194 = por %p192, %p193
    %p195 = scmp.ne.s32.totalorder %s187, %s189
    %p196 = scmp.eq.s32.totalorder %s22, 1
    %p197 = por %p195, %p196
    %p198 = scmp.ne.s32.totalorder %s189, %s190
    %p199 = scmp.eq.s32.totalorder %s22, 0
    %p200 = por %p198, %p199
    %p201 = scmp.ne.s32.totalorder %s189, %s190
    %p202 = scmp.eq.s32.totalorder %s23, 1
    %p203 = por %p201, %p202
    %p205 = scmp.ne.s32.totalorder %s190, %s204
    %p206 = scmp.eq.s32.totalorder %s23, 0
    %p207 = por %p205, %p206
    %s209 = sadd.s32 %s208, 1
    %p212 = scmp.eq.s32.totalorder %s17, 1
    %p213 = scmp.ne.s32.totalorder %s208, %s210
    %p214 = scmp.eq.s32.totalorder %s17, 0
    %p215 = por %p213, %p214
    %p216 = scmp.ne.s32.totalorder %s208, %s210
    %p217 = scmp.eq.s32.totalorder %s22, 1
    %p218 = por %p216, %p217
    %p219 = scmp.ne.s32.totalorder %s210, %s211
    %p220 = scmp.eq.s32.totalorder %s22, 0
    %p221 = por %p219, %p220
    %p222 = scmp.ne.s32.totalorder %s210, %s211
    %p223 = scmp.eq.s32.totalorder %s23, 1
    %p224 = por %p222, %p223
    %p226 = scmp.ne.s32.totalorder %s211, %s225
    %p227 = scmp.eq.s32.totalorder %s23, 0
    %p228 = por %p226, %p227
    %s230 = sadd.s32 %s229, 1
    %p233 = scmp.eq.s32.totalorder %s17, 1
    %p234 = scmp.ne.s32.totalorder %s229, %s231
    %p235 = scmp.eq.s32.totalorder %s17, 0
    %p236 = por %p234, %p235
    %p237 = scmp.ne.s32.totalorder %s229, %s231
    %p238 = scmp.eq.s32.totalorder %s22, 1
    %p239 = por %p237, %p238
    %p240 = scmp.ne.s32.totalorder %s231, %s232
    %p241 = scmp.eq.s32.totalorder %s22, 0
    %p242 = por %p240, %p241
    %p243 = scmp.ne.s32.totalorder %s231, %s232
    %p244 = scmp.eq.s32.totalorder %s23, 1
    %p245 = por %p243, %p244
    %p247 = scmp.ne.s32.totalorder %s232, %s246
    %p248 = scmp.eq.s32.totalorder %s23, 0
    %p249 = por %p247, %p248
    %s251 = sadd.s32 %s250, 1
    %p254 = scmp.eq.s32.totalorder %s17, 1
    %p255 = scmp.ne.s32.totalorder %s250, %s252
    %p256 = scmp.eq.s32.totalorder %s17, 0
    %p257 = por %p255, %p256
    %p258 = scmp.ne.s32.totalorder %s250, %s252
    %p259 = scmp.eq.s32.totalorder %s22, 1
    %p260 = por %p258, %p259
    %p261 = scmp.ne.s32.totalorder %s252, %s253
    %p262 = scmp.eq.s32.totalorder %s22, 0
    %p263 = por %p261, %p262
    %p264 = scmp.ne.s32.totalorder %s252, %s253
    %p265 = scmp.eq.s32.totalorder %s23, 1
    %p266 = por %p264, %p265
    %p268 = scmp.ne.s32.totalorder %s253, %s267
    %p269 = scmp.eq.s32.totalorder %s23, 0
    %p270 = por %p268, %p269
    %s271 = ssub.s32 %s17, %s24
    %p272 = scmp.eq.s32.totalorder %s271, 0
    %s274 = sadd.s32 %s273, 1
    %s275 = scalar_select %p272, %s273, %s274
    %p278 = pneg %p272
    %p279 = scmp.eq.s32.totalorder %s17, 1
    %p280 = por %p278, %p279
    %p281 = scmp.ne.s32.totalorder %s273, %s276
    %p282 = scmp.eq.s32.totalorder %s17, 0
    %p283 = por %p281, %p282
    %p284 = scmp.ne.s32.totalorder %s273, %s276
    %p285 = scmp.eq.s32.totalorder %s22, 1
    %p286 = por %p284, %p285
    %p287 = scmp.ne.s32.totalorder %s276, %s277
    %p288 = scmp.eq.s32.totalorder %s22, 0
    %p289 = por %p287, %p288
    %p290 = scmp.ne.s32.totalorder %s276, %s277
    %p291 = scmp.eq.s32.totalorder %s23, 1
    %p292 = por %p290, %p291
    %p294 = scmp.ne.s32.totalorder %s277, %s293
    %p295 = scmp.eq.s32.totalorder %s23, 0
    %p296 = por %p294, %p295
    %p297 = scmp.le.s32.totalorder 1, %s17
    %p298 = scmp.lt.s32.totalorder %s17, 3
    %p299 = pnand %p297, %p298
    %p300 = pneg %p299
    // Predicated region
    $region9: #{decoder_forward.7} parent=5 // pred_check
      _
    $region10: #{decoder_forward.7} parent=5 // pred_check_branch
      %302 = sbr.rel (%p299) target = $region12
    $region11: #{decoder_forward.7} parent=5 // pred_region
      %s303 = ssub.s32 %s17, 1
      // Predicated region
      $region13: #{decoder_forward.7} parent=11 // pred_check
        %p304 = pneg %p116
      $region14: #{decoder_forward.7} parent=11 // pred_check_branch
        %306 = sbr.rel (%p304) target = $region16
      $region15: #{decoder_forward.7} parent=11 // pred_region
        _
      $region16: #{decoder_forward.7} parent=11 // pred_fallthru
        _
      // Predicated region
      $region17: #{decoder_forward.7} parent=11 // pred_check
        %p307 = pneg %p137
      $region18: #{decoder_forward.7} parent=11 // pred_check_branch
        %309 = sbr.rel (%p307) target = $region20
      $region19: #{decoder_forward.7} parent=11 // pred_region
        _
      $region20: #{decoder_forward.7} parent=11 // pred_fallthru
        _
      // Predicated region
      $region21: #{decoder_forward.7} parent=11 // pred_check
        %p310 = pneg %p158
      $region22: #{decoder_forward.7} parent=11 // pred_check_branch
        %312 = sbr.rel (%p310) target = $region24
      $region23: #{decoder_forward.7} parent=11 // pred_region
        _
      $region24: #{decoder_forward.7} parent=11 // pred_fallthru
        _
      // Predicated region
      $region25: #{decoder_forward.7} parent=11 // pred_check
        %p313 = pneg %p179
      $region26: #{decoder_forward.7} parent=11 // pred_check_branch
        %315 = sbr.rel (%p313) target = $region28
      $region27: #{decoder_forward.7} parent=11 // pred_region
        _
      $region28: #{decoder_forward.7} parent=11 // pred_fallthru
        _
      // Predicated region
      $region29: #{decoder_forward.7} parent=11 // pred_check
        %p316 = pneg %p200
      $region30: #{decoder_forward.7} parent=11 // pred_check_branch
        %318 = sbr.rel (%p316) target = $region32
      $region31: #{decoder_forward.7} parent=11 // pred_region
        _
      $region32: #{decoder_forward.7} parent=11 // pred_fallthru
        _
      // Predicated region
      $region33: #{decoder_forward.7} parent=11 // pred_check
        %p319 = pneg %p221
      $region34: #{decoder_forward.7} parent=11 // pred_check_branch
        %321 = sbr.rel (%p319) target = $region36
      $region35: #{decoder_forward.7} parent=11 // pred_region
        _
      $region36: #{decoder_forward.7} parent=11 // pred_fallthru
        _
      // Predicated region
      $region37: #{decoder_forward.7} parent=11 // pred_check
        %p322 = pneg %p242
      $region38: #{decoder_forward.7} parent=11 // pred_check_branch
        %324 = sbr.rel (%p322) target = $region40
      $region39: #{decoder_forward.7} parent=11 // pred_region
        _
      $region40: #{decoder_forward.7} parent=11 // pred_fallthru
        _
      // Predicated region
      $region41: #{decoder_forward.7} parent=11 // pred_check
        %p325 = pneg %p263
      $region42: #{decoder_forward.7} parent=11 // pred_check_branch
        %327 = sbr.rel (%p325) target = $region44
      $region43: #{decoder_forward.7} parent=11 // pred_region
        _
      $region44: #{decoder_forward.7} parent=11 // pred_fallthru
        _
    $region12: #{decoder_forward.7} parent=5 // pred_fallthru
      _
    %p328 = scmp.lt.s32.totalorder %s17, 2
    // Predicated region
    $region45: #{decoder_forward.7} parent=5 // pred_check
      %p329 = pneg %p328
    $region46: #{decoder_forward.7} parent=5 // pred_check_branch
      %331 = sbr.rel (%p329) target = $region48
    $region47: #{decoder_forward.7} parent=5 // pred_region
      // Predicated region
      $region49: #{decoder_forward.7} parent=47 // pred_check
        %p332 = pneg %p37
      $region50: #{decoder_forward.7} parent=47 // pred_check_branch
        %334 = sbr.rel (%p332) target = $region52
      $region51: #{decoder_forward.7} parent=47 // pred_region
        %p335 = scmp.lt.s32.totalorder %s17, 1
        %s336 = scalar_select %p335, %s17, 1
        %s337 = smul.addr %s336, 8
        %s338 = scalar_lea.vmem %s0, %s337
      $region52: #{decoder_forward.7} parent=47 // pred_fallthru
        _
      // Predicated region
      $region53: #{decoder_forward.7} parent=47 // pred_check
        %p339 = pneg %p63
      $region54: #{decoder_forward.7} parent=47 // pred_check_branch
        %341 = sbr.rel (%p339) target = $region56
      $region55: #{decoder_forward.7} parent=47 // pred_region
        %p342 = scmp.lt.s32.totalorder %s17, 1
        %s343 = scalar_select %p342, %s17, 1
        %s344 = smul.addr %s343, 8
        %s345 = scalar_lea.vmem %s1, %s344
      $region56: #{decoder_forward.7} parent=47 // pred_fallthru
        _
      // Predicated region
      $region57: #{decoder_forward.7} parent=47 // pred_check
        %p346 = pneg %p89
      $region58: #{decoder_forward.7} parent=47 // pred_check_branch
        %348 = sbr.rel (%p346) target = $region60
      $region59: #{decoder_forward.7} parent=47 // pred_region
        %p349 = scmp.lt.s32.totalorder %s17, 1
        %s350 = scalar_select %p349, %s17, 1
        %s351 = smul.addr %s350, 8
        %s352 = scalar_lea.vmem %s2, %s351
      $region60: #{decoder_forward.7} parent=47 // pred_fallthru
        _
    $region48: #{decoder_forward.7} parent=5 // pred_fallthru
      _
    %p353 = scmp.le.s32.totalorder 1, %s17
    %p354 = scmp.lt.s32.totalorder %s17, 3
    %p355 = pnand %p353, %p354
    %p356 = pneg %p355
    // Predicated region
    $region61: #{decoder_forward.7} parent=5 // pred_check
      _
    $region62: #{decoder_forward.7} parent=5 // pred_check_branch
      %358 = sbr.rel (%p355) target = $region64
    $region63: #{decoder_forward.7} parent=5 // pred_region
      %s359 = ssub.s32 %s17, 1
      %p360 = scmp.lt.s32.totalorder %s22, 1
      %s361 = scalar_select %p360, %s22, 1
      %s362 = smul.addr %s361, 8
      %s363 = scalar_lea.vmem %s0, %s362
      %p364 = pneg %p43
      %p365 = pneg %p40
      %p366 = scmp.lt.s32.totalorder %s22, 1
      %s367 = scalar_select %p366, %s22, 1
      %s368 = smul.addr %s367, 8
      %s369 = scalar_lea.vmem %s1, %s368
      %p370 = pneg %p69
      %p371 = pneg %p66
      %p372 = scmp.lt.s32.totalorder %s22, 1
      %s373 = scalar_select %p372, %s22, 1
      %s374 = smul.addr %s373, 8
      %s375 = scalar_lea.vmem %s2, %s374
      %p376 = pneg %p95
      %p377 = pneg %p92
      %p378 = pneg %p116
      %p379 = pneg %p113
      %p380 = pneg %p137
      %p381 = pneg %p134
      %p382 = pneg %p158
      %p383 = pneg %p155
      %p384 = pneg %p179
      %p385 = pneg %p176
      %p386 = pneg %p200
      %p387 = pneg %p197
      %p388 = pneg %p221
      %p389 = pneg %p218
      %p390 = pneg %p242
      %p391 = pneg %p239
      %p392 = pneg %p263
      %p393 = pneg %p260
      %p394 = pneg %p289
      %p395 = pneg %p286
      %p396 = scmp.lt.s32.totalorder %s22, 1
      %s397 = scalar_select %p396, %s22, 1
      %s398 = smul.addr %s397, 8
      %s399 = scalar_lea.vmem %s11, %s398
      %p400 = scmp.lt.s32.totalorder %s22, 1
      %s401 = scalar_select %p400, %s22, 1
      %s402 = smul.addr %s401, 8
      %s403 = scalar_lea.vmem %s0, %s402
      %p404 = scmp.lt.s32.totalorder %s22, 1
      %s405 = scalar_select %p404, %s22, 1
      %s406 = smul.addr %s405, 8
      %s407 = scalar_lea.vmem %s1, %s406
      %p408 = scmp.lt.s32.totalorder %s22, 1
      %s409 = scalar_select %p408, %s22, 1
      %s410 = smul.addr %s409, 8
      %s411 = scalar_lea.vmem %s2, %s410
      %p412 = scmp.lt.s32.totalorder %s22, 1
      %s413 = scalar_select %p412, %s22, 1
      %s414 = smul.addr %s413, 8
      %s415 = scalar_lea.vmem %s11, %s414
      %v416 = vld [vmem:[%s403] sm:$0xff]
      %v417 = vld [vmem:[%s407] sm:$0xff]
      %v418 = vld [vmem:[%s411] sm:$0xff]
      %v419 = vld [vmem:[%s3] sm:$0xff]
      %v420 = vld [vmem:[%s3 + $0x8] sm:$0xff]
      %v421 = vld [vmem:[%s3 + $0x10] sm:$0xff]
      %v422 = vld [vmem:[%s3 + $0x18] sm:$0xff]
      %v423 = vld [vmem:[%s4] sm:$0x1]
      %v425 = vperm.slane %v423, 0
      %vm427 = vcmask 261120
      %v429 = vsel %vm427, %v416, 0
      %431 = vmatpush.msra.mxu0 0.0
      %432 = vmatpush.msra.mxu0 0.0
      %433 = vmatpush.msra.mxu0 0.0
      %434 = vmatpush.msra.mxu0 0.0
      %435 = vmatpush.msra.mxu0 0.0
      %436 = vmatpush.msra.mxu0 0.0
      %437 = vmatpush.msra.mxu0 0.0
      %438 = vmatpush.msra.mxu0 0.0
      %439 = vmatpush.msra.mxu0 0.0
      %440 = vmatpush.msra.mxu0 0.0
      %441 = vmatpush.msra.mxu0 0.0
      %442 = vmatpush.msra.mxu0 0.0
      %443 = vmatpush.msra.mxu0 %v422
      %444 = vmatpush.msra.mxu0 %v421
      %445 = vmatpush.msra.mxu0 %v420
      %446 = vmatpush.msra.mxu0 %v419
      %447 = vmatmul.f32.gmra.mxu0 %v429
      %v448 = vpop.f32.mrf.mxu0
      %v449 = vadd.f32 %v425, %v448
      %450 = vdwg.mxu0
      %v451 = vld [vmem:[%s5] sm:$0xff]
      %v452 = vld [vmem:[%s5 + $0x8] sm:$0xff]
      %v453 = vld [vmem:[%s5 + $0x10] sm:$0xff]
      %v454 = vld [vmem:[%s5 + $0x18] sm:$0xff]
      %v455 = vld [vmem:[%s6] sm:$0x1]
      %v457 = vperm.slane %v455, 0
      %v460 = vsel %vm427, %v417, 0
      %462 = vmatpush.msra.mxu0 0.0
      %463 = vmatpush.msra.mxu0 0.0
      %464 = vmatpush.msra.mxu0 0.0
      %465 = vmatpush.msra.mxu0 0.0
      %466 = vmatpush.msra.mxu0 0.0
      %467 = vmatpush.msra.mxu0 0.0
      %468 = vmatpush.msra.mxu0 0.0
      %469 = vmatpush.msra.mxu0 0.0
      %470 = vmatpush.msra.mxu0 0.0
      %471 = vmatpush.msra.mxu0 0.0
      %472 = vmatpush.msra.mxu0 0.0
      %473 = vmatpush.msra.mxu0 0.0
      %474 = vmatpush.msra.mxu0 %v454
      %475 = vmatpush.msra.mxu0 %v453
      %476 = vmatpush.msra.mxu0 %v452
      %477 = vmatpush.msra.mxu0 %v451
      %478 = vmatmul.f32.gmra.mxu0 %v460
      %v479 = vpop.f32.mrf.mxu0
      %v480 = vadd.f32 %v457, %v479
      %481 = vdwg.mxu0
      %vm482 = vcmask 64512
      %v484 = vsel %vm482, %v449, 0
      %v487 = vsel %vm482, %v480, 0
      %489 = vmatpush.xpose.msra.mxu0 0.0
      %490 = vmatpush.xpose.msra.mxu0 0.0
      %491 = vmatpush.xpose.msra.mxu0 0.0
      %492 = vmatpush.xpose.msra.mxu0 0.0
      %493 = vmatpush.xpose.msra.mxu0 0.0
      %494 = vmatpush.xpose.msra.mxu0 0.0
      %495 = vmatpush.xpose.msra.mxu0 0.0
      %496 = vmatpush.xpose.msra.mxu0 0.0
      %497 = vmatpush.xpose.msra.mxu0 0.0
      %498 = vmatpush.xpose.msra.mxu0 0.0
      %499 = vmatpush.xpose.msra.mxu0 0.0
      %500 = vmatpush.xpose.msra.mxu0 0.0
      %501 = vmatpush.xpose.msra.mxu0 0.0
      %502 = vmatpush.xpose.msra.mxu0 0.0
      %503 = vmatpush.xpose.msra.mxu0 0.0
      %504 = vmatpush.xpose.msra.mxu0 %v487
      %505 = vmatmul.f32.gmra.mxu0 %v484
      %v506 = vpop.f32.mrf.mxu0
      %v507 = vadd.f32 0.0, %v506
      %508 = vdwg.mxu0
      %v509 = vmul.f32 %v507, 0.35355338
      %vm510 = vcmp.eq.f32.partialorder %v418, 0.0
      %v511 = vsel %vm510, -1e+10, %v509
      %v512 = vsel %vm482, %v511, -inf
      %513 = vmax.xlane.f32.xlu0 %v512
      %v514 = vpop.xlane.xlu0 %513
      %v515 = vsub.f32 %v511, %v514
      %v516 = vmul.f32 %v515, 1.442695
      %v517 = vpow.pop %v516
      %v518 = vsel %vm482, %v517, 0.0
      %519 = vadd.xlane.f32.xlu0 %v518
      %v520 = vpop.xlane.xlu0 %519
      %v521 = vrcp.pop %v520
      %v522 = vmul.f32 %v517, %v521
      %523 = vrot.lane.b32.xlu0 %v480, 96
      %v524 = vpop.permute.xlu0 %523
      %v527 = vsel %vm482, %v522, 0
      %529 = vmatpush.msra.mxu0 0.0
      %530 = vmatpush.msra.mxu0 0.0
      %531 = vmatpush.msra.mxu0 0.0
      %532 = vmatpush.msra.mxu0 0.0
      %533 = vmatpush.msra.mxu0 0.0
      %534 = vmatpush.msra.mxu0 0.0
      %535 = vmatpush.msra.mxu0 0.0
      %536 = vmatpush.msra.mxu0 0.0
      %537 = vmatpush.msra.mxu0 0.0
      %538 = vmatpush.msra.mxu0 0.0
      %539 = vmatpush.msra.mxu0 0.0
      %540 = vmatpush.msra.mxu0 0.0
      %541 = vmatpush.msra.mxu0 0.0
      %542 = vmatpush.msra.mxu0 0.0
      %543 = vmatpush.msra.mxu0 0.0
      %544 = vmatpush.msra.mxu0 %v524
      %545 = vmatmul.f32.gmra.mxu0 %v527
      %v546 = vpop.f32.mrf.mxu0
      %v547 = vadd.f32 0.0, %v546
      %548 = vdwg.mxu0
      %549 = vrot.lane.b32.xlu0 %v449, 120
      %v550 = vpop.permute.xlu0 %549
      %551 = vrot.lane.b32.xlu0 %v480, 120
      %v552 = vpop.permute.xlu0 %551
      %v553 = vsel %vm482, %v550, 0
      %v555 = vsel %vm482, %v552, 0
      %557 = vmatpush.xpose.msra.mxu0 0.0
      %558 = vmatpush.xpose.msra.mxu0 0.0
      %559 = vmatpush.xpose.msra.mxu0 0.0
      %560 = vmatpush.xpose.msra.mxu0 0.0
      %561 = vmatpush.xpose.msra.mxu0 0.0
      %562 = vmatpush.xpose.msra.mxu0 0.0
      %563 = vmatpush.xpose.msra.mxu0 0.0
      %564 = vmatpush.xpose.msra.mxu0 0.0
      %565 = vmatpush.xpose.msra.mxu0 0.0
      %566 = vmatpush.xpose.msra.mxu0 0.0
      %567 = vmatpush.xpose.msra.mxu0 0.0
      %568 = vmatpush.xpose.msra.mxu0 0.0
      %569 = vmatpush.xpose.msra.mxu0 0.0
      %570 = vmatpush.xpose.msra.mxu0 0.0
      %571 = vmatpush.xpose.msra.mxu0 0.0
      %572 = vmatpush.xpose.msra.mxu0 %v555
      %573 = vmatmul.f32.gmra.mxu0 %v553
      %v574 = vpop.f32.mrf.mxu0
      %v575 = vadd.f32 0.0, %v574
      %576 = vdwg.mxu0
      %v577 = vmul.f32 %v575, 0.35355338
      %v578 = vsel %vm510, -1e+10, %v577
      %v579 = vsel %vm482, %v578, -inf
      %580 = vmax.xlane.f32.xlu0 %v579
      %v581 = vpop.xlane.xlu0 %580
      %v582 = vsub.f32 %v578, %v581
      %v583 = vmul.f32 %v582, 1.442695
      %v584 = vpow.pop %v583
      %v585 = vsel %vm482, %v584, 0.0
      %586 = vadd.xlane.f32.xlu0 %v585
      %v587 = vpop.xlane.xlu0 %586
      %v588 = vrcp.pop %v587
      %v589 = vmul.f32 %v584, %v588
      %590 = vrot.lane.b32.xlu0 %v480, 88
      %v591 = vpop.permute.xlu0 %590
      %v594 = vsel %vm482, %v589, 0
      %596 = vmatpush.msra.mxu0 0.0
      %597 = vmatpush.msra.mxu0 0.0
      %598 = vmatpush.msra.mxu0 0.0
      %599 = vmatpush.msra.mxu0 0.0
      %600 = vmatpush.msra.mxu0 0.0
      %601 = vmatpush.msra.mxu0 0.0
      %602 = vmatpush.msra.mxu0 0.0
      %603 = vmatpush.msra.mxu0 0.0
      %604 = vmatpush.msra.mxu0 0.0
      %605 = vmatpush.msra.mxu0 0.0
      %606 = vmatpush.msra.mxu0 0.0
      %607 = vmatpush.msra.mxu0 0.0
      %608 = vmatpush.msra.mxu0 0.0
      %609 = vmatpush.msra.mxu0 0.0
      %610 = vmatpush.msra.mxu0 0.0
      %611 = vmatpush.msra.mxu0 %v591
      %612 = vmatmul.f32.gmra.mxu0 %v594
      %v613 = vpop.f32.mrf.mxu0
      %v614 = vadd.f32 0.0, %v613
      %615 = vdwg.mxu0
      %616 = vrot.lane.b32.xlu0 %v449, 112
      %v617 = vpop.permute.xlu0 %616
      %618 = vrot.lane.b32.xlu0 %v480, 112
      %v619 = vpop.permute.xlu0 %618
      %v620 = vsel %vm482, %v617, 0
      %v622 = vsel %vm482, %v619, 0
      %624 = vmatpush.xpose.msra.mxu0 0.0
      %625 = vmatpush.xpose.msra.mxu0 0.0
      %626 = vmatpush.xpose.msra.mxu0 0.0
      %627 = vmatpush.xpose.msra.mxu0 0.0
      %628 = vmatpush.xpose.msra.mxu0 0.0
      %629 = vmatpush.xpose.msra.mxu0 0.0
      %630 = vmatpush.xpose.msra.mxu0 0.0
      %631 = vmatpush.xpose.msra.mxu0 0.0
      %632 = vmatpush.xpose.msra.mxu0 0.0
      %633 = vmatpush.xpose.msra.mxu0 0.0
      %634 = vmatpush.xpose.msra.mxu0 0.0
      %635 = vmatpush.xpose.msra.mxu0 0.0
      %636 = vmatpush.xpose.msra.mxu0 0.0
      %637 = vmatpush.xpose.msra.mxu0 0.0
      %638 = vmatpush.xpose.msra.mxu0 0.0
      %639 = vmatpush.xpose.msra.mxu0 %v622
      %640 = vmatmul.f32.gmra.mxu0 %v620
      %v641 = vpop.f32.mrf.mxu0
      %v642 = vadd.f32 0.0, %v641
      %643 = vdwg.mxu0
      %v644 = vmul.f32 %v642, 0.35355338
      %v645 = vsel %vm510, -1e+10, %v644
      %v646 = vsel %vm482, %v645, -inf
      %647 = vmax.xlane.f32.xlu0 %v646
      %v648 = vpop.xlane.xlu0 %647
      %v649 = vsub.f32 %v645, %v648
      %v650 = vmul.f32 %v649, 1.442695
      %v651 = vpow.pop %v650
      %v652 = vsel %vm482, %v651, 0.0
      %653 = vadd.xlane.f32.xlu0 %v652
      %v654 = vpop.xlane.xlu0 %653
      %v655 = vrcp.pop %v654
      %v656 = vmul.f32 %v651, %v655
      %657 = vrot.lane.b32.xlu0 %v480, 80
      %v658 = vpop.permute.xlu0 %657
      %v661 = vsel %vm482, %v656, 0
      %663 = vmatpush.msra.mxu0 0.0
      %664 = vmatpush.msra.mxu0 0.0
      %665 = vmatpush.msra.mxu0 0.0
      %666 = vmatpush.msra.mxu0 0.0
      %667 = vmatpush.msra.mxu0 0.0
      %668 = vmatpush.msra.mxu0 0.0
      %669 = vmatpush.msra.mxu0 0.0
      %670 = vmatpush.msra.mxu0 0.0
      %671 = vmatpush.msra.mxu0 0.0
      %672 = vmatpush.msra.mxu0 0.0
      %673 = vmatpush.msra.mxu0 0.0
      %674 = vmatpush.msra.mxu0 0.0
      %675 = vmatpush.msra.mxu0 0.0
      %676 = vmatpush.msra.mxu0 0.0
      %677 = vmatpush.msra.mxu0 0.0
      %678 = vmatpush.msra.mxu0 %v658
      %679 = vmatmul.f32.gmra.mxu0 %v661
      %v680 = vpop.f32.mrf.mxu0
      %v681 = vadd.f32 0.0, %v680
      %682 = vdwg.mxu0
      %683 = vrot.lane.b32.xlu0 %v449, 104
      %v684 = vpop.permute.xlu0 %683
      %685 = vrot.lane.b32.xlu0 %v480, 104
      %v686 = vpop.permute.xlu0 %685
      %v687 = vsel %vm482, %v684, 0
      %v689 = vsel %vm482, %v686, 0
      %691 = vmatpush.xpose.msra.mxu0 0.0
      %692 = vmatpush.xpose.msra.mxu0 0.0
      %693 = vmatpush.xpose.msra.mxu0 0.0
      %694 = vmatpush.xpose.msra.mxu0 0.0
      %695 = vmatpush.xpose.msra.mxu0 0.0
      %696 = vmatpush.xpose.msra.mxu0 0.0
      %697 = vmatpush.xpose.msra.mxu0 0.0
      %698 = vmatpush.xpose.msra.mxu0 0.0
      %699 = vmatpush.xpose.msra.mxu0 0.0
      %700 = vmatpush.xpose.msra.mxu0 0.0
      %701 = vmatpush.xpose.msra.mxu0 0.0
      %702 = vmatpush.xpose.msra.mxu0 0.0
      %703 = vmatpush.xpose.msra.mxu0 0.0
      %704 = vmatpush.xpose.msra.mxu0 0.0
      %705 = vmatpush.xpose.msra.mxu0 0.0
      %706 = vmatpush.xpose.msra.mxu0 %v689
      %707 = vmatmul.f32.gmra.mxu0 %v687
      %v708 = vpop.f32.mrf.mxu0
      %v709 = vadd.f32 0.0, %v708
      %710 = vdwg.mxu0
      %v711 = vmul.f32 %v709, 0.35355338
      %v712 = vsel %vm510, -1e+10, %v711
      %v713 = vsel %vm482, %v712, -inf
      %714 = vmax.xlane.f32.xlu0 %v713
      %v715 = vpop.xlane.xlu0 %714
      %v716 = vsub.f32 %v712, %v715
      %v717 = vmul.f32 %v716, 1.442695
      %v718 = vpow.pop %v717
      %v719 = vsel %vm482, %v718, 0.0
      %720 = vadd.xlane.f32.xlu0 %v719
      %v721 = vpop.xlane.xlu0 %720
      %v722 = vrcp.pop %v721
      %v723 = vmul.f32 %v718, %v722
      %724 = vrot.lane.b32.xlu0 %v480, 72
      %v725 = vpop.permute.xlu0 %724
      %v728 = vsel %vm482, %v723, 0
      %730 = vmatpush.msra.mxu0 0.0
      %731 = vmatpush.msra.mxu0 0.0
      %732 = vmatpush.msra.mxu0 0.0
      %733 = vmatpush.msra.mxu0 0.0
      %734 = vmatpush.msra.mxu0 0.0
      %735 = vmatpush.msra.mxu0 0.0
      %736 = vmatpush.msra.mxu0 0.0
      %737 = vmatpush.msra.mxu0 0.0
      %738 = vmatpush.msra.mxu0 0.0
      %739 = vmatpush.msra.mxu0 0.0
      %740 = vmatpush.msra.mxu0 0.0
      %741 = vmatpush.msra.mxu0 0.0
      %742 = vmatpush.msra.mxu0 0.0
      %743 = vmatpush.msra.mxu0 0.0
      %744 = vmatpush.msra.mxu0 0.0
      %745 = vmatpush.msra.mxu0 %v725
      %746 = vmatmul.f32.gmra.mxu0 %v728
      %v747 = vpop.f32.mrf.mxu0
      %v748 = vadd.f32 0.0, %v747
      %749 = vdwg.mxu0
      %751 = vrot.lane.b32.xlu0 %v614, 8
      %v752 = vpop.permute.xlu0 %751
      %755 = vrot.lane.b32.xlu0 %v681, 16
      %v756 = vpop.permute.xlu0 %755
      %759 = vrot.lane.b32.xlu0 %v748, 24
      %v760 = vpop.permute.xlu0 %759
      %v762 = vsel %vm482, %v547, %v752
      %vm763 = vcmask 130048
      %v764 = vsel %vm763, %v762, %v756
      %vm765 = vcmask 195584
      %v766 = vsel %vm765, %v764, %v760
      %v767 = vld [vmem:[%s7] sm:$0xff]
      %v768 = vld [vmem:[%s7 + $0x8] sm:$0xff]
      %v769 = vld [vmem:[%s7 + $0x10] sm:$0xff]
      %v770 = vld [vmem:[%s7 + $0x18] sm:$0xff]
      %v771 = vld [vmem:[%s8] sm:$0x1]
      %v773 = vperm.slane %v771, 0
      %v776 = vsel %vm427, %v766, 0
      %778 = vmatpush.msra.mxu0 0.0
      %779 = vmatpush.msra.mxu0 0.0
      %780 = vmatpush.msra.mxu0 0.0
      %781 = vmatpush.msra.mxu0 0.0
      %782 = vmatpush.msra.mxu0 0.0
      %783 = vmatpush.msra.mxu0 0.0
      %784 = vmatpush.msra.mxu0 0.0
      %785 = vmatpush.msra.mxu0 0.0
      %786 = vmatpush.msra.mxu0 0.0
      %787 = vmatpush.msra.mxu0 0.0
      %788 = vmatpush.msra.mxu0 0.0
      %789 = vmatpush.msra.mxu0 0.0
      %790 = vmatpush.msra.mxu0 %v770
      %791 = vmatpush.msra.mxu0 %v769
      %792 = vmatpush.msra.mxu0 %v768
      %793 = vmatpush.msra.mxu0 %v767
      %794 = vmatmul.f32.gmra.mxu0 %v776
      %v795 = vpop.f32.mrf.mxu0
      %v796 = vadd.f32 %v773, %v795
      %797 = vdwg.mxu0
      %v798 = vadd.f32 %v416, %v796
      %v799 = vld [vmem:[%s9] sm:$0x1]
      %v800 = vld [vmem:[%s10] sm:$0x1]
      %v801 = vsel %vm427, %v798, 0.0
      %802 = vadd.xlane.f32.xlu0 %v801
      %v803 = vpop.xlane.xlu0 %802
      %v804 = vrcp.pop 32.0
      %v805 = vmul.f32 32.0, %v804
      %v806 = vsub.f32 1.0, %v805
      %v807 = vmul.f32 %v804, %v806
      %v808 = vadd.f32 %v804, %v807
      %vm809 = vweird.f32 %v804
      %v810 = vsel %vm809, %v804, %v808
      %v811 = vmul.f32 %v803, %v810
      %v812 = vsub.f32 %v798, %v811
      %v813 = vmul.f32 %v812, %v812
      %v814 = vsel %vm427, %v813, 0.0
      %815 = vadd.xlane.f32.xlu0 %v814
      %v816 = vpop.xlane.xlu0 %815
      %v817 = vmul.f32 %v816, %v810
      %v818 = vadd.f32 %v817, 1e-05
      %v819 = vrsqrt.pop %v818
      %v820 = vmul.f32 %v819, %v818
      %v821 = vmul.f32 %v820, %v819
      %v822 = vmul.f32 0.5, %v821
      %v823 = vsub.f32 1.5, %v822
      %v824 = vmul.f32 %v819, %v823
      %vm825 = vweird.f32 %v818
      %vm826 = vweird.f32 %v819
      %vm827 = vmor %vm825, %vm826
      %v828 = vsel %vm827, %v819, %v824
      %v829 = vmul.f32 %v812, %v828
      %v831 = vperm.slane %v799, 0
      %v833 = vmul.f32 %v829, %v831
      %v835 = vperm.slane %v800, 0
      %v837 = vadd.f32 %v833, %v835
      %838 = vst.msk [vmem:[%s415] sm:$0xff] %vm427, %v837
      %p839 = scmp.lt.s32.totalorder %s22, 1
      %s840 = scalar_select %p839, %s22, 1
      %s841 = smul.addr %s840, 8
      %s842 = scalar_lea.vmem %s11, %s841
      // Predicated region
      $region65: #{decoder_forward.7} parent=63 // pred_check
        %p843 = pneg %p286
      $region66: #{decoder_forward.7} parent=63 // pred_check_branch
        %845 = sbr.rel (%p843) target = $region68
      $region67: #{decoder_forward.7} parent=63 // pred_region
        _
      $region68: #{decoder_forward.7} parent=63 // pred_fallthru
        _
    $region64: #{decoder_forward.7} parent=5 // pred_fallthru
      _
    %p846 = scmp.le.s32.totalorder 2, %s17
    // Predicated region
    $region69: #{decoder_forward.7} parent=5 // pred_check
      %p847 = pneg %p846
    $region70: #{decoder_forward.7} parent=5 // pred_check_branch
      %849 = sbr.rel (%p847) target = $region72
    $region71: #{decoder_forward.7} parent=5 // pred_region
      %s850 = ssub.s32 %s17, 2
      // Predicated region
      $region73: #{decoder_forward.7} parent=71 // pred_check
        %p851 = pneg %p292
      $region74: #{decoder_forward.7} parent=71 // pred_check_branch
        %853 = sbr.rel (%p851) target = $region76
      $region75: #{decoder_forward.7} parent=71 // pred_region
        %p854 = scmp.lt.s32.totalorder %s23, 1
        %s855 = scalar_select %p854, %s23, 1
        %s856 = smul.addr %s855, 8
        %s857 = scalar_lea.vmem %s11, %s856
      $region76: #{decoder_forward.7} parent=71 // pred_fallthru
        _
    $region72: #{decoder_forward.7} parent=5 // pred_fallthru
      _
  $region6: #{decoder_forward.7} parent=0 // loop_footer
    %s21 = sadd.s32 1, %s17
  $region7: #{decoder_forward.7} parent=0 // loop_footer_branch
    %16 = sbr.rel target = $region3
  $region8: #{decoder_forward.7} parent=0 // loop_exit
    _

// kernel: decoder_forward.11
$region0: #{decoder_forward.11}
  #allocation0 [shape = 'u32[]', space=smem, size = 0x4, offset = 0x4, fixed_abs, tag = 'smem constant byte address 0x4 - core index']
  #allocation1 [shape = 'u32[72,128]{1,0:T(1,128)}', space=vmem, size = 0x9000, scoped, tag = 'internal scratch']
  %s0 = inlined_call_operand.vmem [shape: f32[2,8,32], index: 0, kind: input, shape index: {}]
  %s1 = inlined_call_operand.vmem [shape: f32[2,10,32], index: 1, kind: input, shape index: {}]
  %s2 = inlined_call_operand.vmem [shape: f32[2,1,8,10], index: 2, kind: input, shape index: {}]
  %s3 = inlined_call_operand.vmem [shape: f32[32,32], index: 3, kind: input, shape index: {}]
  %s4 = inlined_call_operand.vmem [shape: f32[1,32], index: 4, kind: input, shape index: {}]
  %s5 = inlined_call_operand.vmem [shape: f32[32,64], index: 5, kind: input, shape index: {}]
  %s6 = inlined_call_operand.vmem [shape: f32[1,64], index: 6, kind: input, shape index: {}]
  %s7 = inlined_call_operand.hbm [shape: f32[32,32], index: 7, kind: input, shape index: {}]
  %s8 = inlined_call_operand.vmem [shape: f32[1,32], index: 8, kind: input, shape index: {}]
  %s9 = inlined_call_operand.vmem [shape: f32[1,32], index: 9, kind: input, shape index: {}]
  %s10 = inlined_call_operand.vmem [shape: f32[1,32], index: 10, kind: input, shape index: {}]
  %s11 = inlined_call_operand.vmem [shape: f32[2,8,32], index: 11, kind: output, shape index: {0}]
  %s12 = inlined_call_operand.hbm [shape: f32[2,4,8,10], index: 12, kind: output, shape index: {1}]
  %13 = xla_tuple %s11, %s12
  %s14 = sld [smem:[#allocation0]]
  $region89: #{decoder_forward.11} parent=0
    _
  %s16 = ssub.s32 1, %s14
  %s17 = scalar_select 0, %s16, %s14
  $region1: #{decoder_forward.11} parent=0
    #allocation2 [shape = 'u8[16384]{0}', space=vmem, size = 0x4000, scoped, tag = 'input window, operand 7, single buffered']
    #allocation3 [shape = 's32[2]{0}', space=sflag, size = 0x8, scoped, tag = 'scoped memory for decoder_forward.11']
    #allocation4 [shape = 's32[2]{0}', space=sflag, size = 0x8, scoped, tag = 'scoped memory for decoder_forward.11']
    #allocation5 [shape = 'u8[32768]{0}', space=vmem, size = 0x8000, scoped, tag = 'output window, operand 1']
    %18 = vsyncpa [#allocation3], 0
    %19 = vsyncpa [#allocation4], 0
    %s20 = scalar_lea.sflag [#allocation4], 1
    %21 = vsyncpa %s20, 0
    loop: start=0, step=1, limit=4
    $region2: #{decoder_forward.11} parent=1 // loop_pre_header
      _
    $region3: #{decoder_forward.11} parent=1 // loop_header
      %s23 = sphi 0, %s27
      %p24 = scmp.ge.s32.totalorder %s23, 4
      %s33 = sphi 0, %s35
      %s36 = sphi 0, %s33
      %s37 = sphi 0, %s36
      %s53 = sphi 0, %s37
      %s59 = sphi 0, %s61
      %s62 = sphi 0, %s59
      %s63 = sphi 0, %s62
      %s79 = sphi 0, %s63
      %s85 = sphi 0, %s87
      %s88 = sphi 0, %s85
      %s89 = sphi 0, %s88
      %s105 = sphi 0, %s89
      %s109 = sphi 0, %s109
      %s111 = sphi 0, %s109
      %s112 = sphi 0, %s111
      %s126 = sphi 0, %s112
      %s130 = sphi 0, %s130
      %s132 = sphi 0, %s130
      %s133 = sphi 0, %s132
      %s147 = sphi 0, %s133
      %s151 = sphi 0, %s151
      %s153 = sphi 0, %s151
      %s154 = sphi 0, %s153
      %s168 = sphi 0, %s154
      %s172 = sphi 0, %s172
      %s174 = sphi 0, %s172
      %s175 = sphi 0, %s174
      %s189 = sphi 0, %s175
      %s193 = sphi 0, %s193
      %s195 = sphi 0, %s193
      %s196 = sphi 0, %s195
      %s210 = sphi 0, %s196
      %s214 = sphi 0, %s214
      %s216 = sphi 0, %s214
      %s217 = sphi 0, %s216
      %s231 = sphi 0, %s217
      %s235 = sphi 0, %s235
      %s237 = sphi 0, %s235
      %s238 = sphi 0, %s237
      %s252 = sphi 0, %s238
      %s256 = sphi 0, %s256
      %s258 = sphi 0, %s256
      %s259 = sphi 0, %s258
      %s273 = sphi 0, %s259
      %s279 = sphi 0, %s281
      %s282 = sphi 0, %s279
      %s283 = sphi 0, %s282
      %s299 = sphi 0, %s283
      %s305 = sphi 0, %s307
      %s308 = sphi 0, %s305
      %s309 = sphi 0, %s308
      %s325 = sphi 0, %s309
    $region4: #{decoder_forward.11} parent=1 // loop_header_branch
      %26 = sbr.rel (%p24) target = $region8
    $region5: #{decoder_forward.11} parent=1 // loop_body
      %s28 = ssub.s32 %s23, 1
      %s29 = ssub.s32 %s23, 2
      %s30 = sadd.s32 %s23, 1
      %s31 = ssub.s32 %s23, %s30
      %p32 = scmp.eq.s32.totalorder %s31, 0
      %s34 = sadd.s32 %s33, 1
      %s35 = scalar_select %p32, %s33, %s34
      %p38 = pneg %p32
      %p39 = scmp.eq.s32.totalorder %s23, 1
      %p40 = por %p38, %p39
      %p41 = scmp.ne.s32.totalorder %s33, %s36
      %p42 = scmp.eq.s32.totalorder %s23, 0
      %p43 = por %p41, %p42
      %p44 = scmp.ne.s32.totalorder %s33, %s36
      %p45 = scmp.eq.s32.totalorder %s28, 1
      %p46 = por %p44, %p45
      %p47 = scmp.ne.s32.totalorder %s36, %s37
      %p48 = scmp.eq.s32.totalorder %s28, 0
      %p49 = por %p47, %p48
      %p50 = scmp.ne.s32.totalorder %s36, %s37
      %p51 = scmp.eq.s32.totalorder %s29, 1
      %p52 = por %p50, %p51
      %p54 = scmp.ne.s32.totalorder %s37, %s53
      %p55 = scmp.eq.s32.totalorder %s29, 0
      %p56 = por %p54, %p55
      %s57 = ssub.s32 %s23, %s30
      %p58 = scmp.eq.s32.totalorder %s57, 0
      %s60 = sadd.s32 %s59, 1
      %s61 = scalar_select %p58, %s59, %s60
      %p64 = pneg %p58
      %p65 = scmp.eq.s32.totalorder %s23, 1
      %p66 = por %p64, %p65
      %p67 = scmp.ne.s32.totalorder %s59, %s62
      %p68 = scmp.eq.s32.totalorder %s23, 0
      %p69 = por %p67, %p68
      %p70 = scmp.ne.s32.totalorder %s59, %s62
      %p71 = scmp.eq.s32.totalorder %s28, 1
      %p72 = por %p70, %p71
      %p73 = scmp.ne.s32.totalorder %s62, %s63
      %p74 = scmp.eq.s32.totalorder %s28, 0
      %p75 = por %p73, %p74
      %p76 = scmp.ne.s32.totalorder %s62, %s63
      %p77 = scmp.eq.s32.totalorder %s29, 1
      %p78 = por %p76, %p77
      %p80 = scmp.ne.s32.totalorder %s63, %s79
      %p81 = scmp.eq.s32.totalorder %s29, 0
      %p82 = por %p80, %p81
      %s83 = ssub.s32 %s23, %s30
      %p84 = scmp.eq.s32.totalorder %s83, 0
      %s86 = sadd.s32 %s85, 1
      %s87 = scalar_select %p84, %s85, %s86
      %p90 = pneg %p84
      %p91 = scmp.eq.s32.totalorder %s23, 1
      %p92 = por %p90, %p91
      %p93 = scmp.ne.s32.totalorder %s85, %s88
      %p94 = scmp.eq.s32.totalorder %s23, 0
      %p95 = por %p93, %p94
      %p96 = scmp.ne.s32.totalorder %s85, %s88
      %p97 = scmp.eq.s32.totalorder %s28, 1
      %p98 = por %p96, %p97
      %p99 = scmp.ne.s32.totalorder %s88, %s89
      %p100 = scmp.eq.s32.totalorder %s28, 0
      %p101 = por %p99, %p100
      %p102 = scmp.ne.s32.totalorder %s88, %s89
      %p103 = scmp.eq.s32.totalorder %s29, 1
      %p104 = por %p102, %p103
      %p106 = scmp.ne.s32.totalorder %s89, %s105
      %p107 = scmp.eq.s32.totalorder %s29, 0
      %p108 = por %p106, %p107
      %s110 = sadd.s32 %s109, 1
      %p113 = scmp.eq.s32.totalorder %s23, 1
      %p114 = scmp.ne.s32.totalorder %s109, %s111
      %p115 = scmp.eq.s32.totalorder %s23, 0
      %p116 = por %p114, %p115
      %p117 = scmp.ne.s32.totalorder %s109, %s111
      %p118 = scmp.eq.s32.totalorder %s28, 1
      %p119 = por %p117, %p118
      %p120 = scmp.ne.s32.totalorder %s111, %s112
      %p121 = scmp.eq.s32.totalorder %s28, 0
      %p122 = por %p120, %p121
      %p123 = scmp.ne.s32.totalorder %s111, %s112
      %p124 = scmp.eq.s32.totalorder %s29, 1
      %p125 = por %p123, %p124
      %p127 = scmp.ne.s32.totalorder %s112, %s126
      %p128 = scmp.eq.s32.totalorder %s29, 0
      %p129 = por %p127, %p128
      %s131 = sadd.s32 %s130, 1
      %p134 = scmp.eq.s32.totalorder %s23, 1
      %p135 = scmp.ne.s32.totalorder %s130, %s132
      %p136 = scmp.eq.s32.totalorder %s23, 0
      %p137 = por %p135, %p136
      %p138 = scmp.ne.s32.totalorder %s130, %s132
      %p139 = scmp.eq.s32.totalorder %s28, 1
      %p140 = por %p138, %p139
      %p141 = scmp.ne.s32.totalorder %s132, %s133
      %p142 = scmp.eq.s32.totalorder %s28, 0
      %p143 = por %p141, %p142
      %p144 = scmp.ne.s32.totalorder %s132, %s133
      %p145 = scmp.eq.s32.totalorder %s29, 1
      %p146 = por %p144, %p145
      %p148 = scmp.ne.s32.totalorder %s133, %s147
      %p149 = scmp.eq.s32.totalorder %s29, 0
      %p150 = por %p148, %p149
      %s152 = sadd.s32 %s151, 1
      %p155 = scmp.eq.s32.totalorder %s23, 1
      %p156 = scmp.ne.s32.totalorder %s151, %s153
      %p157 = scmp.eq.s32.totalorder %s23, 0
      %p158 = por %p156, %p157
      %p159 = scmp.ne.s32.totalorder %s151, %s153
      %p160 = scmp.eq.s32.totalorder %s28, 1
      %p161 = por %p159, %p160
      %p162 = scmp.ne.s32.totalorder %s153, %s154
      %p163 = scmp.eq.s32.totalorder %s28, 0
      %p164 = por %p162, %p163
      %p165 = scmp.ne.s32.totalorder %s153, %s154
      %p166 = scmp.eq.s32.totalorder %s29, 1
      %p167 = por %p165, %p166
      %p169 = scmp.ne.s32.totalorder %s154, %s168
      %p170 = scmp.eq.s32.totalorder %s29, 0
      %p171 = por %p169, %p170
      %s173 = sadd.s32 %s172, 1
      %p176 = scmp.eq.s32.totalorder %s23, 1
      %p177 = scmp.ne.s32.totalorder %s172, %s174
      %p178 = scmp.eq.s32.totalorder %s23, 0
      %p179 = por %p177, %p178
      %p180 = scmp.ne.s32.totalorder %s172, %s174
      %p181 = scmp.eq.s32.totalorder %s28, 1
      %p182 = por %p180, %p181
      %p183 = scmp.ne.s32.totalorder %s174, %s175
      %p184 = scmp.eq.s32.totalorder %s28, 0
      %p185 = por %p183, %p184
      %p186 = scmp.ne.s32.totalorder %s174, %s175
      %p187 = scmp.eq.s32.totalorder %s29, 1
      %p188 = por %p186, %p187
      %p190 = scmp.ne.s32.totalorder %s175, %s189
      %p191 = scmp.eq.s32.totalorder %s29, 0
      %p192 = por %p190, %p191
      %s194 = sadd.s32 %s193, 1
      %p197 = scmp.eq.s32.totalorder %s23, 1
      %p198 = scmp.ne.s32.totalorder %s193, %s195
      %p199 = scmp.eq.s32.totalorder %s23, 0
      %p200 = por %p198, %p199
      %p201 = scmp.ne.s32.totalorder %s193, %s195
      %p202 = scmp.eq.s32.totalorder %s28, 1
      %p203 = por %p201, %p202
      %p204 = scmp.ne.s32.totalorder %s195, %s196
      %p205 = scmp.eq.s32.totalorder %s28, 0
      %p206 = por %p204, %p205
      %p207 = scmp.ne.s32.totalorder %s195, %s196
      %p208 = scmp.eq.s32.totalorder %s29, 1
      %p209 = por %p207, %p208
      %p211 = scmp.ne.s32.totalorder %s196, %s210
      %p212 = scmp.eq.s32.totalorder %s29, 0
      %p213 = por %p211, %p212
      %s215 = sadd.s32 %s214, 1
      %p218 = scmp.eq.s32.totalorder %s23, 1
      %p219 = scmp.ne.s32.totalorder %s214, %s216
      %p220 = scmp.eq.s32.totalorder %s23, 0
      %p221 = por %p219, %p220
      %p222 = scmp.ne.s32.totalorder %s214, %s216
      %p223 = scmp.eq.s32.totalorder %s28, 1
      %p224 = por %p222, %p223
      %p225 = scmp.ne.s32.totalorder %s216, %s217
      %p226 = scmp.eq.s32.totalorder %s28, 0
      %p227 = por %p225, %p226
      %p228 = scmp.ne.s32.totalorder %s216, %s217
      %p229 = scmp.eq.s32.totalorder %s29, 1
      %p230 = por %p228, %p229
      %p232 = scmp.ne.s32.totalorder %s217, %s231
      %p233 = scmp.eq.s32.totalorder %s29, 0
      %p234 = por %p232, %p233
      %s236 = sadd.s32 %s235, 1
      %p239 = scmp.eq.s32.totalorder %s23, 1
      %p240 = scmp.ne.s32.totalorder %s235, %s237
      %p241 = scmp.eq.s32.totalorder %s23, 0
      %p242 = por %p240, %p241
      %p243 = scmp.ne.s32.totalorder %s235, %s237
      %p244 = scmp.eq.s32.totalorder %s28, 1
      %p245 = por %p243, %p244
      %p246 = scmp.ne.s32.totalorder %s237, %s238
      %p247 = scmp.eq.s32.totalorder %s28, 0
      %p248 = por %p246, %p247
      %p249 = scmp.ne.s32.totalorder %s237, %s238
      %p250 = scmp.eq.s32.totalorder %s29, 1
      %p251 = por %p249, %p250
      %p253 = scmp.ne.s32.totalorder %s238, %s252
      %p254 = scmp.eq.s32.totalorder %s29, 0
      %p255 = por %p253, %p254
      %s257 = sadd.s32 %s256, 1
      %p260 = scmp.eq.s32.totalorder %s23, 1
      %p261 = scmp.ne.s32.totalorder %s256, %s258
      %p262 = scmp.eq.s32.totalorder %s23, 0
      %p263 = por %p261, %p262
      %p264 = scmp.ne.s32.totalorder %s256, %s258
      %p265 = scmp.eq.s32.totalorder %s28, 1
      %p266 = por %p264, %p265
      %p267 = scmp.ne.s32.totalorder %s258, %s259
      %p268 = scmp.eq.s32.totalorder %s28, 0
      %p269 = por %p267, %p268
      %p270 = scmp.ne.s32.totalorder %s258, %s259
      %p271 = scmp.eq.s32.totalorder %s29, 1
      %p272 = por %p270, %p271
      %p274 = scmp.ne.s32.totalorder %s259, %s273
      %p275 = scmp.eq.s32.totalorder %s29, 0
      %p276 = por %p274, %p275
      %s277 = ssub.s32 %s23, %s30
      %p278 = scmp.eq.s32.totalorder %s277, 0
      %s280 = sadd.s32 %s279, 1
      %s281 = scalar_select %p278, %s279, %s280
      %p284 = pneg %p278
      %p285 = scmp.eq.s32.totalorder %s23, 1
      %p286 = por %p284, %p285
      %p287 = scmp.ne.s32.totalorder %s279, %s282
      %p288 = scmp.eq.s32.totalorder %s23, 0
      %p289 = por %p287, %p288
      %p290 = scmp.ne.s32.totalorder %s279, %s282
      %p291 = scmp.eq.s32.totalorder %s28, 1
      %p292 = por %p290, %p291
      %p293 = scmp.ne.s32.totalorder %s282, %s283
      %p294 = scmp.eq.s32.totalorder %s28, 0
      %p295 = por %p293, %p294
      %p296 = scmp.ne.s32.totalorder %s282, %s283
      %p297 = scmp.eq.s32.totalorder %s29, 1
      %p298 = por %p296, %p297
      %p300 = scmp.ne.s32.totalorder %s283, %s299
      %p301 = scmp.eq.s32.totalorder %s29, 0
      %p302 = por %p300, %p301
      %s303 = ssub.s32 %s23, %s30
      %p304 = scmp.eq.s32.totalorder %s303, 0
      %s306 = sadd.s32 %s305, 1
      %s307 = scalar_select %p304, %s305, %s306
      %p310 = pneg %p304
      %p311 = scmp.eq.s32.totalorder %s23, 1
      %p312 = por %p310, %p311
      %p313 = scmp.ne.s32.totalorder %s305, %s308
      %p314 = scmp.eq.s32.totalorder %s23, 0
      %p315 = por %p313, %p314
      %p316 = scmp.ne.s32.totalorder %s305, %s308
      %p317 = scmp.eq.s32.totalorder %s28, 1
      %p318 = por %p316, %p317
      %p319 = scmp.ne.s32.totalorder %s308, %s309
      %p320 = scmp.eq.s32.totalorder %s28, 0
      %p321 = por %p319, %p320
      %p322 = scmp.ne.s32.totalorder %s308, %s309
      %p323 = scmp.eq.s32.totalorder %s29, 1
      %p324 = por %p322, %p323
      %p326 = scmp.ne.s32.totalorder %s309, %s325
      %p327 = scmp.eq.s32.totalorder %s29, 0
      %p328 = por %p326, %p327
      %p329 = scmp.le.s32.totalorder 1, %s23
      %p330 = scmp.lt.s32.totalorder %s23, 3
      %p331 = pnand %p329, %p330
      %p332 = pneg %p331
      // Predicated region
      $region9: #{decoder_forward.11} parent=5 // pred_check
        _
      $region10: #{decoder_forward.11} parent=5 // pred_check_branch
        %334 = sbr.rel (%p331) target = $region12
      $region11: #{decoder_forward.11} parent=5 // pred_region
        %s335 = ssub.s32 %s23, 1
        // Predicated region
        $region13: #{decoder_forward.11} parent=11 // pred_check
          %p336 = pneg %p122
        $region14: #{decoder_forward.11} parent=11 // pred_check_branch
          %338 = sbr.rel (%p336) target = $region16
        $region15: #{decoder_forward.11} parent=11 // pred_region
          _
        $region16: #{decoder_forward.11} parent=11 // pred_fallthru
          _
        // Predicated region
        $region17: #{decoder_forward.11} parent=11 // pred_check
          %p339 = pneg %p143
        $region18: #{decoder_forward.11} parent=11 // pred_check_branch
          %341 = sbr.rel (%p339) target = $region20
        $region19: #{decoder_forward.11} parent=11 // pred_region
          _
        $region20: #{decoder_forward.11} parent=11 // pred_fallthru
          _
        // Predicated region
        $region21: #{decoder_forward.11} parent=11 // pred_check
          %p342 = pneg %p164
        $region22: #{decoder_forward.11} parent=11 // pred_check_branch
          %344 = sbr.rel (%p342) target = $region24
        $region23: #{decoder_forward.11} parent=11 // pred_region
          _
        $region24: #{decoder_forward.11} parent=11 // pred_fallthru
          _
        // Predicated region
        $region25: #{decoder_forward.11} parent=11 // pred_check
          %p345 = pneg %p185
        $region26: #{decoder_forward.11} parent=11 // pred_check_branch
          %347 = sbr.rel (%p345) target = $region28
        $region27: #{decoder_forward.11} parent=11 // pred_region
          _
        $region28: #{decoder_forward.11} parent=11 // pred_fallthru
          _
        // Predicated region
        $region29: #{decoder_forward.11} parent=11 // pred_check
          %p348 = pneg %p206
        $region30: #{decoder_forward.11} parent=11 // pred_check_branch
          %350 = sbr.rel (%p348) target = $region32
        $region31: #{decoder_forward.11} parent=11 // pred_region
          %352 = vsyncadd [#allocation3], 0
          %s353 = sshll.u32 %s7, 4
          %s354 = int_to_ptr.hbm [resolvable:$true] %s353
          %s355 = sshll.u32 [#allocation2], 4
          %s356 = int_to_ptr.vmem [resolvable:$true] %s355
          %361 = dma.hbm_to_vmem [thread:$0]  %s354, 512, %s356, [#allocation3], 128, 128, 8
        $region32: #{decoder_forward.11} parent=11 // pred_fallthru
          _
        // Predicated region
        $region33: #{decoder_forward.11} parent=11 // pred_check
          %p362 = pneg %p227
        $region34: #{decoder_forward.11} parent=11 // pred_check_branch
          %364 = sbr.rel (%p362) target = $region36
        $region35: #{decoder_forward.11} parent=11 // pred_region
          _
        $region36: #{decoder_forward.11} parent=11 // pred_fallthru
          _
        // Predicated region
        $region37: #{decoder_forward.11} parent=11 // pred_check
          %p365 = pneg %p248
        $region38: #{decoder_forward.11} parent=11 // pred_check_branch
          %367 = sbr.rel (%p365) target = $region40
        $region39: #{decoder_forward.11} parent=11 // pred_region
          _
        $region40: #{decoder_forward.11} parent=11 // pred_fallthru
          _
        // Predicated region
        $region41: #{decoder_forward.11} parent=11 // pred_check
          %p368 = pneg %p269
        $region42: #{decoder_forward.11} parent=11 // pred_check_branch
          %370 = sbr.rel (%p368) target = $region44
        $region43: #{decoder_forward.11} parent=11 // pred_region
          _
        $region44: #{decoder_forward.11} parent=11 // pred_fallthru
          _
      $region12: #{decoder_forward.11} parent=5 // pred_fallthru
        _
      %p371 = scmp.lt.s32.totalorder %s23, 2
      // Predicated region
      $region45: #{decoder_forward.11} parent=5 // pred_check
        %p372 = pneg %p371
      $region46: #{decoder_forward.11} parent=5 // pred_check_branch
        %374 = sbr.rel (%p372) target = $region48
      $region47: #{decoder_forward.11} parent=5 // pred_region
        // Predicated region
        $region49: #{decoder_forward.11} parent=47 // pred_check
          %p375 = pneg %p43
        $region50: #{decoder_forward.11} parent=47 // pred_check_branch
          %377 = sbr.rel (%p375) target = $region52
        $region51: #{decoder_forward.11} parent=47 // pred_region
          %p378 = scmp.lt.s32.totalorder %s23, 1
          %s379 = scalar_select %p378, %s23, 1
          %s380 = smul.addr %s379, 8
          %s381 = scalar_lea.vmem %s0, %s380
        $region52: #{decoder_forward.11} parent=47 // pred_fallthru
          _
        // Predicated region
        $region53: #{decoder_forward.11} parent=47 // pred_check
          %p382 = pneg %p69
        $region54: #{decoder_forward.11} parent=47 // pred_check_branch
          %384 = sbr.rel (%p382) target = $region56
        $region55: #{decoder_forward.11} parent=47 // pred_region
          %p385 = scmp.lt.s32.totalorder %s23, 1
          %s386 = scalar_select %p385, %s23, 1
          %s387 = smul.addr %s386, 2
          %s388 = smul.addr %s387, 8
          %s389 = scalar_lea.vmem %s1, %s388
        $region56: #{decoder_forward.11} parent=47 // pred_fallthru
          _
        // Predicated region
        $region57: #{decoder_forward.11} parent=47 // pred_check
          %p390 = pneg %p95
        $region58: #{decoder_forward.11} parent=47 // pred_check_branch
          %392 = sbr.rel (%p390) target = $region60
        $region59: #{decoder_forward.11} parent=47 // pred_region
          %p393 = scmp.lt.s32.totalorder %s23, 1
          %s394 = scalar_select %p393, %s23, 1
          %s395 = smul.addr %s394, 8
          %s396 = scalar_lea.vmem %s2, %s395
        $region60: #{decoder_forward.11} parent=47 // pred_fallthru
          _
      $region48: #{decoder_forward.11} parent=5 // pred_fallthru
        _
      %p397 = scmp.le.s32.totalorder 1, %s23
      %p398 = scmp.lt.s32.totalorder %s23, 3
      %p399 = pnand %p397, %p398
      %p400 = pneg %p399
      // Predicated region
      $region61: #{decoder_forward.11} parent=5 // pred_check
        _
      $region62: #{decoder_forward.11} parent=5 // pred_check_branch
        %402 = sbr.rel (%p399) target = $region64
      $region63: #{decoder_forward.11} parent=5 // pred_region
        %s403 = ssub.s32 %s23, 1
        // Predicated region
        $region65: #{decoder_forward.11} parent=63 // pred_check
          %p404 = pneg %p206
        $region66: #{decoder_forward.11} parent=63 // pred_check_branch
          %406 = sbr.rel (%p404) target = $region68
        $region67: #{decoder_forward.11} parent=63 // pred_region
          %408 = dma.done [#allocation3], 512
        $region68: #{decoder_forward.11} parent=63 // pred_fallthru
          _
        %p409 = scmp.lt.s32.totalorder %s28, 1
        %s410 = scalar_select %p409, %s28, 1
        %s411 = smul.addr %s410, 8
        %s412 = scalar_lea.vmem %s0, %s411
        %p413 = pneg %p49
        %p414 = pneg %p46
        %p415 = scmp.lt.s32.totalorder %s28, 1
        %s416 = scalar_select %p415, %s28, 1
        %s417 = smul.addr %s416, 2
        %s418 = smul.addr %s417, 8
        %s419 = scalar_lea.vmem %s1, %s418
        %p420 = pneg %p75
        %p421 = pneg %p72
        %p422 = scmp.lt.s32.totalorder %s28, 1
        %s423 = scalar_select %p422, %s28, 1
        %s424 = smul.addr %s423, 8
        %s425 = scalar_lea.vmem %s2, %s424
        %p426 = pneg %p101
        %p427 = pneg %p98
        %p428 = pneg %p122
        %p429 = pneg %p119
        %p430 = pneg %p143
        %p431 = pneg %p140
        %p432 = pneg %p164
        %p433 = pneg %p161
        %p434 = pneg %p185
        %p435 = pneg %p182
        %p436 = pneg %p206
        %p437 = pneg %p203
        %p438 = pneg %p227
        %p439 = pneg %p224
        %p440 = pneg %p248
        %p441 = pneg %p245
        %p442 = pneg %p269
        %p443 = pneg %p266
        %p444 = pneg %p295
        %p445 = pneg %p292
        %p446 = scmp.lt.s32.totalorder %s28, 1
        %s447 = scalar_select %p446, %s28, 1
        %s448 = smul.addr %s447, 8
        %s449 = scalar_lea.vmem %s11, %s448
        %p450 = pneg %p321
        %p451 = pneg %p318
        %s452 = sand.u32 %s308, 1
        %s453 = scalar_lea.sflag [#allocation4], %s452
        %s454 = sand.u32 %s308, 1
        %s455 = smul.addr %s454, 32
        %s456 = scalar_lea.vmem [#allocation5], %s455
        %p457 = scmp.lt.s32.totalorder %s28, 1
        %s458 = scalar_select %p457, %s28, 1
        %s459 = smul.addr %s458, 8
        %s460 = scalar_lea.vmem %s0, %s459
        %p461 = scmp.lt.s32.totalorder %s28, 1
        %s462 = scalar_select %p461, %s28, 1
        %s463 = smul.addr %s462, 2
        %s464 = smul.addr %s463, 8
        %s465 = scalar_lea.vmem %s1, %s464
        %p466 = scmp.lt.s32.totalorder %s28, 1
        %s467 = scalar_select %p466, %s28, 1
        %s468 = smul.addr %s467, 8
        %s469 = scalar_lea.vmem %s2, %s468
        %p470 = scmp.lt.s32.totalorder %s28, 1
        %s471 = scalar_select %p470, %s28, 1
        %s472 = smul.addr %s471, 8
        %s473 = scalar_lea.vmem %s11, %s472
        %v474 = vld [vmem:[%s460] sm:$0xff]
        %v475 = vld [vmem:[%s465] sm:$0xff]
        %v476 = vld [vmem:[%s465 + $0x8] sm:$0x3]
        %v477 = vld [vmem:[%s469] sm:$0xff]
        %v478 = vld [vmem:[%s3] sm:$0xff]
        %v479 = vld [vmem:[%s3 + $0x8] sm:$0xff]
        %v480 = vld [vmem:[%s3 + $0x10] sm:$0xff]
        %v481 = vld [vmem:[%s3 + $0x18] sm:$0xff]
        %v482 = vld [vmem:[%s4] sm:$0x1]
        %v484 = vperm.slane %v482, 0
        %vm486 = vcmask 261120
        %v488 = vsel %vm486, %v474, 0
        %490 = vmatpush.msra.mxu0 0.0
        %491 = vmatpush.msra.mxu0 0.0
        %492 = vmatpush.msra.mxu0 0.0
        %493 = vmatpush.msra.mxu0 0.0
        %494 = vmatpush.msra.mxu0 0.0
        %495 = vmatpush.msra.mxu0 0.0
        %496 = vmatpush.msra.mxu0 0.0
        %497 = vmatpush.msra.mxu0 0.0
        %498 = vmatpush.msra.mxu0 0.0
        %499 = vmatpush.msra.mxu0 0.0
        %500 = vmatpush.msra.mxu0 0.0
        %501 = vmatpush.msra.mxu0 0.0
        %502 = vmatpush.msra.mxu0 %v481
        %503 = vmatpush.msra.mxu0 %v480
        %504 = vmatpush.msra.mxu0 %v479
        %505 = vmatpush.msra.mxu0 %v478
        %506 = vmatmul.f32.gmra.mxu0 %v488
        %v507 = vpop.f32.mrf.mxu0
        %v508 = vadd.f32 %v484, %v507
        %509 = vdwg.mxu0
        %v510 = vld [vmem:[%s5] sm:$0xff]
        %v511 = vld [vmem:[%s5 + $0x8] sm:$0xff]
        %v512 = vld [vmem:[%s5 + $0x10] sm:$0xff]
        %v513 = vld [vmem:[%s5 + $0x18] sm:$0xff]
        %v514 = vld [vmem:[%s6] sm:$0x1]
        %v516 = vperm.slane %v514, 0
        %v519 = vsel %vm486, %v475, 0
        %v522 = vsel %vm486, %v476, 0
        %524 = vmatpush.msra.mxu0 0.0
        %525 = vmatpush.msra.mxu0 0.0
        %526 = vmatpush.msra.mxu0 0.0
        %527 = vmatpush.msra.mxu0 0.0
        %528 = vmatpush.msra.mxu0 0.0
        %529 = vmatpush.msra.mxu0 0.0
        %530 = vmatpush.msra.mxu0 0.0
        %531 = vmatpush.msra.mxu0 0.0
        %532 = vmatpush.msra.mxu0 0.0
        %533 = vmatpush.msra.mxu0 0.0
        %534 = vmatpush.msra.mxu0 0.0
        %535 = vmatpush.msra.mxu0 0.0
        %536 = vmatpush.msra.mxu0 %v513
        %537 = vmatpush.msra.mxu0 %v512
        %538 = vmatpush.msra.mxu0 %v511
        %539 = vmatpush.msra.mxu0 %v510
        %540 = vmatmul.f32.gmra.mxu0 %v519
        %v541 = vpop.f32.mrf.mxu0
        %v542 = vadd.f32 %v516, %v541
        %543 = vmatmul.f32.gmra.mxu0 %v522
        %v544 = vpop.f32.mrf.mxu0
        %v545 = vadd.f32 %v516, %v544
        %546 = vdwg.mxu0
        %vm547 = vcmask 64512
        %v549 = vsel %vm547, %v508, 0
        %v552 = vsel %vm547, %v542, 0
        %v555 = vsel %vm547, %v545, 0
        %557 = vmatpush.xpose.msra.mxu0 0.0
        %558 = vmatpush.xpose.msra.mxu0 0.0
        %559 = vmatpush.xpose.msra.mxu0 0.0
        %560 = vmatpush.xpose.msra.mxu0 0.0
        %561 = vmatpush.xpose.msra.mxu0 0.0
        %562 = vmatpush.xpose.msra.mxu0 0.0
        %563 = vmatpush.xpose.msra.mxu0 0.0
        %564 = vmatpush.xpose.msra.mxu0 0.0
        %565 = vmatpush.xpose.msra.mxu0 0.0
        %566 = vmatpush.xpose.msra.mxu0 0.0
        %567 = vmatpush.xpose.msra.mxu0 0.0
        %568 = vmatpush.xpose.msra.mxu0 0.0
        %569 = vmatpush.xpose.msra.mxu0 0.0
        %570 = vmatpush.xpose.msra.mxu0 0.0
        %571 = vmatpush.xpose.msra.mxu0 %v555
        %572 = vmatpush.xpose.msra.mxu0 %v552
        %573 = vmatmul.f32.gmra.mxu0 %v549
        %v574 = vpop.f32.mrf.mxu0
        %v575 = vadd.f32 0.0, %v574
        %576 = vdwg.mxu0
        %v577 = vmul.f32 %v575, 0.35355338
        %vm578 = vcmp.eq.f32.partialorder %v477, 0.0
        %v579 = vsel %vm578, -1e+10, %v577
        %vm580 = vcmask 80896
        %v581 = vsel %vm580, %v579, -inf
        %582 = vmax.xlane.f32.xlu0 %v581
        %v583 = vpop.xlane.xlu0 %582
        %v584 = vsub.f32 %v579, %v583
        %v585 = vmul.f32 %v584, 1.442695
        %v586 = vpow.pop %v585
        %v587 = vsel %vm580, %v586, 0.0
        %588 = vadd.xlane.f32.xlu0 %v587
        %v589 = vpop.xlane.xlu0 %588
        %v590 = vrcp.pop %v589
        %v591 = vmul.f32 %v586, %v590
        %592 = vst.msk [vmem:[%s456] sm:$0xff] %vm580, %v591
        %593 = vrot.lane.b32.xlu0 %v542, 96
        %v594 = vpop.permute.xlu0 %593
        %595 = vrot.lane.b32.xlu0 %v545, 96
        %v596 = vpop.permute.xlu0 %595
        %v599 = vsel %vm580, %v591, 0
        %vm601 = vcmask 1041408
        %v602 = vsel %vm601, %v596, 0
        %604 = vmatpush.msra.mxu0 0.0
        %605 = vmatpush.msra.mxu0 0.0
        %606 = vmatpush.msra.mxu0 0.0
        %607 = vmatpush.msra.mxu0 0.0
        %608 = vmatpush.msra.mxu0 0.0
        %609 = vmatpush.msra.mxu0 0.0
        %610 = vmatpush.msra.mxu0 0.0
        %611 = vmatpush.msra.mxu0 0.0
        %612 = vmatpush.msra.mxu0 0.0
        %613 = vmatpush.msra.mxu0 0.0
        %614 = vmatpush.msra.mxu0 0.0
        %615 = vmatpush.msra.mxu0 0.0
        %616 = vmatpush.msra.mxu0 0.0
        %617 = vmatpush.msra.mxu0 0.0
        %618 = vmatpush.msra.mxu0 %v602
        %619 = vmatpush.msra.mxu0 %v594
        %620 = vmatmul.f32.gmra.mxu0 %v599
        %v621 = vpop.f32.mrf.mxu0
        %v622 = vadd.f32 0.0, %v621
        %623 = vdwg.mxu0
        %624 = vrot.lane.b32.xlu0 %v508, 120
        %v625 = vpop.permute.xlu0 %624
        %626 = vrot.lane.b32.xlu0 %v542, 120
        %v627 = vpop.permute.xlu0 %626
        %628 = vrot.lane.b32.xlu0 %v545, 120
        %v629 = vpop.permute.xlu0 %628
        %v630 = vsel %vm547, %v625, 0
        %v632 = vsel %vm547, %v627, 0
        %v634 = vsel %vm547, %v629, 0
        %636 = vmatpush.xpose.msra.mxu0 0.0
        %637 = vmatpush.xpose.msra.mxu0 0.0
        %638 = vmatpush.xpose.msra.mxu0 0.0
        %639 = vmatpush.xpose.msra.mxu0 0.0
        %640 = vmatpush.xpose.msra.mxu0 0.0
        %641 = vmatpush.xpose.msra.mxu0 0.0
        %642 = vmatpush.xpose.msra.mxu0 0.0
        %643 = vmatpush.xpose.msra.mxu0 0.0
        %644 = vmatpush.xpose.msra.mxu0 0.0
        %645 = vmatpush.xpose.msra.mxu0 0.0
        %646 = vmatpush.xpose.msra.mxu0 0.0
        %647 = vmatpush.xpose.msra.mxu0 0.0
        %648 = vmatpush.xpose.msra.mxu0 0.0
        %649 = vmatpush.xpose.msra.mxu0 0.0
        %650 = vmatpush.xpose.msra.mxu0 %v634
        %651 = vmatpush.xpose.msra.mxu0 %v632
        %652 = vmatmul.f32.gmra.mxu0 %v630
        %v653 = vpop.f32.mrf.mxu0
        %v654 = vadd.f32 0.0, %v653
        %655 = vdwg.mxu0
        %v656 = vmul.f32 %v654, 0.35355338
        %v657 = vsel %vm578, -1e+10, %v656
        %v658 = vsel %vm580, %v657, -inf
        %659 = vmax.xlane.f32.xlu0 %v658
        %v660 = vpop.xlane.xlu0 %659
        %v661 = vsub.f32 %v657, %v660
        %v662 = vmul.f32 %v661, 1.442695
        %v663 = vpow.pop %v662
        %v664 = vsel %vm580, %v663, 0.0
        %665 = vadd.xlane.f32.xlu0 %v664
        %v666 = vpop.xlane.xlu0 %665
        %v667 = vrcp.pop %v666
        %v668 = vmul.f32 %v663, %v667
        %s669 = scalar_lea.vmem %s456, 8 [#allocation5]
        %670 = vst.msk [vmem:[%s669] sm:$0xff] %vm580, %v668
        %671 = vrot.lane.b32.xlu0 %v542, 88
        %v672 = vpop.permute.xlu0 %671
        %673 = vrot.lane.b32.xlu0 %v545, 88
        %v674 = vpop.permute.xlu0 %673
        %v677 = vsel %vm580, %v668, 0
        %v679 = vsel %vm601, %v674, 0
        %681 = vmatpush.msra.mxu0 0.0
        %682 = vmatpush.msra.mxu0 0.0
        %683 = vmatpush.msra.mxu0 0.0
        %684 = vmatpush.msra.mxu0 0.0
        %685 = vmatpush.msra.mxu0 0.0
        %686 = vmatpush.msra.mxu0 0.0
        %687 = vmatpush.msra.mxu0 0.0
        %688 = vmatpush.msra.mxu0 0.0
        %689 = vmatpush.msra.mxu0 0.0
        %690 = vmatpush.msra.mxu0 0.0
        %691 = vmatpush.msra.mxu0 0.0
        %692 = vmatpush.msra.mxu0 0.0
        %693 = vmatpush.msra.mxu0 0.0
        %694 = vmatpush.msra.mxu0 0.0
        %695 = vmatpush.msra.mxu0 %v679
        %696 = vmatpush.msra.mxu0 %v672
        %697 = vmatmul.f32.gmra.mxu0 %v677
        %v698 = vpop.f32.mrf.mxu0
        %v699 = vadd.f32 0.0, %v698
        %700 = vdwg.mxu0
        %701 = vrot.lane.b32.xlu0 %v508, 112
        %v702 = vpop.permute.xlu0 %701
        %703 = vrot.lane.b32.xlu0 %v542, 112
        %v704 = vpop.permute.xlu0 %703
        %705 = vrot.lane.b32.xlu0 %v545, 112
        %v706 = vpop.permute.xlu0 %705
        %v707 = vsel %vm547, %v702, 0
        %v709 = vsel %vm547, %v704, 0
        %v711 = vsel %vm547, %v706, 0
        %713 = vmatpush.xpose.msra.mxu0 0.0
        %714 = vmatpush.xpose.msra.mxu0 0.0
        %715 = vmatpush.xpose.msra.mxu0 0.0
        %716 = vmatpush.xpose.msra.mxu0 0.0
        %717 = vmatpush.xpose.msra.mxu0 0.0
        %718 = vmatpush.xpose.msra.mxu0 0.0
        %719 = vmatpush.xpose.msra.mxu0 0.0
        %720 = vmatpush.xpose.msra.mxu0 0.0
        %721 = vmatpush.xpose.msra.mxu0 0.0
        %722 = vmatpush.xpose.msra.mxu0 0.0
        %723 = vmatpush.xpose.msra.mxu0 0.0
        %724 = vmatpush.xpose.msra.mxu0 0.0
        %725 = vmatpush.xpose.msra.mxu0 0.0
        %726 = vmatpush.xpose.msra.mxu0 0.0
        %727 = vmatpush.xpose.msra.mxu0 %v711
        %728 = vmatpush.xpose.msra.mxu0 %v709
        %729 = vmatmul.f32.gmra.mxu0 %v707
        %v730 = vpop.f32.mrf.mxu0
        %v731 = vadd.f32 0.0, %v730
        %732 = vdwg.mxu0
        %v733 = vmul.f32 %v731, 0.35355338
        %v734 = vsel %vm578, -1e+10, %v733
        %v735 = vsel %vm580, %v734, -inf
        %736 = vmax.xlane.f32.xlu0 %v735
        %v737 = vpop.xlane.xlu0 %736
        %v738 = vsub.f32 %v734, %v737
        %v739 = vmul.f32 %v738, 1.442695
        %v740 = vpow.pop %v739
        %v741 = vsel %vm580, %v740, 0.0
        %742 = vadd.xlane.f32.xlu0 %v741
        %v743 = vpop.xlane.xlu0 %742
        %v744 = vrcp.pop %v743
        %v745 = vmul.f32 %v740, %v744
        %s746 = scalar_lea.vmem %s456, 16 [#allocation5]
        %747 = vst.msk [vmem:[%s746] sm:$0xff] %vm580, %v745
        %748 = vrot.lane.b32.xlu0 %v542, 80
        %v749 = vpop.permute.xlu0 %748
        %750 = vrot.lane.b32.xlu0 %v545, 80
        %v751 = vpop.permute.xlu0 %750
        %v754 = vsel %vm580, %v745, 0
        %v756 = vsel %vm601, %v751, 0
        %758 = vmatpush.msra.mxu0 0.0
        %759 = vmatpush.msra.mxu0 0.0
        %760 = vmatpush.msra.mxu0 0.0
        %761 = vmatpush.msra.mxu0 0.0
        %762 = vmatpush.msra.mxu0 0.0
        %763 = vmatpush.msra.mxu0 0.0
        %764 = vmatpush.msra.mxu0 0.0
        %765 = vmatpush.msra.mxu0 0.0
        %766 = vmatpush.msra.mxu0 0.0
        %767 = vmatpush.msra.mxu0 0.0
        %768 = vmatpush.msra.mxu0 0.0
        %769 = vmatpush.msra.mxu0 0.0
        %770 = vmatpush.msra.mxu0 0.0
        %771 = vmatpush.msra.mxu0 0.0
        %772 = vmatpush.msra.mxu0 %v756
        %773 = vmatpush.msra.mxu0 %v749
        %774 = vmatmul.f32.gmra.mxu0 %v754
        %v775 = vpop.f32.mrf.mxu0
        %v776 = vadd.f32 0.0, %v775
        %777 = vdwg.mxu0
        %778 = vrot.lane.b32.xlu0 %v508, 104
        %v779 = vpop.permute.xlu0 %778
        %780 = vrot.lane.b32.xlu0 %v542, 104
        %v781 = vpop.permute.xlu0 %780
        %782 = vrot.lane.b32.xlu0 %v545, 104
        %v783 = vpop.permute.xlu0 %782
        %v784 = vsel %vm547, %v779, 0
        %v786 = vsel %vm547, %v781, 0
        %v788 = vsel %vm547, %v783, 0
        %790 = vmatpush.xpose.msra.mxu0 0.0
        %791 = vmatpush.xpose.msra.mxu0 0.0
        %792 = vmatpush.xpose.msra.mxu0 0.0
        %793 = vmatpush.xpose.msra.mxu0 0.0
        %794 = vmatpush.xpose.msra.mxu0 0.0
        %795 = vmatpush.xpose.msra.mxu0 0.0
        %796 = vmatpush.xpose.msra.mxu0 0.0
        %797 = vmatpush.xpose.msra.mxu0 0.0
        %798 = vmatpush.xpose.msra.mxu0 0.0
        %799 = vmatpush.xpose.msra.mxu0 0.0
        %800 = vmatpush.xpose.msra.mxu0 0.0
        %801 = vmatpush.xpose.msra.mxu0 0.0
        %802 = vmatpush.xpose.msra.mxu0 0.0
        %803 = vmatpush.xpose.msra.mxu0 0.0
        %804 = vmatpush.xpose.msra.mxu0 %v788
        %805 = vmatpush.xpose.msra.mxu0 %v786
        %806 = vmatmul.f32.gmra.mxu0 %v784
        %v807 = vpop.f32.mrf.mxu0
        %v808 = vadd.f32 0.0, %v807
        %809 = vdwg.mxu0
        %v810 = vmul.f32 %v808, 0.35355338
        %v811 = vsel %vm578, -1e+10, %v810
        %v812 = vsel %vm580, %v811, -inf
        %813 = vmax.xlane.f32.xlu0 %v812
        %v814 = vpop.xlane.xlu0 %813
        %v815 = vsub.f32 %v811, %v814
        %v816 = vmul.f32 %v815, 1.442695
        %v817 = vpow.pop %v816
        %v818 = vsel %vm580, %v817, 0.0
        %819 = vadd.xlane.f32.xlu0 %v818
        %v820 = vpop.xlane.xlu0 %819
        %v821 = vrcp.pop %v820
        %v822 = vmul.f32 %v817, %v821
        %s823 = scalar_lea.vmem %s456, 24 [#allocation5]
        %824 = vst.msk [vmem:[%s823] sm:$0xff] %vm580, %v822
        %825 = vrot.lane.b32.xlu0 %v542, 72
        %v826 = vpop.permute.xlu0 %825
        %827 = vrot.lane.b32.xlu0 %v545, 72
        %v828 = vpop.permute.xlu0 %827
        %v831 = vsel %vm580, %v822, 0
        %v833 = vsel %vm601, %v828, 0
        %835 = vmatpush.msra.mxu0 0.0
        %836 = vmatpush.msra.mxu0 0.0
        %837 = vmatpush.msra.mxu0 0.0
        %838 = vmatpush.msra.mxu0 0.0
        %839 = vmatpush.msra.mxu0 0.0
        %840 = vmatpush.msra.mxu0 0.0
        %841 = vmatpush.msra.mxu0 0.0
        %842 = vmatpush.msra.mxu0 0.0
        %843 = vmatpush.msra.mxu0 0.0
        %844 = vmatpush.msra.mxu0 0.0
        %845 = vmatpush.msra.mxu0 0.0
        %846 = vmatpush.msra.mxu0 0.0
        %847 = vmatpush.msra.mxu0 0.0
        %848 = vmatpush.msra.mxu0 0.0
        %849 = vmatpush.msra.mxu0 %v833
        %850 = vmatpush.msra.mxu0 %v826
        %851 = vmatmul.f32.gmra.mxu0 %v831
        %v852 = vpop.f32.mrf.mxu0
        %v853 = vadd.f32 0.0, %v852
        %854 = vdwg.mxu0
        %856 = vrot.lane.b32.xlu0 %v699, 8
        %v857 = vpop.permute.xlu0 %856
        %860 = vrot.lane.b32.xlu0 %v776, 16
        %v861 = vpop.permute.xlu0 %860
        %864 = vrot.lane.b32.xlu0 %v853, 24
        %v865 = vpop.permute.xlu0 %864
        %v867 = vsel %vm547, %v622, %v857
        %vm868 = vcmask 130048
        %v869 = vsel %vm868, %v867, %v861
        %vm870 = vcmask 195584
        %v871 = vsel %vm870, %v869, %v865
        %v872 = vld [vmem:[#allocation2] sm:$0xff]
        %v873 = vld [vmem:[#allocation2 + $0x8] sm:$0xff]
        %v874 = vld [vmem:[#allocation2 + $0x10] sm:$0xff]
        %v875 = vld [vmem:[#allocation2 + $0x18] sm:$0xff]
        %v876 = vld [vmem:[%s8] sm:$0x1]
        %v878 = vperm.slane %v876, 0
        %v881 = vsel %vm486, %v871, 0
        %883 = vmatpush.msra.mxu0 0.0
        %884 = vmatpush.msra.mxu0 0.0
        %885 = vmatpush.msra.mxu0 0.0
        %886 = vmatpush.msra.mxu0 0.0
        %887 = vmatpush.msra.mxu0 0.0
        %888 = vmatpush.msra.mxu0 0.0
        %889 = vmatpush.msra.mxu0 0.0
        %890 = vmatpush.msra.mxu0 0.0
        %891 = vmatpush.msra.mxu0 0.0
        %892 = vmatpush.msra.mxu0 0.0
        %893 = vmatpush.msra.mxu0 0.0
        %894 = vmatpush.msra.mxu0 0.0
        %895 = vmatpush.msra.mxu0 %v875
        %896 = vmatpush.msra.mxu0 %v874
        %897 = vmatpush.msra.mxu0 %v873
        %898 = vmatpush.msra.mxu0 %v872
        %899 = vmatmul.f32.gmra.mxu0 %v881
        %v900 = vpop.f32.mrf.mxu0
        %v901 = vadd.f32 %v878, %v900
        %902 = vdwg.mxu0
        %v903 = vadd.f32 %v474, %v901
        %v904 = vld [vmem:[%s9] sm:$0x1]
        %v905 = vld [vmem:[%s10] sm:$0x1]
        %v906 = vsel %vm486, %v903, 0.0
        %907 = vadd.xlane.f32.xlu0 %v906
        %v908 = vpop.xlane.xlu0 %907
        %v909 = vrcp.pop 32.0
        %v910 = vmul.f32 32.0, %v909
        %v911 = vsub.f32 1.0, %v910
        %v912 = vmul.f32 %v909, %v911
        %v913 = vadd.f32 %v909, %v912
        %vm914 = vweird.f32 %v909
        %v915 = vsel %vm914, %v909, %v913
        %v916 = vmul.f32 %v908, %v915
        %v917 = vsub.f32 %v903, %v916
        %v918 = vmul.f32 %v917, %v917
        %v919 = vsel %vm486, %v918, 0.0
        %920 = vadd.xlane.f32.xlu0 %v919
        %v921 = vpop.xlane.xlu0 %920
        %v922 = vmul.f32 %v921, %v915
        %v923 = vadd.f32 %v922, 1e-05
        %v924 = vrsqrt.pop %v923
        %v925 = vmul.f32 %v924, %v923
        %v926 = vmul.f32 %v925, %v924
        %v927 = vmul.f32 0.5, %v926
        %v928 = vsub.f32 1.5, %v927
        %v929 = vmul.f32 %v924, %v928
        %vm930 = vweird.f32 %v923
        %vm931 = vweird.f32 %v924
        %vm932 = vmor %vm930, %vm931
        %v933 = vsel %vm932, %v924, %v929
        %v934 = vmul.f32 %v917, %v933
        %v936 = vperm.slane %v904, 0
        %v938 = vmul.f32 %v934, %v936
        %v940 = vperm.slane %v905, 0
        %v942 = vadd.f32 %v938, %v940
        %943 = vst.msk [vmem:[%s473] sm:$0xff] %vm486, %v942
        %p944 = scmp.lt.s32.totalorder %s28, 1
        %s945 = scalar_select %p944, %s28, 1
        %s946 = smul.addr %s945, 8
        %s947 = scalar_lea.vmem %s11, %s946
        %s948 = sand.u32 %s308, 1
        %s949 = scalar_lea.sflag [#allocation4], %s948
        %s950 = sand.u32 %s308, 1
        %s951 = smul.addr %s950, 32
        %s952 = scalar_lea.vmem [#allocation5], %s951
        // Predicated region
        $region69: #{decoder_forward.11} parent=63 // pred_check
          %p953 = pneg %p292
        $region70: #{decoder_forward.11} parent=63 // pred_check_branch
          %955 = sbr.rel (%p953) target = $region72
        $region71: #{decoder_forward.11} parent=63 // pred_region
          _
        $region72: #{decoder_forward.11} parent=63 // pred_fallthru
          _
        // Predicated region
        $region73: #{decoder_forward.11} parent=63 // pred_check
          %p956 = pneg %p318
        $region74: #{decoder_forward.11} parent=63 // pred_check_branch
          %958 = sbr.rel (%p956) target = $region76
        $region75: #{decoder_forward.11} parent=63 // pred_region
          %960 = vsyncadd %s949, 0
          %s961 = smul.addr %s28, 4
          %s962 = smul.addr %s961, 8
          %s963 = scalar_lea.hbm %s12, %s962
          %s964 = sshll.u32 %s952, 4
          %s965 = int_to_ptr.vmem [resolvable:$true] %s964
          %s966 = sshll.u32 %s963, 4
          %s967 = int_to_ptr.hbm [resolvable:$true] %s966
          %972 = dma.vmem_to_hbm [thread:$0]  %s965, 512, %s967, %s949, 128, 128, 8
        $region76: #{decoder_forward.11} parent=63 // pred_fallthru
          _
      $region64: #{decoder_forward.11} parent=5 // pred_fallthru
        _
      %p973 = scmp.le.s32.totalorder 2, %s23
      // Predicated region
      $region77: #{decoder_forward.11} parent=5 // pred_check
        %p974 = pneg %p973
      $region78: #{decoder_forward.11} parent=5 // pred_check_branch
        %976 = sbr.rel (%p974) target = $region80
      $region79: #{decoder_forward.11} parent=5 // pred_region
        %s977 = ssub.s32 %s23, 2
        // Predicated region
        $region81: #{decoder_forward.11} parent=79 // pred_check
          %p978 = pneg %p298
        $region82: #{decoder_forward.11} parent=79 // pred_check_branch
          %980 = sbr.rel (%p978) target = $region84
        $region83: #{decoder_forward.11} parent=79 // pred_region
          %p981 = scmp.lt.s32.totalorder %s29, 1
          %s982 = scalar_select %p981, %s29, 1
          %s983 = smul.addr %s982, 8
          %s984 = scalar_lea.vmem %s11, %s983
        $region84: #{decoder_forward.11} parent=79 // pred_fallthru
          _
        // Predicated region
        $region85: #{decoder_forward.11} parent=79 // pred_check
          %p985 = pneg %p324
        $region86: #{decoder_forward.11} parent=79 // pred_check_branch
          %987 = sbr.rel (%p985) target = $region88
        $region87: #{decoder_forward.11} parent=79 // pred_region
          %s988 = sand.u32 %s309, 1
          %s989 = scalar_lea.sflag [#allocation4], %s988
          %s990 = sand.u32 %s309, 1
          %s991 = smul.addr %s990, 32
          %s992 = scalar_lea.vmem [#allocation5], %s991
          %994 = dma.done %s989, 512
        $region88: #{decoder_forward.11} parent=79 // pred_fallthru
          _
      $region80: #{decoder_forward.11} parent=5 // pred_fallthru
        _
    $region6: #{decoder_forward.11} parent=1 // loop_footer
      %s27 = sadd.s32 1, %s23
    $region7: #{decoder_forward.11} parent=1 // loop_footer_branch
      %22 = sbr.rel target = $region3
    $region8: #{decoder_forward.11} parent=1 // loop_exit
      _
    %995 = vsyncpa [#allocation3], 1
    %s996 = scalar_lea.sflag [#allocation3], 1
    %997 = vsyncpa %s996, 1
    %998 = vsyncpa [#allocation4], 1
    %s999 = scalar_lea.sflag [#allocation4], 1
    %1000 = vsyncpa %s999, 1

// kernel: decoder_forward.13
$region0: #{decoder_forward.13}
  #allocation0 [shape = 'u32[]', space=smem, size = 0x4, offset = 0x4, fixed_abs, tag = 'smem constant byte address 0x4 - core index']
  #allocation1 [shape = 'u32[72,128]{1,0:T(1,128)}', space=vmem, size = 0x9000, scoped, tag = 'internal scratch']
  %s0 = inlined_call_operand.vmem [shape: f32[2,8,32], index: 0, kind: input, shape index: {}]
  %s1 = inlined_call_operand.vmem [shape: f32[32,50], index: 1, kind: input, shape index: {}]
  %s2 = inlined_call_operand.vmem [shape: f32[1,50], index: 2, kind: input, shape index: {}]
  %s3 = inlined_call_operand.hbm [shape: f32[2,8,50], index: 3, kind: output, shape index: {}]
  %s4 = sld [smem:[#allocation0]]
  $region45: #{decoder_forward.13} parent=0
    _
  %s6 = ssub.s32 1, %s4
  %s7 = scalar_select 0, %s6, %s4
  $region1: #{decoder_forward.13} parent=0
    #allocation2 [shape = 'u8[8192]{0}', space=vmem, size = 0x2000, scoped, tag = 'output window, operand 0']
    #allocation3 [shape = 's32[2]{0}', space=sflag, size = 0x8, scoped, tag = 'scoped memory for decoder_forward.13']
    %8 = vsyncpa [#allocation3], 0
    %s9 = scalar_lea.sflag [#allocation3], 1
    %10 = vsyncpa %s9, 0
    loop: start=0, step=1, limit=4
    $region2: #{decoder_forward.13} parent=1 // loop_pre_header
      _
    $region3: #{decoder_forward.13} parent=1 // loop_header
      %s12 = sphi 0, %s16
      %p13 = scmp.ge.s32.totalorder %s12, 4
      %s22 = sphi 0, %s24
      %s25 = sphi 0, %s22
      %s26 = sphi 0, %s25
      %s42 = sphi 0, %s26
      %s46 = sphi 0, %s46
      %s48 = sphi 0, %s46
      %s49 = sphi 0, %s48
      %s63 = sphi 0, %s49
      %s67 = sphi 0, %s67
      %s69 = sphi 0, %s67
      %s70 = sphi 0, %s69
      %s84 = sphi 0, %s70
      %s90 = sphi 0, %s92
      %s93 = sphi 0, %s90
      %s94 = sphi 0, %s93
      %s110 = sphi 0, %s94
    $region4: #{decoder_forward.13} parent=1 // loop_header_branch
      %15 = sbr.rel (%p13) target = $region8
    $region5: #{decoder_forward.13} parent=1 // loop_body
      %s17 = ssub.s32 %s12, 1
      %s18 = ssub.s32 %s12, 2
      %s19 = sadd.s32 %s12, 1
      %s20 = ssub.s32 %s12, %s19
      %p21 = scmp.eq.s32.totalorder %s20, 0
      %s23 = sadd.s32 %s22, 1
      %s24 = scalar_select %p21, %s22, %s23
      %p27 = pneg %p21
      %p28 = scmp.eq.s32.totalorder %s12, 1
      %p29 = por %p27, %p28
      %p30 = scmp.ne.s32.totalorder %s22, %s25
      %p31 = scmp.eq.s32.totalorder %s12, 0
      %p32 = por %p30, %p31
      %p33 = scmp.ne.s32.totalorder %s22, %s25
      %p34 = scmp.eq.s32.totalorder %s17, 1
      %p35 = por %p33, %p34
      %p36 = scmp.ne.s32.totalorder %s25, %s26
      %p37 = scmp.eq.s32.totalorder %s17, 0
      %p38 = por %p36, %p37
      %p39 = scmp.ne.s32.totalorder %s25, %s26
      %p40 = scmp.eq.s32.totalorder %s18, 1
      %p41 = por %p39, %p40
      %p43 = scmp.ne.s32.totalorder %s26, %s42
      %p44 = scmp.eq.s32.totalorder %s18, 0
      %p45 = por %p43, %p44
      %s47 = sadd.s32 %s46, 1
      %p50 = scmp.eq.s32.totalorder %s12, 1
      %p51 = scmp.ne.s32.totalorder %s46, %s48
      %p52 = scmp.eq.s32.totalorder %s12, 0
      %p53 = por %p51, %p52
      %p54 = scmp.ne.s32.totalorder %s46, %s48
      %p55 = scmp.eq.s32.totalorder %s17, 1
      %p56 = por %p54, %p55
      %p57 = scmp.ne.s32.totalorder %s48, %s49
      %p58 = scmp.eq.s32.totalorder %s17, 0
      %p59 = por %p57, %p58
      %p60 = scmp.ne.s32.totalorder %s48, %s49
      %p61 = scmp.eq.s32.totalorder %s18, 1
      %p62 = por %p60, %p61
      %p64 = scmp.ne.s32.totalorder %s49, %s63
      %p65 = scmp.eq.s32.totalorder %s18, 0
      %p66 = por %p64, %p65
      %s68 = sadd.s32 %s67, 1
      %p71 = scmp.eq.s32.totalorder %s12, 1
      %p72 = scmp.ne.s32.totalorder %s67, %s69
      %p73 = scmp.eq.s32.totalorder %s12, 0
      %p74 = por %p72, %p73
      %p75 = scmp.ne.s32.totalorder %s67, %s69
      %p76 = scmp.eq.s32.totalorder %s17, 1
      %p77 = por %p75, %p76
      %p78 = scmp.ne.s32.totalorder %s69, %s70
      %p79 = scmp.eq.s32.totalorder %s17, 0
      %p80 = por %p78, %p79
      %p81 = scmp.ne.s32.totalorder %s69, %s70
      %p82 = scmp.eq.s32.totalorder %s18, 1
      %p83 = por %p81, %p82
      %p85 = scmp.ne.s32.totalorder %s70, %s84
      %p86 = scmp.eq.s32.totalorder %s18, 0
      %p87 = por %p85, %p86
      %s88 = ssub.s32 %s12, %s19
      %p89 = scmp.eq.s32.totalorder %s88, 0
      %s91 = sadd.s32 %s90, 1
      %s92 = scalar_select %p89, %s90, %s91
      %p95 = pneg %p89
      %p96 = scmp.eq.s32.totalorder %s12, 1
      %p97 = por %p95, %p96
      %p98 = scmp.ne.s32.totalorder %s90, %s93
      %p99 = scmp.eq.s32.totalorder %s12, 0
      %p100 = por %p98, %p99
      %p101 = scmp.ne.s32.totalorder %s90, %s93
      %p102 = scmp.eq.s32.totalorder %s17, 1
      %p103 = por %p101, %p102
      %p104 = scmp.ne.s32.totalorder %s93, %s94
      %p105 = scmp.eq.s32.totalorder %s17, 0
      %p106 = por %p104, %p105
      %p107 = scmp.ne.s32.totalorder %s93, %s94
      %p108 = scmp.eq.s32.totalorder %s18, 1
      %p109 = por %p107, %p108
      %p111 = scmp.ne.s32.totalorder %s94, %s110
      %p112 = scmp.eq.s32.totalorder %s18, 0
      %p113 = por %p111, %p112
      %p114 = scmp.le.s32.totalorder 1, %s12
      %p115 = scmp.lt.s32.totalorder %s12, 3
      %p116 = pnand %p114, %p115
      %p117 = pneg %p116
      // Predicated region
      $region9: #{decoder_forward.13} parent=5 // pred_check
        _
      $region10: #{decoder_forward.13} parent=5 // pred_check_branch
        %119 = sbr.rel (%p116) target = $region12
      $region11: #{decoder_forward.13} parent=5 // pred_region
        %s120 = ssub.s32 %s12, 1
        // Predicated region
        $region13: #{decoder_forward.13} parent=11 // pred_check
          %p121 = pneg %p59
        $region14: #{decoder_forward.13} parent=11 // pred_check_branch
          %123 = sbr.rel (%p121) target = $region16
        $region15: #{decoder_forward.13} parent=11 // pred_region
          _
        $region16: #{decoder_forward.13} parent=11 // pred_fallthru
          _
        // Predicated region
        $region17: #{decoder_forward.13} parent=11 // pred_check
          %p124 = pneg %p80
        $region18: #{decoder_forward.13} parent=11 // pred_check_branch
          %126 = sbr.rel (%p124) target = $region20
        $region19: #{decoder_forward.13} parent=11 // pred_region
          _
        $region20: #{decoder_forward.13} parent=11 // pred_fallthru
          _
      $region12: #{decoder_forward.13} parent=5 // pred_fallthru
        _
      %p127 = scmp.lt.s32.totalorder %s12, 2
      // Predicated region
      $region21: #{decoder_forward.13} parent=5 // pred_check
        %p128 = pneg %p127
      $region22: #{decoder_forward.13} parent=5 // pred_check_branch
        %130 = sbr.rel (%p128) target = $region24
      $region23: #{decoder_forward.13} parent=5 // pred_region
        // Predicated region
        $region25: #{decoder_forward.13} parent=23 // pred_check
          %p131 = pneg %p32
        $region26: #{decoder_forward.13} parent=23 // pred_check_branch
          %133 = sbr.rel (%p131) target = $region28
        $region27: #{decoder_forward.13} parent=23 // pred_region
          %p134 = scmp.lt.s32.totalorder %s12, 1
          %s135 = scalar_select %p134, %s12, 1
          %s136 = smul.addr %s135, 8
          %s137 = scalar_lea.vmem %s0, %s136
        $region28: #{decoder_forward.13} parent=23 // pred_fallthru
          _
      $region24: #{decoder_forward.13} parent=5 // pred_fallthru
        _
      %p138 = scmp.le.s32.totalorder 1, %s12
      %p139 = scmp.lt.s32.totalorder %s12, 3
      %p140 = pnand %p138, %p139
      %p141 = pneg %p140
      // Predicated region
      $region29: #{decoder_forward.13} parent=5 // pred_check
        _
      $region30: #{decoder_forward.13} parent=5 // pred_check_branch
        %143 = sbr.rel (%p140) target = $region32
      $region31: #{decoder_forward.13} parent=5 // pred_region
        %s144 = ssub.s32 %s12, 1
        %p145 = scmp.lt.s32.totalorder %s17, 1
        %s146 = scalar_select %p145, %s17, 1
        %s147 = smul.addr %s146, 8
        %s148 = scalar_lea.vmem %s0, %s147
        %p149 = pneg %p38
        %p150 = pneg %p35
        %p151 = pneg %p59
        %p152 = pneg %p56
        %p153 = pneg %p80
        %p154 = pneg %p77
        %p155 = pneg %p106
        %p156 = pneg %p103
        %s157 = sand.u32 %s93, 1
        %s158 = scalar_lea.sflag [#allocation3], %s157
        %s159 = sand.u32 %s93, 1
        %s160 = smul.addr %s159, 8
        %s161 = scalar_lea.vmem [#allocation2], %s160
        %p162 = scmp.lt.s32.totalorder %s17, 1
        %s163 = scalar_select %p162, %s17, 1
        %s164 = smul.addr %s163, 8
        %s165 = scalar_lea.vmem %s0, %s164
        %v166 = vld [vmem:[%s165] sm:$0xff]
        %v167 = vld [vmem:[%s1] sm:$0xff]
        %v168 = vld [vmem:[%s1 + $0x8] sm:$0xff]
        %v169 = vld [vmem:[%s1 + $0x10] sm:$0xff]
        %v170 = vld [vmem:[%s1 + $0x18] sm:$0xff]
        %v171 = vld [vmem:[%s2] sm:$0x1]
        %v173 = vperm.slane %v171, 0
        %vm175 = vcmask 261120
        %v177 = vsel %vm175, %v166, 0
        %179 = vmatpush.msra.mxu0 0.0
        %180 = vmatpush.msra.mxu0 0.0
        %181 = vmatpush.msra.mxu0 0.0
        %182 = vmatpush.msra.mxu0 0.0
        %183 = vmatpush.msra.mxu0 0.0
        %184 = vmatpush.msra.mxu0 0.0
        %185 = vmatpush.msra.mxu0 0.0
        %186 = vmatpush.msra.mxu0 0.0
        %187 = vmatpush.msra.mxu0 0.0
        %188 = vmatpush.msra.mxu0 0.0
        %189 = vmatpush.msra.mxu0 0.0
        %190 = vmatpush.msra.mxu0 0.0
        %191 = vmatpush.msra.mxu0 %v170
        %192 = vmatpush.msra.mxu0 %v169
        %193 = vmatpush.msra.mxu0 %v168
        %194 = vmatpush.msra.mxu0 %v167
        %195 = vmatmul.f32.gmra.mxu0 %v177
        %v196 = vpop.f32.mrf.mxu0
        %v197 = vadd.f32 %v173, %v196
        %198 = vdwg.mxu0
        %vm199 = vcmask 408576
        %200 = vst.msk [vmem:[%s161] sm:$0xff] %vm199, %v197
        %s201 = sand.u32 %s93, 1
        %s202 = scalar_lea.sflag [#allocation3], %s201
        %s203 = sand.u32 %s93, 1
        %s204 = smul.addr %s203, 8
        %s205 = scalar_lea.vmem [#allocation2], %s204
        // Predicated region
        $region33: #{decoder_forward.13} parent=31 // pred_check
          %p206 = pneg %p103
        $region34: #{decoder_forward.13} parent=31 // pred_check_branch
          %208 = sbr.rel (%p206) target = $region36
        $region35: #{decoder_forward.13} parent=31 // pred_region
          %210 = vsyncadd %s202, 0
          %s211 = smul.addr %s17, 8
          %s212 = scalar_lea.hbm %s3, %s211
          %s214 = sshll.u32 %s205, 4
          %s215 = int_to_ptr.vmem [resolvable:$true] %s214
          %s216 = sshll.u32 %s212, 4
          %s217 = int_to_ptr.hbm [resolvable:$true] %s216
          %219 = dma.vmem_to_hbm [thread:$0]  %s215, 128, %s217, %s202
        $region36: #{decoder_forward.13} parent=31 // pred_fallthru
          _
      $region32: #{decoder_forward.13} parent=5 // pred_fallthru
        _
      %p220 = scmp.le.s32.totalorder 2, %s12
      // Predicated region
      $region37: #{decoder_forward.13} parent=5 // pred_check
        %p221 = pneg %p220
      $region38: #{decoder_forward.13} parent=5 // pred_check_branch
        %223 = sbr.rel (%p221) target = $region40
      $region39: #{decoder_forward.13} parent=5 // pred_region
        %s224 = ssub.s32 %s12, 2
        // Predicated region
        $region41: #{decoder_forward.13} parent=39 // pred_check
          %p225 = pneg %p109
        $region42: #{decoder_forward.13} parent=39 // pred_check_branch
          %227 = sbr.rel (%p225) target = $region44
        $region43: #{decoder_forward.13} parent=39 // pred_region
          %s228 = sand.u32 %s94, 1
          %s229 = scalar_lea.sflag [#allocation3], %s228
          %s230 = sand.u32 %s94, 1
          %s231 = smul.addr %s230, 8
          %s232 = scalar_lea.vmem [#allocation2], %s231
          %234 = dma.done %s229, 128
        $region44: #{decoder_forward.13} parent=39 // pred_fallthru
          _
      $region40: #{decoder_forward.13} parent=5 // pred_fallthru
        _
    $region6: #{decoder_forward.13} parent=1 // loop_footer
      %s16 = sadd.s32 1, %s12
    $region7: #{decoder_forward.13} parent=1 // loop_footer_branch
      %11 = sbr.rel target = $region3
    $region8: #{decoder_forward.13} parent=1 // loop_exit
      _
    %235 = vsyncpa [#allocation3], 1
    %s236 = scalar_lea.sflag [#allocation3], 1
    %237 = vsyncpa %s236, 1

</llo_original>
